<compile_context>
chip_gen: v7x
topology: tpu7x:2x2x1
jax: 0.10.0
libtpu: 0.0.40
codegen_flags: <defaults>
</compile_context>

<pallas_src>
import math

import jax
import jax.numpy as jnp
from jax.experimental import pallas as pl
from jax.experimental.pallas import tpu as pltpu


def _round_up(n, m):
    return ((n + m - 1) // m) * m


# ----------------------------------------------------------------------------
# Fused kernel: multi-layer tanh RNN (wavefront over layers) + Linear head.
# ----------------------------------------------------------------------------
def make_fused_rnn_kernel(T, B_pad, num_layers):
    """Positional refs:
      x_ref:   (T*B_pad, D0)  time-major, batch-padded, flattened input (bf16)
      per layer l: wih_ref (D_l, H_pad) bf16, whh_ref (H_pad, H_pad) bf16,
                   b_ref (1, H_pad) f32 (combined b_ih + b_hh)
      fcw_ref: (H_pad, O_pad) bf16
      fcb_ref: (1, O_pad) f32
      out_ref: (T*B_pad, O_pad) f32
    """

    def kernel(*refs):
        x_ref = refs[0]
        fcw_ref = refs[1 + 3 * num_layers]
        fcb_ref = refs[2 + 3 * num_layers]
        out_ref = refs[3 + 3 * num_layers]

        H_pad = refs[2].shape[1]            # layer-0 w_hh: (H_pad, H_pad)

        def wih(l):
            return refs[1 + 3 * l]

        def whh(l):
            return refs[2 + 3 * l]

        def bias(l):
            return refs[3 + 3 * l]

        # Hoisted layer-0 input projection (+ bias) for ALL timesteps: one
        # large MXU matmul off the serialized recurrence path.
        proj0 = (
            jnp.dot(x_ref[...], wih(0)[...], preferred_element_type=jnp.float32)
            + bias(0)[...]
        )

        # Carried hidden state per layer (h0 = zeros), kept in f32.
        h = [jnp.zeros((B_pad, H_pad), jnp.float32) for _ in range(num_layers)]

        # Wavefront: at wavefront step w, layer l advances timestep t = w - l.
        # Every dependency points at a value produced in an earlier wavefront
        # step, so the per-wavefront work of different layers has no mutual
        # data dependence and the scheduler can interleave the MXU/EUP chains.
        # TODO(synk): for large T, switch to lax.fori_loop(..., unroll=4..8)
        # over wavefront steps to bound code size / vreg live ranges.
        for w in range(T + num_layers - 1):
            new_h = {}
            for l in range(num_layers):
                t = w - l
                if not (0 <= t < T):
                    continue
                r0 = t * B_pad                      # static, 8-sublane aligned

                if l == 0:
                    pre = proj0[r0:r0 + B_pad, :]
                else:
                    # h[l-1] holds layer l-1's output at timestep t (produced
                    # in the previous wavefront step).
                    pre = (
                        jnp.dot(h[l - 1].astype(jnp.bfloat16), wih(l)[...],
                                preferred_element_type=jnp.float32)
                        + bias(l)[...]
                    )

                # TODO(synk): pltpu.matmul_push_rhs/acc_lhs/pop could pin W_hh
                # in the MXU staging registers across a layer's T steps; kept
                # as jnp.dot for lowering robustness.
                hy = jnp.tanh(
                    pre
                    + jnp.dot(h[l].astype(jnp.bfloat16), whh(l)[...],
                              preferred_element_type=jnp.float32)
                )
                new_h[l] = hy

                if l == num_layers - 1:
                    # Fused FC head: store this timestep's output immediately;
                    # lane-dense (O_pad = multiple of 128), unmasked store.
                    out_ref[pl.ds(r0, B_pad), :] = (
                        jnp.dot(hy.astype(jnp.bfloat16), fcw_ref[...],
                                preferred_element_type=jnp.float32)
                        + fcb_ref[...]
                    )

            for l, v in new_h.items():
                h[l] = v

    return kernel


# ----------------------------------------------------------------------------
# One-time parameter preparation (padding / transpose / bf16 cast).
# ----------------------------------------------------------------------------
def prepare_params(params):
    """Pad, transpose and bf16-cast the weights once (not per forward call)."""
    num_layers = len(params["rnn"])
    H = params["rnn"][0][1].shape[0]            # w_hh: (H, H)
    O = params["fc_w"].shape[0]
    H_pad = _round_up(H, 128)                   # lane-dense hidden
    O_pad = _round_up(O, 128)                   # lane-dense output

    prepared = {
        "num_layers": num_layers, "H": H, "O": O,
        "H_pad": H_pad, "O_pad": O_pad, "rnn": [],
    }
    for l, (w_ih, w_hh, b_ih, b_hh) in enumerate(params["rnn"]):
        in_dim = w_ih.shape[1]
        rows = in_dim if l == 0 else H_pad
        wih_t = (jnp.zeros((rows, H_pad), jnp.bfloat16)
                 .at[:in_dim, :H].set(w_ih.T.astype(jnp.bfloat16)))
        whh_t = (jnp.zeros((H_pad, H_pad), jnp.bfloat16)
                 .at[:H, :H].set(w_hh.T.astype(jnp.bfloat16)))
        b = (jnp.zeros((1, H_pad), jnp.float32)
             .at[0, :H].set((b_ih + b_hh).astype(jnp.float32)))
        prepared["rnn"].append((wih_t, whh_t, b))
    prepared["fc_w"] = (jnp.zeros((H_pad, O_pad), jnp.bfloat16)
                        .at[:H, :O].set(params["fc_w"].T.astype(jnp.bfloat16)))
    prepared["fc_b"] = (jnp.zeros((1, O_pad), jnp.float32)
                        .at[0, :O].set(params["fc_b"]))
    return prepared


# ----------------------------------------------------------------------------
# Forward wrapper (equivalent to RNNModel.forward: h0 = zeros, batch_first).
# ----------------------------------------------------------------------------
def rnn_model_forward(x, prepared):
    B, T, D = x.shape
    num_layers = prepared["num_layers"]
    H_pad, O_pad, O = prepared["H_pad"], prepared["O_pad"], prepared["O"]
    B_pad = _round_up(B, 8)                     # sublane alignment

    # Time-major, batch padded, flattened to 2D (T*B_pad, D), bf16 MXU operand.
    xt = jnp.transpose(x, (1, 0, 2)).astype(jnp.bfloat16)       # (T, B, D)
    xt = jnp.pad(xt, ((0, 0), (0, B_pad - B), (0, 0)))          # (T, B_pad, D)
    x_flat = xt.reshape(T * B_pad, D)

    inputs = [x_flat]
    for (wih_t, whh_t, b) in prepared["rnn"]:
        inputs += [wih_t, whh_t, b]
    inputs += [prepared["fc_w"], prepared["fc_b"]]

    kernel = make_fused_rnn_kernel(T, B_pad, num_layers)
    vmem = pl.BlockSpec(memory_space=pltpu.MemorySpace.VMEM)
    # TODO(synk): for large B/T add a batch-parallel grid axis
    # (dimension_semantics=("parallel",)) so v7x's 2 TensorCores both work, and
    # re-derive time-chunked tiles for its 64 MiB VMEM; at these shapes the
    # whole problem (tens of KiB) fits trivially in VMEM on one core.
    out_flat = pl.pallas_call(
        kernel,
        out_shape=jax.ShapeDtypeStruct((T * B_pad, O_pad), jnp.float32),
        in_specs=[vmem] * len(inputs),
        out_specs=vmem,
    )(*inputs)

    y = out_flat.reshape(T, B_pad, O_pad)[:, :B, :O]            # (T, B, O)
    y = jnp.transpose(y, (1, 0, 2))                             # (B, T, O)
    return jnp.squeeze(y)                                       # matches out.squeeze()


# ----------------------------------------------------------------------------
# Parameter init (matches nn.RNN / nn.Linear shapes) and pure-JAX reference.
# ----------------------------------------------------------------------------
def init_params(key, input_dim, hidden_dim, layer_dim, output_dim):
    params = {"rnn": []}
    k = 1.0 / math.sqrt(hidden_dim)
    keys = jax.random.split(key, 4 * layer_dim + 2)
    ki = 0
    for layer in range(layer_dim):
        in_dim = input_dim if layer == 0 else hidden_dim
        w_ih = jax.random.uniform(keys[ki], (hidden_dim, in_dim), jnp.float32, -k, k); ki += 1
        w_hh = jax.random.uniform(keys[ki], (hidden_dim, hidden_dim), jnp.float32, -k, k); ki += 1
        b_ih = jax.random.uniform(keys[ki], (hidden_dim,), jnp.float32, -k, k); ki += 1
        b_hh = jax.random.uniform(keys[ki], (hidden_dim,), jnp.float32, -k, k); ki += 1
        params["rnn"].append((w_ih, w_hh, b_ih, b_hh))
    params["fc_w"] = jax.random.uniform(keys[ki], (output_dim, hidden_dim), jnp.float32, -k, k); ki += 1
    params["fc_b"] = jax.random.uniform(keys[ki], (output_dim,), jnp.float32, -k, k)
    return params


def _reference_forward(x, params):
    B, T, _ = x.shape
    h_seq = x
    for (w_ih, w_hh, b_ih, b_hh) in params["rnn"]:
        H = w_hh.shape[0]
        h = jnp.zeros((B, H), jnp.float32)
        outs = []
        for t in range(T):
            h = jnp.tanh(h_seq[:, t, :] @ w_ih.T + h @ w_hh.T + b_ih + b_hh)
            outs.append(h)
        h_seq = jnp.stack(outs, axis=1)
    y = h_seq @ params["fc_w"].T + params["fc_b"]
    return jnp.squeeze(y)


if __name__ == "__main__":
    input_dim, hidden_dim, layer_dim, output_dim = 16, 32, 2, 4
    B, T = 2, 8

    key = jax.random.PRNGKey(0)
    kx, kp = jax.random.split(key)
    x = jax.random.normal(kx, (B, T, input_dim), jnp.float32)
    params = init_params(kp, input_dim, hidden_dim, layer_dim, output_dim)

    prepared = prepare_params(params)           # one-time weight padding/cast
    out = rnn_model_forward(x, prepared)
    out = jax.block_until_ready(out)

    ref = _reference_forward(x, params)
    assert out.shape == ref.shape, (out.shape, ref.shape)
    # bf16 MXU operands with f32 accumulation -> relaxed tolerance.
    assert jnp.allclose(out, ref, atol=3e-2, rtol=3e-2), "mismatch vs reference"

    print("KERNEL_OK")
</pallas_src>

<mosaic_0001>
module attributes {stable_mosaic.version = 11 : i64} {
  func.func @kernel(%arg0: memref<64x16xbf16, #tpu.memory_space<vmem>>, %arg1: memref<16x128xbf16, #tpu.memory_space<vmem>>, %arg2: memref<128x128xbf16, #tpu.memory_space<vmem>>, %arg3: memref<1x128xf32, #tpu.memory_space<vmem>>, %arg4: memref<128x128xbf16, #tpu.memory_space<vmem>>, %arg5: memref<128x128xbf16, #tpu.memory_space<vmem>>, %arg6: memref<1x128xf32, #tpu.memory_space<vmem>>, %arg7: memref<128x128xbf16, #tpu.memory_space<vmem>>, %arg8: memref<1x128xf32, #tpu.memory_space<vmem>>, %arg9: memref<64x128xf32, #tpu.memory_space<vmem>>) attributes {dimension_semantics = [], scalar_prefetch = 0 : i64, scratch_operands = 0 : i64, tpu.core_type = #tpu.core_type<tc>} {
    %c0 = arith.constant 0 : index
    %c0_0 = arith.constant 0 : index
    %0 = vector.load %arg0[%c0, %c0_0] : memref<64x16xbf16, #tpu.memory_space<vmem>>, vector<64x16xbf16>
    %c0_1 = arith.constant 0 : index
    %c0_2 = arith.constant 0 : index
    %1 = vector.load %arg1[%c0_1, %c0_2] : memref<16x128xbf16, #tpu.memory_space<vmem>>, vector<16x128xbf16>
    %cst = arith.constant dense<0.000000e+00> : vector<64x128xf32>
    %2 = tpu.matmul %0, %1, %cst {dimension_numbers = #tpu.dot_dimension_numbers<[1], [0], [0], [1], [0, 0, 1, 1], [], []>} : vector<64x16xbf16>, vector<16x128xbf16>, vector<64x128xf32> -> vector<64x128xf32>
    %c0_3 = arith.constant 0 : index
    %c0_4 = arith.constant 0 : index
    %3 = vector.load %arg3[%c0_3, %c0_4] : memref<1x128xf32, #tpu.memory_space<vmem>>, vector<1x128xf32>
    %4 = vector.broadcast %3 : vector<1x128xf32> to vector<64x128xf32>
    %5 = arith.addf %2, %4 : vector<64x128xf32>
    %cst_5 = arith.constant 0.000000e+00 : f32
    %6 = vector.broadcast %cst_5 : f32 to vector<8x128xf32>
    %cst_6 = arith.constant 0.000000e+00 : f32
    %7 = vector.broadcast %cst_6 : f32 to vector<8x128xf32>
    %8 = vector.extract_strided_slice %5 {offsets = [0, 0], sizes = [8, 128], strides = [1, 1]} : vector<64x128xf32> to vector<8x128xf32>
    %9 = arith.truncf %6 : vector<8x128xf32> to vector<8x128xbf16>
    %c0_7 = arith.constant 0 : index
    %c0_8 = arith.constant 0 : index
    %10 = vector.load %arg2[%c0_7, %c0_8] : memref<128x128xbf16, #tpu.memory_space<vmem>>, vector<128x128xbf16>
    %cst_9 = arith.constant dense<0.000000e+00> : vector<8x128xf32>
    %11 = tpu.matmul %9, %10, %cst_9 {dimension_numbers = #tpu.dot_dimension_numbers<[1], [0], [0], [1], [0, 0, 1, 1], [], []>} : vector<8x128xbf16>, vector<128x128xbf16>, vector<8x128xf32> -> vector<8x128xf32>
    %12 = arith.addf %8, %11 : vector<8x128xf32>
    %13 = math.tanh %12 : vector<8x128xf32>
    %14 = vector.extract_strided_slice %5 {offsets = [8, 0], sizes = [8, 128], strides = [1, 1]} : vector<64x128xf32> to vector<8x128xf32>
    %15 = arith.truncf %13 : vector<8x128xf32> to vector<8x128xbf16>
    %c0_10 = arith.constant 0 : index
    %c0_11 = arith.constant 0 : index
    %16 = vector.load %arg2[%c0_10, %c0_11] : memref<128x128xbf16, #tpu.memory_space<vmem>>, vector<128x128xbf16>
    %cst_12 = arith.constant dense<0.000000e+00> : vector<8x128xf32>
    %17 = tpu.matmul %15, %16, %cst_12 {dimension_numbers = #tpu.dot_dimension_numbers<[1], [0], [0], [1], [0, 0, 1, 1], [], []>} : vector<8x128xbf16>, vector<128x128xbf16>, vector<8x128xf32> -> vector<8x128xf32>
    %18 = arith.addf %14, %17 : vector<8x128xf32>
    %19 = math.tanh %18 : vector<8x128xf32>
    %20 = arith.truncf %13 : vector<8x128xf32> to vector<8x128xbf16>
    %c0_13 = arith.constant 0 : index
    %c0_14 = arith.constant 0 : index
    %21 = vector.load %arg4[%c0_13, %c0_14] : memref<128x128xbf16, #tpu.memory_space<vmem>>, vector<128x128xbf16>
    %cst_15 = arith.constant dense<0.000000e+00> : vector<8x128xf32>
    %22 = tpu.matmul %20, %21, %cst_15 {dimension_numbers = #tpu.dot_dimension_numbers<[1], [0], [0], [1], [0, 0, 1, 1], [], []>} : vector<8x128xbf16>, vector<128x128xbf16>, vector<8x128xf32> -> vector<8x128xf32>
    %c0_16 = arith.constant 0 : index
    %c0_17 = arith.constant 0 : index
    %23 = vector.load %arg6[%c0_16, %c0_17] : memref<1x128xf32, #tpu.memory_space<vmem>>, vector<1x128xf32>
    %24 = vector.broadcast %23 : vector<1x128xf32> to vector<8x128xf32>
    %25 = arith.addf %22, %24 : vector<8x128xf32>
    %26 = arith.truncf %7 : vector<8x128xf32> to vector<8x128xbf16>
    %c0_18 = arith.constant 0 : index
    %c0_19 = arith.constant 0 : index
    %27 = vector.load %arg5[%c0_18, %c0_19] : memref<128x128xbf16, #tpu.memory_space<vmem>>, vector<128x128xbf16>
    %cst_20 = arith.constant dense<0.000000e+00> : vector<8x128xf32>
    %28 = tpu.matmul %26, %27, %cst_20 {dimension_numbers = #tpu.dot_dimension_numbers<[1], [0], [0], [1], [0, 0, 1, 1], [], []>} : vector<8x128xbf16>, vector<128x128xbf16>, vector<8x128xf32> -> vector<8x128xf32>
    %29 = arith.addf %25, %28 : vector<8x128xf32>
    %30 = math.tanh %29 : vector<8x128xf32>
    %31 = arith.truncf %30 : vector<8x128xf32> to vector<8x128xbf16>
    %c0_21 = arith.constant 0 : index
    %c0_22 = arith.constant 0 : index
    %32 = vector.load %arg7[%c0_21, %c0_22] : memref<128x128xbf16, #tpu.memory_space<vmem>>, vector<128x128xbf16>
    %cst_23 = arith.constant dense<0.000000e+00> : vector<8x128xf32>
    %33 = tpu.matmul %31, %32, %cst_23 {dimension_numbers = #tpu.dot_dimension_numbers<[1], [0], [0], [1], [0, 0, 1, 1], [], []>} : vector<8x128xbf16>, vector<128x128xbf16>, vector<8x128xf32> -> vector<8x128xf32>
    %c0_24 = arith.constant 0 : index
    %c0_25 = arith.constant 0 : index
    %34 = vector.load %arg8[%c0_24, %c0_25] : memref<1x128xf32, #tpu.memory_space<vmem>>, vector<1x128xf32>
    %35 = vector.broadcast %34 : vector<1x128xf32> to vector<8x128xf32>
    %36 = arith.addf %33, %35 : vector<8x128xf32>
    %c0_26 = arith.constant 0 : index
    %c0_27 = arith.constant 0 : index
    %37 = vector.load %arg9[%c0_26, %c0_27] : memref<64x128xf32, #tpu.memory_space<vmem>>, vector<8x128xf32>
    tpu.vector_store %arg9[%c0_26, %c0_27], %36 {strides = array<i32>} : memref<64x128xf32, #tpu.memory_space<vmem>>, vector<8x128xf32>,
    %38 = vector.extract_strided_slice %5 {offsets = [16, 0], sizes = [8, 128], strides = [1, 1]} : vector<64x128xf32> to vector<8x128xf32>
    %39 = arith.truncf %19 : vector<8x128xf32> to vector<8x128xbf16>
    %c0_28 = arith.constant 0 : index
    %c0_29 = arith.constant 0 : index
    %40 = vector.load %arg2[%c0_28, %c0_29] : memref<128x128xbf16, #tpu.memory_space<vmem>>, vector<128x128xbf16>
    %cst_30 = arith.constant dense<0.000000e+00> : vector<8x128xf32>
    %41 = tpu.matmul %39, %40, %cst_30 {dimension_numbers = #tpu.dot_dimension_numbers<[1], [0], [0], [1], [0, 0, 1, 1], [], []>} : vector<8x128xbf16>, vector<128x128xbf16>, vector<8x128xf32> -> vector<8x128xf32>
    %42 = arith.addf %38, %41 : vector<8x128xf32>
    %43 = math.tanh %42 : vector<8x128xf32>
    %44 = arith.truncf %19 : vector<8x128xf32> to vector<8x128xbf16>
    %c0_31 = arith.constant 0 : index
    %c0_32 = arith.constant 0 : index
    %45 = vector.load %arg4[%c0_31, %c0_32] : memref<128x128xbf16, #tpu.memory_space<vmem>>, vector<128x128xbf16>
    %cst_33 = arith.constant dense<0.000000e+00> : vector<8x128xf32>
    %46 = tpu.matmul %44, %45, %cst_33 {dimension_numbers = #tpu.dot_dimension_numbers<[1], [0], [0], [1], [0, 0, 1, 1], [], []>} : vector<8x128xbf16>, vector<128x128xbf16>, vector<8x128xf32> -> vector<8x128xf32>
    %c0_34 = arith.constant 0 : index
    %c0_35 = arith.constant 0 : index
    %47 = vector.load %arg6[%c0_34, %c0_35] : memref<1x128xf32, #tpu.memory_space<vmem>>, vector<1x128xf32>
    %48 = vector.broadcast %47 : vector<1x128xf32> to vector<8x128xf32>
    %49 = arith.addf %46, %48 : vector<8x128xf32>
    %50 = arith.truncf %30 : vector<8x128xf32> to vector<8x128xbf16>
    %c0_36 = arith.constant 0 : index
    %c0_37 = arith.constant 0 : index
    %51 = vector.load %arg5[%c0_36, %c0_37] : memref<128x128xbf16, #tpu.memory_space<vmem>>, vector<128x128xbf16>
    %cst_38 = arith.constant dense<0.000000e+00> : vector<8x128xf32>
    %52 = tpu.matmul %50, %51, %cst_38 {dimension_numbers = #tpu.dot_dimension_numbers<[1], [0], [0], [1], [0, 0, 1, 1], [], []>} : vector<8x128xbf16>, vector<128x128xbf16>, vector<8x128xf32> -> vector<8x128xf32>
    %53 = arith.addf %49, %52 : vector<8x128xf32>
    %54 = math.tanh %53 : vector<8x128xf32>
    %55 = arith.truncf %54 : vector<8x128xf32> to vector<8x128xbf16>
    %c0_39 = arith.constant 0 : index
    %c0_40 = arith.constant 0 : index
    %56 = vector.load %arg7[%c0_39, %c0_40] : memref<128x128xbf16, #tpu.memory_space<vmem>>, vector<128x128xbf16>
    %cst_41 = arith.constant dense<0.000000e+00> : vector<8x128xf32>
    %57 = tpu.matmul %55, %56, %cst_41 {dimension_numbers = #tpu.dot_dimension_numbers<[1], [0], [0], [1], [0, 0, 1, 1], [], []>} : vector<8x128xbf16>, vector<128x128xbf16>, vector<8x128xf32> -> vector<8x128xf32>
    %c0_42 = arith.constant 0 : index
    %c0_43 = arith.constant 0 : index
    %58 = vector.load %arg8[%c0_42, %c0_43] : memref<1x128xf32, #tpu.memory_space<vmem>>, vector<1x128xf32>
    %59 = vector.broadcast %58 : vector<1x128xf32> to vector<8x128xf32>
    %60 = arith.addf %57, %59 : vector<8x128xf32>
    %c8 = arith.constant 8 : index
    %c0_44 = arith.constant 0 : index
    %61 = vector.load %arg9[%c8, %c0_44] : memref<64x128xf32, #tpu.memory_space<vmem>>, vector<8x128xf32>
    tpu.vector_store %arg9[%c8, %c0_44], %60 {strides = array<i32>} : memref<64x128xf32, #tpu.memory_space<vmem>>, vector<8x128xf32>,
    %62 = vector.extract_strided_slice %5 {offsets = [24, 0], sizes = [8, 128], strides = [1, 1]} : vector<64x128xf32> to vector<8x128xf32>
    %63 = arith.truncf %43 : vector<8x128xf32> to vector<8x128xbf16>
    %c0_45 = arith.constant 0 : index
    %c0_46 = arith.constant 0 : index
    %64 = vector.load %arg2[%c0_45, %c0_46] : memref<128x128xbf16, #tpu.memory_space<vmem>>, vector<128x128xbf16>
    %cst_47 = arith.constant dense<0.000000e+00> : vector<8x128xf32>
    %65 = tpu.matmul %63, %64, %cst_47 {dimension_numbers = #tpu.dot_dimension_numbers<[1], [0], [0], [1], [0, 0, 1, 1], [], []>} : vector<8x128xbf16>, vector<128x128xbf16>, vector<8x128xf32> -> vector<8x128xf32>
    %66 = arith.addf %62, %65 : vector<8x128xf32>
    %67 = math.tanh %66 : vector<8x128xf32>
    %68 = arith.truncf %43 : vector<8x128xf32> to vector<8x128xbf16>
    %c0_48 = arith.constant 0 : index
    %c0_49 = arith.constant 0 : index
    %69 = vector.load %arg4[%c0_48, %c0_49] : memref<128x128xbf16, #tpu.memory_space<vmem>>, vector<128x128xbf16>
    %cst_50 = arith.constant dense<0.000000e+00> : vector<8x128xf32>
    %70 = tpu.matmul %68, %69, %cst_50 {dimension_numbers = #tpu.dot_dimension_numbers<[1], [0], [0], [1], [0, 0, 1, 1], [], []>} : vector<8x128xbf16>, vector<128x128xbf16>, vector<8x128xf32> -> vector<8x128xf32>
    %c0_51 = arith.constant 0 : index
    %c0_52 = arith.constant 0 : index
    %71 = vector.load %arg6[%c0_51, %c0_52] : memref<1x128xf32, #tpu.memory_space<vmem>>, vector<1x128xf32>
    %72 = vector.broadcast %71 : vector<1x128xf32> to vector<8x128xf32>
    %73 = arith.addf %70, %72 : vector<8x128xf32>
    %74 = arith.truncf %54 : vector<8x128xf32> to vector<8x128xbf16>
    %c0_53 = arith.constant 0 : index
    %c0_54 = arith.constant 0 : index
    %75 = vector.load %arg5[%c0_53, %c0_54] : memref<128x128xbf16, #tpu.memory_space<vmem>>, vector<128x128xbf16>
    %cst_55 = arith.constant dense<0.000000e+00> : vector<8x128xf32>
    %76 = tpu.matmul %74, %75, %cst_55 {dimension_numbers = #tpu.dot_dimension_numbers<[1], [0], [0], [1], [0, 0, 1, 1], [], []>} : vector<8x128xbf16>, vector<128x128xbf16>, vector<8x128xf32> -> vector<8x128xf32>
    %77 = arith.addf %73, %76 : vector<8x128xf32>
    %78 = math.tanh %77 : vector<8x128xf32>
    %79 = arith.truncf %78 : vector<8x128xf32> to vector<8x128xbf16>
    %c0_56 = arith.constant 0 : index
    %c0_57 = arith.constant 0 : index
    %80 = vector.load %arg7[%c0_56, %c0_57] : memref<128x128xbf16, #tpu.memory_space<vmem>>, vector<128x128xbf16>
    %cst_58 = arith.constant dense<0.000000e+00> : vector<8x128xf32>
    %81 = tpu.matmul %79, %80, %cst_58 {dimension_numbers = #tpu.dot_dimension_numbers<[1], [0], [0], [1], [0, 0, 1, 1], [], []>} : vector<8x128xbf16>, vector<128x128xbf16>, vector<8x128xf32> -> vector<8x128xf32>
    %c0_59 = arith.constant 0 : index
    %c0_60 = arith.constant 0 : index
    %82 = vector.load %arg8[%c0_59, %c0_60] : memref<1x128xf32, #tpu.memory_space<vmem>>, vector<1x128xf32>
    %83 = vector.broadcast %82 : vector<1x128xf32> to vector<8x128xf32>
    %84 = arith.addf %81, %83 : vector<8x128xf32>
    %c16 = arith.constant 16 : index
    %c0_61 = arith.constant 0 : index
    %85 = vector.load %arg9[%c16, %c0_61] : memref<64x128xf32, #tpu.memory_space<vmem>>, vector<8x128xf32>
    tpu.vector_store %arg9[%c16, %c0_61], %84 {strides = array<i32>} : memref<64x128xf32, #tpu.memory_space<vmem>>, vector<8x128xf32>,
    %86 = vector.extract_strided_slice %5 {offsets = [32, 0], sizes = [8, 128], strides = [1, 1]} : vector<64x128xf32> to vector<8x128xf32>
    %87 = arith.truncf %67 : vector<8x128xf32> to vector<8x128xbf16>
    %c0_62 = arith.constant 0 : index
    %c0_63 = arith.constant 0 : index
    %88 = vector.load %arg2[%c0_62, %c0_63] : memref<128x128xbf16, #tpu.memory_space<vmem>>, vector<128x128xbf16>
    %cst_64 = arith.constant dense<0.000000e+00> : vector<8x128xf32>
    %89 = tpu.matmul %87, %88, %cst_64 {dimension_numbers = #tpu.dot_dimension_numbers<[1], [0], [0], [1], [0, 0, 1, 1], [], []>} : vector<8x128xbf16>, vector<128x128xbf16>, vector<8x128xf32> -> vector<8x128xf32>
    %90 = arith.addf %86, %89 : vector<8x128xf32>
    %91 = math.tanh %90 : vector<8x128xf32>
    %92 = arith.truncf %67 : vector<8x128xf32> to vector<8x128xbf16>
    %c0_65 = arith.constant 0 : index
    %c0_66 = arith.constant 0 : index
    %93 = vector.load %arg4[%c0_65, %c0_66] : memref<128x128xbf16, #tpu.memory_space<vmem>>, vector<128x128xbf16>
    %cst_67 = arith.constant dense<0.000000e+00> : vector<8x128xf32>
    %94 = tpu.matmul %92, %93, %cst_67 {dimension_numbers = #tpu.dot_dimension_numbers<[1], [0], [0], [1], [0, 0, 1, 1], [], []>} : vector<8x128xbf16>, vector<128x128xbf16>, vector<8x128xf32> -> vector<8x128xf32>
    %c0_68 = arith.constant 0 : index
    %c0_69 = arith.constant 0 : index
    %95 = vector.load %arg6[%c0_68, %c0_69] : memref<1x128xf32, #tpu.memory_space<vmem>>, vector<1x128xf32>
    %96 = vector.broadcast %95 : vector<1x128xf32> to vector<8x128xf32>
    %97 = arith.addf %94, %96 : vector<8x128xf32>
    %98 = arith.truncf %78 : vector<8x128xf32> to vector<8x128xbf16>
    %c0_70 = arith.constant 0 : index
    %c0_71 = arith.constant 0 : index
    %99 = vector.load %arg5[%c0_70, %c0_71] : memref<128x128xbf16, #tpu.memory_space<vmem>>, vector<128x128xbf16>
    %cst_72 = arith.constant dense<0.000000e+00> : vector<8x128xf32>
    %100 = tpu.matmul %98, %99, %cst_72 {dimension_numbers = #tpu.dot_dimension_numbers<[1], [0], [0], [1], [0, 0, 1, 1], [], []>} : vector<8x128xbf16>, vector<128x128xbf16>, vector<8x128xf32> -> vector<8x128xf32>
    %101 = arith.addf %97, %100 : vector<8x128xf32>
    %102 = math.tanh %101 : vector<8x128xf32>
    %103 = arith.truncf %102 : vector<8x128xf32> to vector<8x128xbf16>
    %c0_73 = arith.constant 0 : index
    %c0_74 = arith.constant 0 : index
    %104 = vector.load %arg7[%c0_73, %c0_74] : memref<128x128xbf16, #tpu.memory_space<vmem>>, vector<128x128xbf16>
    %cst_75 = arith.constant dense<0.000000e+00> : vector<8x128xf32>
    %105 = tpu.matmul %103, %104, %cst_75 {dimension_numbers = #tpu.dot_dimension_numbers<[1], [0], [0], [1], [0, 0, 1, 1], [], []>} : vector<8x128xbf16>, vector<128x128xbf16>, vector<8x128xf32> -> vector<8x128xf32>
    %c0_76 = arith.constant 0 : index
    %c0_77 = arith.constant 0 : index
    %106 = vector.load %arg8[%c0_76, %c0_77] : memref<1x128xf32, #tpu.memory_space<vmem>>, vector<1x128xf32>
    %107 = vector.broadcast %106 : vector<1x128xf32> to vector<8x128xf32>
    %108 = arith.addf %105, %107 : vector<8x128xf32>
    %c24 = arith.constant 24 : index
    %c0_78 = arith.constant 0 : index
    %109 = vector.load %arg9[%c24, %c0_78] : memref<64x128xf32, #tpu.memory_space<vmem>>, vector<8x128xf32>
    tpu.vector_store %arg9[%c24, %c0_78], %108 {strides = array<i32>} : memref<64x128xf32, #tpu.memory_space<vmem>>, vector<8x128xf32>,
    %110 = vector.extract_strided_slice %5 {offsets = [40, 0], sizes = [8, 128], strides = [1, 1]} : vector<64x128xf32> to vector<8x128xf32>
    %111 = arith.truncf %91 : vector<8x128xf32> to vector<8x128xbf16>
    %c0_79 = arith.constant 0 : index
    %c0_80 = arith.constant 0 : index
    %112 = vector.load %arg2[%c0_79, %c0_80] : memref<128x128xbf16, #tpu.memory_space<vmem>>, vector<128x128xbf16>
    %cst_81 = arith.constant dense<0.000000e+00> : vector<8x128xf32>
    %113 = tpu.matmul %111, %112, %cst_81 {dimension_numbers = #tpu.dot_dimension_numbers<[1], [0], [0], [1], [0, 0, 1, 1], [], []>} : vector<8x128xbf16>, vector<128x128xbf16>, vector<8x128xf32> -> vector<8x128xf32>
    %114 = arith.addf %110, %113 : vector<8x128xf32>
    %115 = math.tanh %114 : vector<8x128xf32>
    %116 = arith.truncf %91 : vector<8x128xf32> to vector<8x128xbf16>
    %c0_82 = arith.constant 0 : index
    %c0_83 = arith.constant 0 : index
    %117 = vector.load %arg4[%c0_82, %c0_83] : memref<128x128xbf16, #tpu.memory_space<vmem>>, vector<128x128xbf16>
    %cst_84 = arith.constant dense<0.000000e+00> : vector<8x128xf32>
    %118 = tpu.matmul %116, %117, %cst_84 {dimension_numbers = #tpu.dot_dimension_numbers<[1], [0], [0], [1], [0, 0, 1, 1], [], []>} : vector<8x128xbf16>, vector<128x128xbf16>, vector<8x128xf32> -> vector<8x128xf32>
    %c0_85 = arith.constant 0 : index
    %c0_86 = arith.constant 0 : index
    %119 = vector.load %arg6[%c0_85, %c0_86] : memref<1x128xf32, #tpu.memory_space<vmem>>, vector<1x128xf32>
    %120 = vector.broadcast %119 : vector<1x128xf32> to vector<8x128xf32>
    %121 = arith.addf %118, %120 : vector<8x128xf32>
    %122 = arith.truncf %102 : vector<8x128xf32> to vector<8x128xbf16>
    %c0_87 = arith.constant 0 : index
    %c0_88 = arith.constant 0 : index
    %123 = vector.load %arg5[%c0_87, %c0_88] : memref<128x128xbf16, #tpu.memory_space<vmem>>, vector<128x128xbf16>
    %cst_89 = arith.constant dense<0.000000e+00> : vector<8x128xf32>
    %124 = tpu.matmul %122, %123, %cst_89 {dimension_numbers = #tpu.dot_dimension_numbers<[1], [0], [0], [1], [0, 0, 1, 1], [], []>} : vector<8x128xbf16>, vector<128x128xbf16>, vector<8x128xf32> -> vector<8x128xf32>
    %125 = arith.addf %121, %124 : vector<8x128xf32>
    %126 = math.tanh %125 : vector<8x128xf32>
    %127 = arith.truncf %126 : vector<8x128xf32> to vector<8x128xbf16>
    %c0_90 = arith.constant 0 : index
    %c0_91 = arith.constant 0 : index
    %128 = vector.load %arg7[%c0_90, %c0_91] : memref<128x128xbf16, #tpu.memory_space<vmem>>, vector<128x128xbf16>
    %cst_92 = arith.constant dense<0.000000e+00> : vector<8x128xf32>
    %129 = tpu.matmul %127, %128, %cst_92 {dimension_numbers = #tpu.dot_dimension_numbers<[1], [0], [0], [1], [0, 0, 1, 1], [], []>} : vector<8x128xbf16>, vector<128x128xbf16>, vector<8x128xf32> -> vector<8x128xf32>
    %c0_93 = arith.constant 0 : index
    %c0_94 = arith.constant 0 : index
    %130 = vector.load %arg8[%c0_93, %c0_94] : memref<1x128xf32, #tpu.memory_space<vmem>>, vector<1x128xf32>
    %131 = vector.broadcast %130 : vector<1x128xf32> to vector<8x128xf32>
    %132 = arith.addf %129, %131 : vector<8x128xf32>
    %c32 = arith.constant 32 : index
    %c0_95 = arith.constant 0 : index
    %133 = vector.load %arg9[%c32, %c0_95] : memref<64x128xf32, #tpu.memory_space<vmem>>, vector<8x128xf32>
    tpu.vector_store %arg9[%c32, %c0_95], %132 {strides = array<i32>} : memref<64x128xf32, #tpu.memory_space<vmem>>, vector<8x128xf32>,
    %134 = vector.extract_strided_slice %5 {offsets = [48, 0], sizes = [8, 128], strides = [1, 1]} : vector<64x128xf32> to vector<8x128xf32>
    %135 = arith.truncf %115 : vector<8x128xf32> to vector<8x128xbf16>
    %c0_96 = arith.constant 0 : index
    %c0_97 = arith.constant 0 : index
    %136 = vector.load %arg2[%c0_96, %c0_97] : memref<128x128xbf16, #tpu.memory_space<vmem>>, vector<128x128xbf16>
    %cst_98 = arith.constant dense<0.000000e+00> : vector<8x128xf32>
    %137 = tpu.matmul %135, %136, %cst_98 {dimension_numbers = #tpu.dot_dimension_numbers<[1], [0], [0], [1], [0, 0, 1, 1], [], []>} : vector<8x128xbf16>, vector<128x128xbf16>, vector<8x128xf32> -> vector<8x128xf32>
    %138 = arith.addf %134, %137 : vector<8x128xf32>
    %139 = math.tanh %138 : vector<8x128xf32>
    %140 = arith.truncf %115 : vector<8x128xf32> to vector<8x128xbf16>
    %c0_99 = arith.constant 0 : index
    %c0_100 = arith.constant 0 : index
    %141 = vector.load %arg4[%c0_99, %c0_100] : memref<128x128xbf16, #tpu.memory_space<vmem>>, vector<128x128xbf16>
    %cst_101 = arith.constant dense<0.000000e+00> : vector<8x128xf32>
    %142 = tpu.matmul %140, %141, %cst_101 {dimension_numbers = #tpu.dot_dimension_numbers<[1], [0], [0], [1], [0, 0, 1, 1], [], []>} : vector<8x128xbf16>, vector<128x128xbf16>, vector<8x128xf32> -> vector<8x128xf32>
    %c0_102 = arith.constant 0 : index
    %c0_103 = arith.constant 0 : index
    %143 = vector.load %arg6[%c0_102, %c0_103] : memref<1x128xf32, #tpu.memory_space<vmem>>, vector<1x128xf32>
    %144 = vector.broadcast %143 : vector<1x128xf32> to vector<8x128xf32>
    %145 = arith.addf %142, %144 : vector<8x128xf32>
    %146 = arith.truncf %126 : vector<8x128xf32> to vector<8x128xbf16>
    %c0_104 = arith.constant 0 : index
    %c0_105 = arith.constant 0 : index
    %147 = vector.load %arg5[%c0_104, %c0_105] : memref<128x128xbf16, #tpu.memory_space<vmem>>, vector<128x128xbf16>
    %cst_106 = arith.constant dense<0.000000e+00> : vector<8x128xf32>
    %148 = tpu.matmul %146, %147, %cst_106 {dimension_numbers = #tpu.dot_dimension_numbers<[1], [0], [0], [1], [0, 0, 1, 1], [], []>} : vector<8x128xbf16>, vector<128x128xbf16>, vector<8x128xf32> -> vector<8x128xf32>
    %149 = arith.addf %145, %148 : vector<8x128xf32>
    %150 = math.tanh %149 : vector<8x128xf32>
    %151 = arith.truncf %150 : vector<8x128xf32> to vector<8x128xbf16>
    %c0_107 = arith.constant 0 : index
    %c0_108 = arith.constant 0 : index
    %152 = vector.load %arg7[%c0_107, %c0_108] : memref<128x128xbf16, #tpu.memory_space<vmem>>, vector<128x128xbf16>
    %cst_109 = arith.constant dense<0.000000e+00> : vector<8x128xf32>
    %153 = tpu.matmul %151, %152, %cst_109 {dimension_numbers = #tpu.dot_dimension_numbers<[1], [0], [0], [1], [0, 0, 1, 1], [], []>} : vector<8x128xbf16>, vector<128x128xbf16>, vector<8x128xf32> -> vector<8x128xf32>
    %c0_110 = arith.constant 0 : index
    %c0_111 = arith.constant 0 : index
    %154 = vector.load %arg8[%c0_110, %c0_111] : memref<1x128xf32, #tpu.memory_space<vmem>>, vector<1x128xf32>
    %155 = vector.broadcast %154 : vector<1x128xf32> to vector<8x128xf32>
    %156 = arith.addf %153, %155 : vector<8x128xf32>
    %c40 = arith.constant 40 : index
    %c0_112 = arith.constant 0 : index
    %157 = vector.load %arg9[%c40, %c0_112] : memref<64x128xf32, #tpu.memory_space<vmem>>, vector<8x128xf32>
    tpu.vector_store %arg9[%c40, %c0_112], %156 {strides = array<i32>} : memref<64x128xf32, #tpu.memory_space<vmem>>, vector<8x128xf32>,
    %158 = vector.extract_strided_slice %5 {offsets = [56, 0], sizes = [8, 128], strides = [1, 1]} : vector<64x128xf32> to vector<8x128xf32>
    %159 = arith.truncf %139 : vector<8x128xf32> to vector<8x128xbf16>
    %c0_113 = arith.constant 0 : index
    %c0_114 = arith.constant 0 : index
    %160 = vector.load %arg2[%c0_113, %c0_114] : memref<128x128xbf16, #tpu.memory_space<vmem>>, vector<128x128xbf16>
    %cst_115 = arith.constant dense<0.000000e+00> : vector<8x128xf32>
    %161 = tpu.matmul %159, %160, %cst_115 {dimension_numbers = #tpu.dot_dimension_numbers<[1], [0], [0], [1], [0, 0, 1, 1], [], []>} : vector<8x128xbf16>, vector<128x128xbf16>, vector<8x128xf32> -> vector<8x128xf32>
    %162 = arith.addf %158, %161 : vector<8x128xf32>
    %163 = math.tanh %162 : vector<8x128xf32>
    %164 = arith.truncf %139 : vector<8x128xf32> to vector<8x128xbf16>
    %c0_116 = arith.constant 0 : index
    %c0_117 = arith.constant 0 : index
    %165 = vector.load %arg4[%c0_116, %c0_117] : memref<128x128xbf16, #tpu.memory_space<vmem>>, vector<128x128xbf16>
    %cst_118 = arith.constant dense<0.000000e+00> : vector<8x128xf32>
    %166 = tpu.matmul %164, %165, %cst_118 {dimension_numbers = #tpu.dot_dimension_numbers<[1], [0], [0], [1], [0, 0, 1, 1], [], []>} : vector<8x128xbf16>, vector<128x128xbf16>, vector<8x128xf32> -> vector<8x128xf32>
    %c0_119 = arith.constant 0 : index
    %c0_120 = arith.constant 0 : index
    %167 = vector.load %arg6[%c0_119, %c0_120] : memref<1x128xf32, #tpu.memory_space<vmem>>, vector<1x128xf32>
    %168 = vector.broadcast %167 : vector<1x128xf32> to vector<8x128xf32>
    %169 = arith.addf %166, %168 : vector<8x128xf32>
    %170 = arith.truncf %150 : vector<8x128xf32> to vector<8x128xbf16>
    %c0_121 = arith.constant 0 : index
    %c0_122 = arith.constant 0 : index
    %171 = vector.load %arg5[%c0_121, %c0_122] : memref<128x128xbf16, #tpu.memory_space<vmem>>, vector<128x128xbf16>
    %cst_123 = arith.constant dense<0.000000e+00> : vector<8x128xf32>
    %172 = tpu.matmul %170, %171, %cst_123 {dimension_numbers = #tpu.dot_dimension_numbers<[1], [0], [0], [1], [0, 0, 1, 1], [], []>} : vector<8x128xbf16>, vector<128x128xbf16>, vector<8x128xf32> -> vector<8x128xf32>
    %173 = arith.addf %169, %172 : vector<8x128xf32>
    %174 = math.tanh %173 : vector<8x128xf32>
    %175 = arith.truncf %174 : vector<8x128xf32> to vector<8x128xbf16>
    %c0_124 = arith.constant 0 : index
    %c0_125 = arith.constant 0 : index
    %176 = vector.load %arg7[%c0_124, %c0_125] : memref<128x128xbf16, #tpu.memory_space<vmem>>, vector<128x128xbf16>
    %cst_126 = arith.constant dense<0.000000e+00> : vector<8x128xf32>
    %177 = tpu.matmul %175, %176, %cst_126 {dimension_numbers = #tpu.dot_dimension_numbers<[1], [0], [0], [1], [0, 0, 1, 1], [], []>} : vector<8x128xbf16>, vector<128x128xbf16>, vector<8x128xf32> -> vector<8x128xf32>
    %c0_127 = arith.constant 0 : index
    %c0_128 = arith.constant 0 : index
    %178 = vector.load %arg8[%c0_127, %c0_128] : memref<1x128xf32, #tpu.memory_space<vmem>>, vector<1x128xf32>
    %179 = vector.broadcast %178 : vector<1x128xf32> to vector<8x128xf32>
    %180 = arith.addf %177, %179 : vector<8x128xf32>
    %c48 = arith.constant 48 : index
    %c0_129 = arith.constant 0 : index
    %181 = vector.load %arg9[%c48, %c0_129] : memref<64x128xf32, #tpu.memory_space<vmem>>, vector<8x128xf32>
    tpu.vector_store %arg9[%c48, %c0_129], %180 {strides = array<i32>} : memref<64x128xf32, #tpu.memory_space<vmem>>, vector<8x128xf32>,
    %182 = arith.truncf %163 : vector<8x128xf32> to vector<8x128xbf16>
    %c0_130 = arith.constant 0 : index
    %c0_131 = arith.constant 0 : index
    %183 = vector.load %arg4[%c0_130, %c0_131] : memref<128x128xbf16, #tpu.memory_space<vmem>>, vector<128x128xbf16>
    %cst_132 = arith.constant dense<0.000000e+00> : vector<8x128xf32>
    %184 = tpu.matmul %182, %183, %cst_132 {dimension_numbers = #tpu.dot_dimension_numbers<[1], [0], [0], [1], [0, 0, 1, 1], [], []>} : vector<8x128xbf16>, vector<128x128xbf16>, vector<8x128xf32> -> vector<8x128xf32>
    %c0_133 = arith.constant 0 : index
    %c0_134 = arith.constant 0 : index
    %185 = vector.load %arg6[%c0_133, %c0_134] : memref<1x128xf32, #tpu.memory_space<vmem>>, vector<1x128xf32>
    %186 = vector.broadcast %185 : vector<1x128xf32> to vector<8x128xf32>
    %187 = arith.addf %184, %186 : vector<8x128xf32>
    %188 = arith.truncf %174 : vector<8x128xf32> to vector<8x128xbf16>
    %c0_135 = arith.constant 0 : index
    %c0_136 = arith.constant 0 : index
    %189 = vector.load %arg5[%c0_135, %c0_136] : memref<128x128xbf16, #tpu.memory_space<vmem>>, vector<128x128xbf16>
    %cst_137 = arith.constant dense<0.000000e+00> : vector<8x128xf32>
    %190 = tpu.matmul %188, %189, %cst_137 {dimension_numbers = #tpu.dot_dimension_numbers<[1], [0], [0], [1], [0, 0, 1, 1], [], []>} : vector<8x128xbf16>, vector<128x128xbf16>, vector<8x128xf32> -> vector<8x128xf32>
    %191 = arith.addf %187, %190 : vector<8x128xf32>
    %192 = math.tanh %191 : vector<8x128xf32>
    %193 = arith.truncf %192 : vector<8x128xf32> to vector<8x128xbf16>
    %c0_138 = arith.constant 0 : index
    %c0_139 = arith.constant 0 : index
    %194 = vector.load %arg7[%c0_138, %c0_139] : memref<128x128xbf16, #tpu.memory_space<vmem>>, vector<128x128xbf16>
    %cst_140 = arith.constant dense<0.000000e+00> : vector<8x128xf32>
    %195 = tpu.matmul %193, %194, %cst_140 {dimension_numbers = #tpu.dot_dimension_numbers<[1], [0], [0], [1], [0, 0, 1, 1], [], []>} : vector<8x128xbf16>, vector<128x128xbf16>, vector<8x128xf32> -> vector<8x128xf32>
    %c0_141 = arith.constant 0 : index
    %c0_142 = arith.constant 0 : index
    %196 = vector.load %arg8[%c0_141, %c0_142] : memref<1x128xf32, #tpu.memory_space<vmem>>, vector<1x128xf32>
    %197 = vector.broadcast %196 : vector<1x128xf32> to vector<8x128xf32>
    %198 = arith.addf %195, %197 : vector<8x128xf32>
    %c56 = arith.constant 56 : index
    %c0_143 = arith.constant 0 : index
    %199 = vector.load %arg9[%c56, %c0_143] : memref<64x128xf32, #tpu.memory_space<vmem>>, vector<8x128xf32>
    tpu.vector_store %arg9[%c56, %c0_143], %198 {strides = array<i32>} : memref<64x128xf32, #tpu.memory_space<vmem>>, vector<8x128xf32>,
    return
  }
}

</mosaic_0001>

<llo_original>
// kernel: tpu_custom_call.1
$region0: #{tpu_custom_call.1}
  #allocation0 [shape = 'u32[]', space=smem, size = 0x4, offset = 0x4, fixed_abs, tag = 'smem constant byte address 0x4 - core index']
  #allocation1 [shape = 'u32[144,128]{1,0:T(1,128)}', space=vmem, size = 0x12000, scoped, tag = 'internal scratch']
  %s0 = inlined_call_operand.vmem [shape: bf16[64,16], index: 0, kind: input, shape index: {}]
  %s1 = inlined_call_operand.hbm [shape: bf16[16,128], index: 1, kind: input, shape index: {}]
  %s2 = inlined_call_operand.hbm [shape: bf16[128,128], index: 2, kind: input, shape index: {}]
  %s3 = inlined_call_operand.vmem [shape: f32[1,128], index: 3, kind: input, shape index: {}]
  %s4 = inlined_call_operand.hbm [shape: bf16[128,128], index: 4, kind: input, shape index: {}]
  %s5 = inlined_call_operand.hbm [shape: bf16[128,128], index: 5, kind: input, shape index: {}]
  %s6 = inlined_call_operand.vmem [shape: f32[1,128], index: 6, kind: input, shape index: {}]
  %s7 = inlined_call_operand.vmem [shape: bf16[128,128], index: 7, kind: input, shape index: {}]
  %s8 = inlined_call_operand.vmem [shape: f32[1,128], index: 8, kind: input, shape index: {}]
  %s9 = inlined_call_operand.hbm [shape: f32[64,128], index: 9, kind: output, shape index: {}]
  %s10 = sld [smem:[#allocation0]]
  $region62: #{tpu_custom_call.1} parent=0
    _
  %s12 = ssub.s32 1, %s10
  %s13 = scalar_select 0, %s12, %s10
  $region1: #{tpu_custom_call.1} parent=0
    #allocation2 [shape = 'u8[4096]{0}', space=vmem, size = 0x1000, scoped, tag = 'input window, operand 1, single buffered']
    #allocation3 [shape = 's32[1]{0}', space=sflag, size = 0x4, scoped, tag = 'scoped memory for tpu_custom_call.1']
    #allocation4 [shape = 's32[1]{0}', space=sflag, size = 0x4, scoped, tag = 'scoped memory for tpu_custom_call.1']
    #allocation5 [shape = 'u8[32768]{0}', space=vmem, size = 0x8000, scoped, tag = 'input window, operand 2, single buffered']
    #allocation6 [shape = 's32[1]{0}', space=sflag, size = 0x4, scoped, tag = 'scoped memory for tpu_custom_call.1']
    #allocation7 [shape = 'u8[32768]{0}', space=vmem, size = 0x8000, scoped, tag = 'input window, operand 4, single buffered']
    #allocation8 [shape = 'u8[32768]{0}', space=vmem, size = 0x8000, scoped, tag = 'input window, operand 5, single buffered']
    #allocation9 [shape = 's32[1]{0}', space=sflag, size = 0x4, scoped, tag = 'scoped memory for tpu_custom_call.1']
    #allocation10 [shape = 'u8[32768]{0}', space=vmem, size = 0x8000, scoped, tag = 'output window, operand 0, single buffered']
    %14 = vsyncpa [#allocation3], 0
    %15 = vsyncpa [#allocation6], 0
    %16 = vsyncpa [#allocation9], 0
    %17 = vsyncpa [#allocation4], 0
    // Predicated region
    $region2: #{tpu_custom_call.1} parent=1 // pred_check
      _
    $region3: #{tpu_custom_call.1} parent=1 // pred_check_branch
      %19 = sbr.rel (0) target = $region5
    $region4: #{tpu_custom_call.1} parent=1 // pred_region
      _
    $region5: #{tpu_custom_call.1} parent=1 // pred_fallthru
      _
    // Predicated region
    $region6: #{tpu_custom_call.1} parent=1 // pred_check
      _
    $region7: #{tpu_custom_call.1} parent=1 // pred_check_branch
      %21 = sbr.rel (0) target = $region9
    $region8: #{tpu_custom_call.1} parent=1 // pred_region
      %s23 = ssub.s32 128, 128
      %24 = vsyncadd [#allocation3], %s23
      %s25 = sshll.u32 [#allocation2], 4
      %s26 = int_to_ptr.vmem [resolvable:$true] %s25
      %31 = dma.hbm_to_vmem [thread:$0]  %s1, 128, %s26, [#allocation3], 64, 64, 4
    $region9: #{tpu_custom_call.1} parent=1 // pred_fallthru
      _
    // Predicated region
    $region10: #{tpu_custom_call.1} parent=1 // pred_check
      _
    $region11: #{tpu_custom_call.1} parent=1 // pred_check_branch
      %33 = sbr.rel (0) target = $region13
    $region12: #{tpu_custom_call.1} parent=1 // pred_region
      %s35 = ssub.s32 1024, 1024
      %36 = vsyncadd [#allocation6], %s35
      %s37 = sshll.u32 [#allocation5], 4
      %s38 = int_to_ptr.vmem [resolvable:$true] %s37
      %43 = dma.hbm_to_vmem [thread:$0]  %s2, 1024, %s38, [#allocation6], 64, 64, 4
    $region13: #{tpu_custom_call.1} parent=1 // pred_fallthru
      _
    // Predicated region
    $region14: #{tpu_custom_call.1} parent=1 // pred_check
      _
    $region15: #{tpu_custom_call.1} parent=1 // pred_check_branch
      %45 = sbr.rel (0) target = $region17
    $region16: #{tpu_custom_call.1} parent=1 // pred_region
      _
    $region17: #{tpu_custom_call.1} parent=1 // pred_fallthru
      _
    // Predicated region
    $region18: #{tpu_custom_call.1} parent=1 // pred_check
      _
    $region19: #{tpu_custom_call.1} parent=1 // pred_check_branch
      %47 = sbr.rel (0) target = $region21
    $region20: #{tpu_custom_call.1} parent=1 // pred_region
      %s49 = ssub.s32 1024, 1024
      %50 = vsyncadd [#allocation6], %s49
      %s51 = sshll.u32 [#allocation7], 4
      %s52 = int_to_ptr.vmem [resolvable:$true] %s51
      %57 = dma.hbm_to_vmem [thread:$0]  %s4, 1024, %s52, [#allocation6], 64, 64, 4
    $region21: #{tpu_custom_call.1} parent=1 // pred_fallthru
      _
    // Predicated region
    $region22: #{tpu_custom_call.1} parent=1 // pred_check
      _
    $region23: #{tpu_custom_call.1} parent=1 // pred_check_branch
      %59 = sbr.rel (0) target = $region25
    $region24: #{tpu_custom_call.1} parent=1 // pred_region
      %s61 = ssub.s32 1024, 1024
      %62 = vsyncadd [#allocation9], %s61
      %s63 = sshll.u32 [#allocation8], 4
      %s64 = int_to_ptr.vmem [resolvable:$true] %s63
      %69 = dma.hbm_to_vmem [thread:$0]  %s5, 1024, %s64, [#allocation9], 64, 64, 4
    $region25: #{tpu_custom_call.1} parent=1 // pred_fallthru
      _
    // Predicated region
    $region26: #{tpu_custom_call.1} parent=1 // pred_check
      _
    $region27: #{tpu_custom_call.1} parent=1 // pred_check_branch
      %71 = sbr.rel (0) target = $region29
    $region28: #{tpu_custom_call.1} parent=1 // pred_region
      _
    $region29: #{tpu_custom_call.1} parent=1 // pred_fallthru
      _
    // Predicated region
    $region30: #{tpu_custom_call.1} parent=1 // pred_check
      _
    $region31: #{tpu_custom_call.1} parent=1 // pred_check_branch
      %73 = sbr.rel (0) target = $region33
    $region32: #{tpu_custom_call.1} parent=1 // pred_region
      _
    $region33: #{tpu_custom_call.1} parent=1 // pred_fallthru
      _
    // Predicated region
    $region34: #{tpu_custom_call.1} parent=1 // pred_check
      _
    $region35: #{tpu_custom_call.1} parent=1 // pred_check_branch
      %75 = sbr.rel (0) target = $region37
    $region36: #{tpu_custom_call.1} parent=1 // pred_region
      _
    $region37: #{tpu_custom_call.1} parent=1 // pred_fallthru
      _
    // Predicated region
    $region38: #{tpu_custom_call.1} parent=1 // pred_check
      _
    $region39: #{tpu_custom_call.1} parent=1 // pred_check_branch
      %77 = sbr.rel (0) target = $region41
    $region40: #{tpu_custom_call.1} parent=1 // pred_region
      %78 = dma.done [#allocation3], 128
    $region41: #{tpu_custom_call.1} parent=1 // pred_fallthru
      _
    // Predicated region
    $region42: #{tpu_custom_call.1} parent=1 // pred_check
      _
    $region43: #{tpu_custom_call.1} parent=1 // pred_check_branch
      %80 = sbr.rel (0) target = $region45
    $region44: #{tpu_custom_call.1} parent=1 // pred_region
      %81 = dma.done [#allocation6], 1024
    $region45: #{tpu_custom_call.1} parent=1 // pred_fallthru
      _
    // Predicated region
    $region46: #{tpu_custom_call.1} parent=1 // pred_check
      _
    $region47: #{tpu_custom_call.1} parent=1 // pred_check_branch
      %83 = sbr.rel (0) target = $region49
    $region48: #{tpu_custom_call.1} parent=1 // pred_region
      %84 = dma.done [#allocation6], 1024
    $region49: #{tpu_custom_call.1} parent=1 // pred_fallthru
      _
    // Predicated region
    $region50: #{tpu_custom_call.1} parent=1 // pred_check
      _
    $region51: #{tpu_custom_call.1} parent=1 // pred_check_branch
      %86 = sbr.rel (0) target = $region53
    $region52: #{tpu_custom_call.1} parent=1 // pred_region
      %87 = dma.done [#allocation9], 1024
    $region53: #{tpu_custom_call.1} parent=1 // pred_fallthru
      _
    %v89 = vld [vmem:[%s0] sm:$0xf]
    %v90 = vld [vmem:[%s0 + $0x4] sm:$0xf]
    %v91 = vld [vmem:[%s0 + $0x8] sm:$0xf]
    %v92 = vld [vmem:[%s0 + $0xc] sm:$0xf]
    %v93 = vld [vmem:[%s0 + $0x10] sm:$0xf]
    %v94 = vld [vmem:[%s0 + $0x14] sm:$0xf]
    %v95 = vld [vmem:[%s0 + $0x18] sm:$0xf]
    %v96 = vld [vmem:[%s0 + $0x1c] sm:$0xf]
    %v97 = vld [vmem:[#allocation2] sm:$0xf]
    %v98 = vld [vmem:[#allocation2 + $0x4] sm:$0xf]
    %v99 = vld [vmem:[%s3] sm:$0x1]
    %v101 = vlaneseq
    %v102 = vshrl.u32 %v101, 7
    %v103 = vsub.s32 0, %v102
    %v104 = vrot.slane %v99, %v103
    %v114 = vunpack.c.l.b16 %v89
    %v115 = vunpack.c.l.b16 %v90
    %v116 = vunpack.c.l.b16 %v91
    %v117 = vunpack.c.l.b16 %v92
    %v118 = vunpack.c.l.b16 %v93
    %v119 = vunpack.c.l.b16 %v94
    %v120 = vunpack.c.l.b16 %v95
    %v121 = vunpack.c.l.b16 %v96
    %v122 = vpack.c.b16 %v115, %v114
    %v123 = vpack.c.b16 %v117, %v116
    %v124 = vpack.c.b16 %v119, %v118
    %v125 = vpack.c.b16 %v121, %v120
    %v128 = vunpack.c.l.b16 %v97
    %v129 = vunpack.c.l.b16 %v98
    %v130 = vpack.c.b16 %v129, %v128
    %vm132 = vcmask 130048
    %v134 = vsel %vm132, %v122, 0
    %v137 = vsel %vm132, %v123, 0
    %v140 = vsel %vm132, %v124, 0
    %v143 = vsel %vm132, %v125, 0
    %145 = vmatprep.subr.bf16.mxu0 0
    %146 = vmatpush1.bf16.msra.mxu0 %v130
    %147 = vmatprep.subr.bf16.mxu0 0
    %148 = vmatpush1.bf16.msra.mxu0 0
    %149 = vmatprep.subr.bf16.mxu0 0
    %150 = vmatpush1.bf16.msra.mxu0 0
    %151 = vmatprep.subr.bf16.mxu0 0
    %152 = vmatpush1.bf16.msra.mxu0 0
    %153 = vmatprep.subr.bf16.mxu0 0
    %154 = vmatpush1.bf16.msra.mxu0 0
    %155 = vmatprep.subr.bf16.mxu0 0
    %156 = vmatpush1.bf16.msra.mxu0 0
    %157 = vmatprep.subr.bf16.mxu0 0
    %158 = vmatpush1.bf16.msra.mxu0 0
    %159 = vmatprep.subr.bf16.mxu0 0
    %160 = vmatpush1.bf16.msra.mxu0 0
    %161 = vmatprep.subr.bf16.mxu0 0
    %162 = vmatpush1.bf16.msra.mxu0 0
    %163 = vmatprep.subr.bf16.mxu0 0
    %164 = vmatpush1.bf16.msra.mxu0 0
    %165 = vmatprep.subr.bf16.mxu0 0
    %166 = vmatpush1.bf16.msra.mxu0 0
    %167 = vmatprep.subr.bf16.mxu0 0
    %168 = vmatpush1.bf16.msra.mxu0 0
    %169 = vmatprep.subr.bf16.mxu0 0
    %170 = vmatpush1.bf16.msra.mxu0 0
    %171 = vmatprep.subr.bf16.mxu0 0
    %172 = vmatpush1.bf16.msra.mxu0 0
    %173 = vmatprep.subr.bf16.mxu0 0
    %174 = vmatpush1.bf16.msra.mxu0 0
    %175 = vmatprep.subr.bf16.mxu0 0
    %176 = vmatpush1.bf16.msra.mxu0 0
    %177 = vmatprep.mubr.bf16.mxu0 0
    %178 = vmatmul.mubr.bf16.gmra.mrb[0].mxu0 %v134
    %v179 = vpop.f32.mrb[0].mxu0
    %v180 = vadd.f32 %v104, %v179
    %v181 = vpop.f32.mrb[0].mxu0
    %v182 = vpop.f32.mrb[0].mxu0
    %v183 = vadd.f32 %v104, %v182
    %v184 = vpop.f32.mrb[0].mxu0
    %185 = vmatprep.mubr.bf16.mxu0 0
    %186 = vmatmul.mubr.bf16.gmra.mrb[0].mxu0 %v137
    %v187 = vpop.f32.mrb[0].mxu0
    %v188 = vadd.f32 %v104, %v187
    %v189 = vpop.f32.mrb[0].mxu0
    %v190 = vpop.f32.mrb[0].mxu0
    %v191 = vadd.f32 %v104, %v190
    %v192 = vpop.f32.mrb[0].mxu0
    %193 = vmatprep.mubr.bf16.mxu0 0
    %194 = vmatmul.mubr.bf16.gmra.mrb[0].mxu0 %v140
    %v195 = vpop.f32.mrb[0].mxu0
    %v196 = vadd.f32 %v104, %v195
    %v197 = vpop.f32.mrb[0].mxu0
    %v198 = vpop.f32.mrb[0].mxu0
    %v199 = vadd.f32 %v104, %v198
    %v200 = vpop.f32.mrb[0].mxu0
    %201 = vmatprep.mubr.bf16.mxu0 0
    %202 = vmatmul.mubr.bf16.gmra.mrb[0].mxu0 %v143
    %v203 = vpop.f32.mrb[0].mxu0
    %v204 = vadd.f32 %v104, %v203
    %v205 = vpop.f32.mrb[0].mxu0
    %v206 = vpop.f32.mrb[0].mxu0
    %v207 = vadd.f32 %v104, %v206
    %v208 = vpop.f32.mrb[0].mxu0
    %209 = vdwg.mxu0
    %v210 = vld [vmem:[#allocation5] sm:$0xf]
    %v211 = vld [vmem:[#allocation5 + $0x4] sm:$0xf]
    %v212 = vld [vmem:[#allocation5 + $0x8] sm:$0xf]
    %v213 = vld [vmem:[#allocation5 + $0xc] sm:$0xf]
    %v214 = vld [vmem:[#allocation5 + $0x10] sm:$0xf]
    %v215 = vld [vmem:[#allocation5 + $0x14] sm:$0xf]
    %v216 = vld [vmem:[#allocation5 + $0x18] sm:$0xf]
    %v217 = vld [vmem:[#allocation5 + $0x1c] sm:$0xf]
    %v218 = vld [vmem:[#allocation5 + $0x20] sm:$0xf]
    %v219 = vld [vmem:[#allocation5 + $0x24] sm:$0xf]
    %v220 = vld [vmem:[#allocation5 + $0x28] sm:$0xf]
    %v221 = vld [vmem:[#allocation5 + $0x2c] sm:$0xf]
    %v222 = vld [vmem:[#allocation5 + $0x30] sm:$0xf]
    %v223 = vld [vmem:[#allocation5 + $0x34] sm:$0xf]
    %v224 = vld [vmem:[#allocation5 + $0x38] sm:$0xf]
    %v225 = vld [vmem:[#allocation5 + $0x3c] sm:$0xf]
    %v242 = vunpack.c.l.b16 %v210
    %v243 = vunpack.c.l.b16 %v211
    %v244 = vunpack.c.l.b16 %v212
    %v245 = vunpack.c.l.b16 %v213
    %v246 = vunpack.c.l.b16 %v214
    %v247 = vunpack.c.l.b16 %v215
    %v248 = vunpack.c.l.b16 %v216
    %v249 = vunpack.c.l.b16 %v217
    %v250 = vunpack.c.l.b16 %v218
    %v251 = vunpack.c.l.b16 %v219
    %v252 = vunpack.c.l.b16 %v220
    %v253 = vunpack.c.l.b16 %v221
    %v254 = vunpack.c.l.b16 %v222
    %v255 = vunpack.c.l.b16 %v223
    %v256 = vunpack.c.l.b16 %v224
    %v257 = vunpack.c.l.b16 %v225
    %v258 = vpack.c.b16 %v243, %v242
    %v259 = vpack.c.b16 %v245, %v244
    %v260 = vpack.c.b16 %v247, %v246
    %v261 = vpack.c.b16 %v249, %v248
    %v262 = vpack.c.b16 %v251, %v250
    %v263 = vpack.c.b16 %v253, %v252
    %v264 = vpack.c.b16 %v255, %v254
    %v265 = vpack.c.b16 %v257, %v256
    %274 = vmatprep.subr.bf16.mxu0 0
    %275 = vmatpush1.bf16.msra.mxu0 %v258
    %276 = vmatprep.subr.bf16.mxu0 0
    %277 = vmatpush1.bf16.msra.mxu0 %v259
    %278 = vmatprep.subr.bf16.mxu0 0
    %279 = vmatpush1.bf16.msra.mxu0 %v260
    %280 = vmatprep.subr.bf16.mxu0 0
    %281 = vmatpush1.bf16.msra.mxu0 %v261
    %282 = vmatprep.subr.bf16.mxu0 0
    %283 = vmatpush1.bf16.msra.mxu0 %v262
    %284 = vmatprep.subr.bf16.mxu0 0
    %285 = vmatpush1.bf16.msra.mxu0 %v263
    %286 = vmatprep.subr.bf16.mxu0 0
    %287 = vmatpush1.bf16.msra.mxu0 %v264
    %288 = vmatprep.subr.bf16.mxu0 0
    %289 = vmatpush1.bf16.msra.mxu0 %v265
    %290 = vmatprep.subr.bf16.mxu0 0
    %291 = vmatpush1.bf16.msra.mxu0 0
    %292 = vmatprep.subr.bf16.mxu0 0
    %293 = vmatpush1.bf16.msra.mxu0 0
    %294 = vmatprep.subr.bf16.mxu0 0
    %295 = vmatpush1.bf16.msra.mxu0 0
    %296 = vmatprep.subr.bf16.mxu0 0
    %297 = vmatpush1.bf16.msra.mxu0 0
    %298 = vmatprep.subr.bf16.mxu0 0
    %299 = vmatpush1.bf16.msra.mxu0 0
    %300 = vmatprep.subr.bf16.mxu0 0
    %301 = vmatpush1.bf16.msra.mxu0 0
    %302 = vmatprep.subr.bf16.mxu0 0
    %303 = vmatpush1.bf16.msra.mxu0 0
    %304 = vmatprep.subr.bf16.mxu0 0
    %305 = vmatpush1.bf16.msra.mxu0 0
    %306 = vmatprep.mubr.bf16.mxu0 0
    %307 = vmatmul.mubr.bf16.gmra.mrb[0].mxu0 0
    %v308 = vpop.f32.mrb[0].mxu0
    %v309 = vadd.f32 0.0, %v308
    %v310 = vpop.f32.mrb[0].mxu0
    %v311 = vpop.f32.mrb[0].mxu0
    %v312 = vpop.f32.mrb[0].mxu0
    %313 = vdwg.mxu0
    %v314 = vadd.f32 %v180, %v309
    %v315 = vtanh.pop %v314
    %v316 = vpack.c.bf16 %v315, %v315
    %317 = vmatprep.subr.bf16.mxu0 0
    %318 = vmatpush1.bf16.msra.mxu0 %v258
    %319 = vmatprep.subr.bf16.mxu0 0
    %320 = vmatpush1.bf16.msra.mxu0 %v259
    %321 = vmatprep.subr.bf16.mxu0 0
    %322 = vmatpush1.bf16.msra.mxu0 %v260
    %323 = vmatprep.subr.bf16.mxu0 0
    %324 = vmatpush1.bf16.msra.mxu0 %v261
    %325 = vmatprep.subr.bf16.mxu0 0
    %326 = vmatpush1.bf16.msra.mxu0 %v262
    %327 = vmatprep.subr.bf16.mxu0 0
    %328 = vmatpush1.bf16.msra.mxu0 %v263
    %329 = vmatprep.subr.bf16.mxu0 0
    %330 = vmatpush1.bf16.msra.mxu0 %v264
    %331 = vmatprep.subr.bf16.mxu0 0
    %332 = vmatpush1.bf16.msra.mxu0 %v265
    %333 = vmatprep.subr.bf16.mxu0 0
    %334 = vmatpush1.bf16.msra.mxu0 0
    %335 = vmatprep.subr.bf16.mxu0 0
    %336 = vmatpush1.bf16.msra.mxu0 0
    %337 = vmatprep.subr.bf16.mxu0 0
    %338 = vmatpush1.bf16.msra.mxu0 0
    %339 = vmatprep.subr.bf16.mxu0 0
    %340 = vmatpush1.bf16.msra.mxu0 0
    %341 = vmatprep.subr.bf16.mxu0 0
    %342 = vmatpush1.bf16.msra.mxu0 0
    %343 = vmatprep.subr.bf16.mxu0 0
    %344 = vmatpush1.bf16.msra.mxu0 0
    %345 = vmatprep.subr.bf16.mxu0 0
    %346 = vmatpush1.bf16.msra.mxu0 0
    %347 = vmatprep.subr.bf16.mxu0 0
    %348 = vmatpush1.bf16.msra.mxu0 0
    %349 = vmatprep.mubr.bf16.mxu0 0
    %350 = vmatmul.mubr.bf16.gmra.mrb[0].mxu0 %v316
    %v351 = vpop.f32.mrb[0].mxu0
    %v352 = vadd.f32 0.0, %v351
    %v353 = vpop.f32.mrb[0].mxu0
    %v354 = vpop.f32.mrb[0].mxu0
    %v355 = vpop.f32.mrb[0].mxu0
    %356 = vdwg.mxu0
    %v357 = vadd.f32 %v183, %v352
    %v358 = vtanh.pop %v357
    %v359 = vld [vmem:[#allocation7] sm:$0xf]
    %v360 = vld [vmem:[#allocation7 + $0x4] sm:$0xf]
    %v361 = vld [vmem:[#allocation7 + $0x8] sm:$0xf]
    %v362 = vld [vmem:[#allocation7 + $0xc] sm:$0xf]
    %v363 = vld [vmem:[#allocation7 + $0x10] sm:$0xf]
    %v364 = vld [vmem:[#allocation7 + $0x14] sm:$0xf]
    %v365 = vld [vmem:[#allocation7 + $0x18] sm:$0xf]
    %v366 = vld [vmem:[#allocation7 + $0x1c] sm:$0xf]
    %v367 = vld [vmem:[#allocation7 + $0x20] sm:$0xf]
    %v368 = vld [vmem:[#allocation7 + $0x24] sm:$0xf]
    %v369 = vld [vmem:[#allocation7 + $0x28] sm:$0xf]
    %v370 = vld [vmem:[#allocation7 + $0x2c] sm:$0xf]
    %v371 = vld [vmem:[#allocation7 + $0x30] sm:$0xf]
    %v372 = vld [vmem:[#allocation7 + $0x34] sm:$0xf]
    %v373 = vld [vmem:[#allocation7 + $0x38] sm:$0xf]
    %v374 = vld [vmem:[#allocation7 + $0x3c] sm:$0xf]
    %v375 = vld [vmem:[%s6] sm:$0x1]
    %v377 = vlaneseq
    %v378 = vshrl.u32 %v377, 7
    %v379 = vsub.s32 0, %v378
    %v380 = vrot.slane %v375, %v379
    %v398 = vunpack.c.l.b16 %v359
    %v399 = vunpack.c.l.b16 %v360
    %v400 = vunpack.c.l.b16 %v361
    %v401 = vunpack.c.l.b16 %v362
    %v402 = vunpack.c.l.b16 %v363
    %v403 = vunpack.c.l.b16 %v364
    %v404 = vunpack.c.l.b16 %v365
    %v405 = vunpack.c.l.b16 %v366
    %v406 = vunpack.c.l.b16 %v367
    %v407 = vunpack.c.l.b16 %v368
    %v408 = vunpack.c.l.b16 %v369
    %v409 = vunpack.c.l.b16 %v370
    %v410 = vunpack.c.l.b16 %v371
    %v411 = vunpack.c.l.b16 %v372
    %v412 = vunpack.c.l.b16 %v373
    %v413 = vunpack.c.l.b16 %v374
    %v414 = vpack.c.b16 %v399, %v398
    %v415 = vpack.c.b16 %v401, %v400
    %v416 = vpack.c.b16 %v403, %v402
    %v417 = vpack.c.b16 %v405, %v404
    %v418 = vpack.c.b16 %v407, %v406
    %v419 = vpack.c.b16 %v409, %v408
    %v420 = vpack.c.b16 %v411, %v410
    %v421 = vpack.c.b16 %v413, %v412
    %430 = vmatprep.subr.bf16.mxu0 0
    %431 = vmatpush1.bf16.msra.mxu0 %v414
    %432 = vmatprep.subr.bf16.mxu0 0
    %433 = vmatpush1.bf16.msra.mxu0 %v415
    %434 = vmatprep.subr.bf16.mxu0 0
    %435 = vmatpush1.bf16.msra.mxu0 %v416
    %436 = vmatprep.subr.bf16.mxu0 0
    %437 = vmatpush1.bf16.msra.mxu0 %v417
    %438 = vmatprep.subr.bf16.mxu0 0
    %439 = vmatpush1.bf16.msra.mxu0 %v418
    %440 = vmatprep.subr.bf16.mxu0 0
    %441 = vmatpush1.bf16.msra.mxu0 %v419
    %442 = vmatprep.subr.bf16.mxu0 0
    %443 = vmatpush1.bf16.msra.mxu0 %v420
    %444 = vmatprep.subr.bf16.mxu0 0
    %445 = vmatpush1.bf16.msra.mxu0 %v421
    %446 = vmatprep.subr.bf16.mxu0 0
    %447 = vmatpush1.bf16.msra.mxu0 0
    %448 = vmatprep.subr.bf16.mxu0 0
    %449 = vmatpush1.bf16.msra.mxu0 0
    %450 = vmatprep.subr.bf16.mxu0 0
    %451 = vmatpush1.bf16.msra.mxu0 0
    %452 = vmatprep.subr.bf16.mxu0 0
    %453 = vmatpush1.bf16.msra.mxu0 0
    %454 = vmatprep.subr.bf16.mxu0 0
    %455 = vmatpush1.bf16.msra.mxu0 0
    %456 = vmatprep.subr.bf16.mxu0 0
    %457 = vmatpush1.bf16.msra.mxu0 0
    %458 = vmatprep.subr.bf16.mxu0 0
    %459 = vmatpush1.bf16.msra.mxu0 0
    %460 = vmatprep.subr.bf16.mxu0 0
    %461 = vmatpush1.bf16.msra.mxu0 0
    %462 = vmatprep.mubr.bf16.mxu0 0
    %463 = vmatmul.mubr.bf16.gmra.mrb[0].mxu0 %v316
    %v464 = vpop.f32.mrb[0].mxu0
    %v465 = vadd.f32 %v380, %v464
    %v466 = vpop.f32.mrb[0].mxu0
    %v467 = vpop.f32.mrb[0].mxu0
    %v468 = vpop.f32.mrb[0].mxu0
    %469 = vdwg.mxu0
    %v470 = vld [vmem:[#allocation8] sm:$0xf]
    %v471 = vld [vmem:[#allocation8 + $0x4] sm:$0xf]
    %v472 = vld [vmem:[#allocation8 + $0x8] sm:$0xf]
    %v473 = vld [vmem:[#allocation8 + $0xc] sm:$0xf]
    %v474 = vld [vmem:[#allocation8 + $0x10] sm:$0xf]
    %v475 = vld [vmem:[#allocation8 + $0x14] sm:$0xf]
    %v476 = vld [vmem:[#allocation8 + $0x18] sm:$0xf]
    %v477 = vld [vmem:[#allocation8 + $0x1c] sm:$0xf]
    %v478 = vld [vmem:[#allocation8 + $0x20] sm:$0xf]
    %v479 = vld [vmem:[#allocation8 + $0x24] sm:$0xf]
    %v480 = vld [vmem:[#allocation8 + $0x28] sm:$0xf]
    %v481 = vld [vmem:[#allocation8 + $0x2c] sm:$0xf]
    %v482 = vld [vmem:[#allocation8 + $0x30] sm:$0xf]
    %v483 = vld [vmem:[#allocation8 + $0x34] sm:$0xf]
    %v484 = vld [vmem:[#allocation8 + $0x38] sm:$0xf]
    %v485 = vld [vmem:[#allocation8 + $0x3c] sm:$0xf]
    %v502 = vunpack.c.l.b16 %v470
    %v503 = vunpack.c.l.b16 %v471
    %v504 = vunpack.c.l.b16 %v472
    %v505 = vunpack.c.l.b16 %v473
    %v506 = vunpack.c.l.b16 %v474
    %v507 = vunpack.c.l.b16 %v475
    %v508 = vunpack.c.l.b16 %v476
    %v509 = vunpack.c.l.b16 %v477
    %v510 = vunpack.c.l.b16 %v478
    %v511 = vunpack.c.l.b16 %v479
    %v512 = vunpack.c.l.b16 %v480
    %v513 = vunpack.c.l.b16 %v481
    %v514 = vunpack.c.l.b16 %v482
    %v515 = vunpack.c.l.b16 %v483
    %v516 = vunpack.c.l.b16 %v484
    %v517 = vunpack.c.l.b16 %v485
    %v518 = vpack.c.b16 %v503, %v502
    %v519 = vpack.c.b16 %v505, %v504
    %v520 = vpack.c.b16 %v507, %v506
    %v521 = vpack.c.b16 %v509, %v508
    %v522 = vpack.c.b16 %v511, %v510
    %v523 = vpack.c.b16 %v513, %v512
    %v524 = vpack.c.b16 %v515, %v514
    %v525 = vpack.c.b16 %v517, %v516
    %534 = vmatprep.subr.bf16.mxu0 0
    %535 = vmatpush1.bf16.msra.mxu0 %v518
    %536 = vmatprep.subr.bf16.mxu0 0
    %537 = vmatpush1.bf16.msra.mxu0 %v519
    %538 = vmatprep.subr.bf16.mxu0 0
    %539 = vmatpush1.bf16.msra.mxu0 %v520
    %540 = vmatprep.subr.bf16.mxu0 0
    %541 = vmatpush1.bf16.msra.mxu0 %v521
    %542 = vmatprep.subr.bf16.mxu0 0
    %543 = vmatpush1.bf16.msra.mxu0 %v522
    %544 = vmatprep.subr.bf16.mxu0 0
    %545 = vmatpush1.bf16.msra.mxu0 %v523
    %546 = vmatprep.subr.bf16.mxu0 0
    %547 = vmatpush1.bf16.msra.mxu0 %v524
    %548 = vmatprep.subr.bf16.mxu0 0
    %549 = vmatpush1.bf16.msra.mxu0 %v525
    %550 = vmatprep.subr.bf16.mxu0 0
    %551 = vmatpush1.bf16.msra.mxu0 0
    %552 = vmatprep.subr.bf16.mxu0 0
    %553 = vmatpush1.bf16.msra.mxu0 0
    %554 = vmatprep.subr.bf16.mxu0 0
    %555 = vmatpush1.bf16.msra.mxu0 0
    %556 = vmatprep.subr.bf16.mxu0 0
    %557 = vmatpush1.bf16.msra.mxu0 0
    %558 = vmatprep.subr.bf16.mxu0 0
    %559 = vmatpush1.bf16.msra.mxu0 0
    %560 = vmatprep.subr.bf16.mxu0 0
    %561 = vmatpush1.bf16.msra.mxu0 0
    %562 = vmatprep.subr.bf16.mxu0 0
    %563 = vmatpush1.bf16.msra.mxu0 0
    %564 = vmatprep.subr.bf16.mxu0 0
    %565 = vmatpush1.bf16.msra.mxu0 0
    %566 = vmatprep.mubr.bf16.mxu0 0
    %567 = vmatmul.mubr.bf16.gmra.mrb[0].mxu0 0
    %v568 = vpop.f32.mrb[0].mxu0
    %v569 = vadd.f32 0.0, %v568
    %v570 = vpop.f32.mrb[0].mxu0
    %v571 = vpop.f32.mrb[0].mxu0
    %v572 = vpop.f32.mrb[0].mxu0
    %573 = vdwg.mxu0
    %v574 = vadd.f32 %v465, %v569
    %v575 = vtanh.pop %v574
    %v576 = vpack.c.bf16 %v575, %v575
    %v577 = vld [vmem:[%s7] sm:$0xf]
    %v578 = vld [vmem:[%s7 + $0x4] sm:$0xf]
    %v579 = vld [vmem:[%s7 + $0x8] sm:$0xf]
    %v580 = vld [vmem:[%s7 + $0xc] sm:$0xf]
    %v581 = vld [vmem:[%s7 + $0x10] sm:$0xf]
    %v582 = vld [vmem:[%s7 + $0x14] sm:$0xf]
    %v583 = vld [vmem:[%s7 + $0x18] sm:$0xf]
    %v584 = vld [vmem:[%s7 + $0x1c] sm:$0xf]
    %v585 = vld [vmem:[%s7 + $0x20] sm:$0xf]
    %v586 = vld [vmem:[%s7 + $0x24] sm:$0xf]
    %v587 = vld [vmem:[%s7 + $0x28] sm:$0xf]
    %v588 = vld [vmem:[%s7 + $0x2c] sm:$0xf]
    %v589 = vld [vmem:[%s7 + $0x30] sm:$0xf]
    %v590 = vld [vmem:[%s7 + $0x34] sm:$0xf]
    %v591 = vld [vmem:[%s7 + $0x38] sm:$0xf]
    %v592 = vld [vmem:[%s7 + $0x3c] sm:$0xf]
    %v593 = vld [vmem:[%s8] sm:$0x1]
    %v595 = vlaneseq
    %v596 = vshrl.u32 %v595, 7
    %v597 = vsub.s32 0, %v596
    %v598 = vrot.slane %v593, %v597
    %v616 = vunpack.c.l.b16 %v577
    %v617 = vunpack.c.l.b16 %v578
    %v618 = vunpack.c.l.b16 %v579
    %v619 = vunpack.c.l.b16 %v580
    %v620 = vunpack.c.l.b16 %v581
    %v621 = vunpack.c.l.b16 %v582
    %v622 = vunpack.c.l.b16 %v583
    %v623 = vunpack.c.l.b16 %v584
    %v624 = vunpack.c.l.b16 %v585
    %v625 = vunpack.c.l.b16 %v586
    %v626 = vunpack.c.l.b16 %v587
    %v627 = vunpack.c.l.b16 %v588
    %v628 = vunpack.c.l.b16 %v589
    %v629 = vunpack.c.l.b16 %v590
    %v630 = vunpack.c.l.b16 %v591
    %v631 = vunpack.c.l.b16 %v592
    %v632 = vpack.c.b16 %v617, %v616
    %v633 = vpack.c.b16 %v619, %v618
    %v634 = vpack.c.b16 %v621, %v620
    %v635 = vpack.c.b16 %v623, %v622
    %v636 = vpack.c.b16 %v625, %v624
    %v637 = vpack.c.b16 %v627, %v626
    %v638 = vpack.c.b16 %v629, %v628
    %v639 = vpack.c.b16 %v631, %v630
    %648 = vmatprep.subr.bf16.mxu0 0
    %649 = vmatpush1.bf16.msra.mxu0 %v632
    %650 = vmatprep.subr.bf16.mxu0 0
    %651 = vmatpush1.bf16.msra.mxu0 %v633
    %652 = vmatprep.subr.bf16.mxu0 0
    %653 = vmatpush1.bf16.msra.mxu0 %v634
    %654 = vmatprep.subr.bf16.mxu0 0
    %655 = vmatpush1.bf16.msra.mxu0 %v635
    %656 = vmatprep.subr.bf16.mxu0 0
    %657 = vmatpush1.bf16.msra.mxu0 %v636
    %658 = vmatprep.subr.bf16.mxu0 0
    %659 = vmatpush1.bf16.msra.mxu0 %v637
    %660 = vmatprep.subr.bf16.mxu0 0
    %661 = vmatpush1.bf16.msra.mxu0 %v638
    %662 = vmatprep.subr.bf16.mxu0 0
    %663 = vmatpush1.bf16.msra.mxu0 %v639
    %664 = vmatprep.subr.bf16.mxu0 0
    %665 = vmatpush1.bf16.msra.mxu0 0
    %666 = vmatprep.subr.bf16.mxu0 0
    %667 = vmatpush1.bf16.msra.mxu0 0
    %668 = vmatprep.subr.bf16.mxu0 0
    %669 = vmatpush1.bf16.msra.mxu0 0
    %670 = vmatprep.subr.bf16.mxu0 0
    %671 = vmatpush1.bf16.msra.mxu0 0
    %672 = vmatprep.subr.bf16.mxu0 0
    %673 = vmatpush1.bf16.msra.mxu0 0
    %674 = vmatprep.subr.bf16.mxu0 0
    %675 = vmatpush1.bf16.msra.mxu0 0
    %676 = vmatprep.subr.bf16.mxu0 0
    %677 = vmatpush1.bf16.msra.mxu0 0
    %678 = vmatprep.subr.bf16.mxu0 0
    %679 = vmatpush1.bf16.msra.mxu0 0
    %680 = vmatprep.mubr.bf16.mxu0 0
    %681 = vmatmul.mubr.bf16.gmra.mrb[0].mxu0 %v576
    %v682 = vpop.f32.mrb[0].mxu0
    %v683 = vadd.f32 %v598, %v682
    %v684 = vpop.f32.mrb[0].mxu0
    %v685 = vpop.f32.mrb[0].mxu0
    %v686 = vpop.f32.mrb[0].mxu0
    %687 = vdwg.mxu0
    %688 = vst [vmem:[#allocation10] sm:$0xff] %v683
    %v689 = vpack.c.bf16 %v358, %v358
    %v690 = vld [vmem:[#allocation5] sm:$0xf]
    %v691 = vld [vmem:[#allocation5 + $0x4] sm:$0xf]
    %v692 = vld [vmem:[#allocation5 + $0x8] sm:$0xf]
    %v693 = vld [vmem:[#allocation5 + $0xc] sm:$0xf]
    %v694 = vld [vmem:[#allocation5 + $0x10] sm:$0xf]
    %v695 = vld [vmem:[#allocation5 + $0x14] sm:$0xf]
    %v696 = vld [vmem:[#allocation5 + $0x18] sm:$0xf]
    %v697 = vld [vmem:[#allocation5 + $0x1c] sm:$0xf]
    %v698 = vld [vmem:[#allocation5 + $0x20] sm:$0xf]
    %v699 = vld [vmem:[#allocation5 + $0x24] sm:$0xf]
    %v700 = vld [vmem:[#allocation5 + $0x28] sm:$0xf]
    %v701 = vld [vmem:[#allocation5 + $0x2c] sm:$0xf]
    %v702 = vld [vmem:[#allocation5 + $0x30] sm:$0xf]
    %v703 = vld [vmem:[#allocation5 + $0x34] sm:$0xf]
    %v704 = vld [vmem:[#allocation5 + $0x38] sm:$0xf]
    %v705 = vld [vmem:[#allocation5 + $0x3c] sm:$0xf]
    %v722 = vunpack.c.l.b16 %v690
    %v723 = vunpack.c.l.b16 %v691
    %v724 = vunpack.c.l.b16 %v692
    %v725 = vunpack.c.l.b16 %v693
    %v726 = vunpack.c.l.b16 %v694
    %v727 = vunpack.c.l.b16 %v695
    %v728 = vunpack.c.l.b16 %v696
    %v729 = vunpack.c.l.b16 %v697
    %v730 = vunpack.c.l.b16 %v698
    %v731 = vunpack.c.l.b16 %v699
    %v732 = vunpack.c.l.b16 %v700
    %v733 = vunpack.c.l.b16 %v701
    %v734 = vunpack.c.l.b16 %v702
    %v735 = vunpack.c.l.b16 %v703
    %v736 = vunpack.c.l.b16 %v704
    %v737 = vunpack.c.l.b16 %v705
    %v738 = vpack.c.b16 %v723, %v722
    %v739 = vpack.c.b16 %v725, %v724
    %v740 = vpack.c.b16 %v727, %v726
    %v741 = vpack.c.b16 %v729, %v728
    %v742 = vpack.c.b16 %v731, %v730
    %v743 = vpack.c.b16 %v733, %v732
    %v744 = vpack.c.b16 %v735, %v734
    %v745 = vpack.c.b16 %v737, %v736
    %754 = vmatprep.subr.bf16.mxu0 0
    %755 = vmatpush1.bf16.msra.mxu0 %v738
    %756 = vmatprep.subr.bf16.mxu0 0
    %757 = vmatpush1.bf16.msra.mxu0 %v739
    %758 = vmatprep.subr.bf16.mxu0 0
    %759 = vmatpush1.bf16.msra.mxu0 %v740
    %760 = vmatprep.subr.bf16.mxu0 0
    %761 = vmatpush1.bf16.msra.mxu0 %v741
    %762 = vmatprep.subr.bf16.mxu0 0
    %763 = vmatpush1.bf16.msra.mxu0 %v742
    %764 = vmatprep.subr.bf16.mxu0 0
    %765 = vmatpush1.bf16.msra.mxu0 %v743
    %766 = vmatprep.subr.bf16.mxu0 0
    %767 = vmatpush1.bf16.msra.mxu0 %v744
    %768 = vmatprep.subr.bf16.mxu0 0
    %769 = vmatpush1.bf16.msra.mxu0 %v745
    %770 = vmatprep.subr.bf16.mxu0 0
    %771 = vmatpush1.bf16.msra.mxu0 0
    %772 = vmatprep.subr.bf16.mxu0 0
    %773 = vmatpush1.bf16.msra.mxu0 0
    %774 = vmatprep.subr.bf16.mxu0 0
    %775 = vmatpush1.bf16.msra.mxu0 0
    %776 = vmatprep.subr.bf16.mxu0 0
    %777 = vmatpush1.bf16.msra.mxu0 0
    %778 = vmatprep.subr.bf16.mxu0 0
    %779 = vmatpush1.bf16.msra.mxu0 0
    %780 = vmatprep.subr.bf16.mxu0 0
    %781 = vmatpush1.bf16.msra.mxu0 0
    %782 = vmatprep.subr.bf16.mxu0 0
    %783 = vmatpush1.bf16.msra.mxu0 0
    %784 = vmatprep.subr.bf16.mxu0 0
    %785 = vmatpush1.bf16.msra.mxu0 0
    %786 = vmatprep.mubr.bf16.mxu0 0
    %787 = vmatmul.mubr.bf16.gmra.mrb[0].mxu0 %v689
    %v788 = vpop.f32.mrb[0].mxu0
    %v789 = vadd.f32 0.0, %v788
    %v790 = vpop.f32.mrb[0].mxu0
    %v791 = vpop.f32.mrb[0].mxu0
    %v792 = vpop.f32.mrb[0].mxu0
    %793 = vdwg.mxu0
    %v794 = vadd.f32 %v188, %v789
    %v795 = vtanh.pop %v794
    %v796 = vld [vmem:[#allocation7] sm:$0xf]
    %v797 = vld [vmem:[#allocation7 + $0x4] sm:$0xf]
    %v798 = vld [vmem:[#allocation7 + $0x8] sm:$0xf]
    %v799 = vld [vmem:[#allocation7 + $0xc] sm:$0xf]
    %v800 = vld [vmem:[#allocation7 + $0x10] sm:$0xf]
    %v801 = vld [vmem:[#allocation7 + $0x14] sm:$0xf]
    %v802 = vld [vmem:[#allocation7 + $0x18] sm:$0xf]
    %v803 = vld [vmem:[#allocation7 + $0x1c] sm:$0xf]
    %v804 = vld [vmem:[#allocation7 + $0x20] sm:$0xf]
    %v805 = vld [vmem:[#allocation7 + $0x24] sm:$0xf]
    %v806 = vld [vmem:[#allocation7 + $0x28] sm:$0xf]
    %v807 = vld [vmem:[#allocation7 + $0x2c] sm:$0xf]
    %v808 = vld [vmem:[#allocation7 + $0x30] sm:$0xf]
    %v809 = vld [vmem:[#allocation7 + $0x34] sm:$0xf]
    %v810 = vld [vmem:[#allocation7 + $0x38] sm:$0xf]
    %v811 = vld [vmem:[#allocation7 + $0x3c] sm:$0xf]
    %v812 = vld [vmem:[%s6] sm:$0x1]
    %v814 = vlaneseq
    %v815 = vshrl.u32 %v814, 7
    %v816 = vsub.s32 0, %v815
    %v817 = vrot.slane %v812, %v816
    %v835 = vunpack.c.l.b16 %v796
    %v836 = vunpack.c.l.b16 %v797
    %v837 = vunpack.c.l.b16 %v798
    %v838 = vunpack.c.l.b16 %v799
    %v839 = vunpack.c.l.b16 %v800
    %v840 = vunpack.c.l.b16 %v801
    %v841 = vunpack.c.l.b16 %v802
    %v842 = vunpack.c.l.b16 %v803
    %v843 = vunpack.c.l.b16 %v804
    %v844 = vunpack.c.l.b16 %v805
    %v845 = vunpack.c.l.b16 %v806
    %v846 = vunpack.c.l.b16 %v807
    %v847 = vunpack.c.l.b16 %v808
    %v848 = vunpack.c.l.b16 %v809
    %v849 = vunpack.c.l.b16 %v810
    %v850 = vunpack.c.l.b16 %v811
    %v851 = vpack.c.b16 %v836, %v835
    %v852 = vpack.c.b16 %v838, %v837
    %v853 = vpack.c.b16 %v840, %v839
    %v854 = vpack.c.b16 %v842, %v841
    %v855 = vpack.c.b16 %v844, %v843
    %v856 = vpack.c.b16 %v846, %v845
    %v857 = vpack.c.b16 %v848, %v847
    %v858 = vpack.c.b16 %v850, %v849
    %867 = vmatprep.subr.bf16.mxu0 0
    %868 = vmatpush1.bf16.msra.mxu0 %v851
    %869 = vmatprep.subr.bf16.mxu0 0
    %870 = vmatpush1.bf16.msra.mxu0 %v852
    %871 = vmatprep.subr.bf16.mxu0 0
    %872 = vmatpush1.bf16.msra.mxu0 %v853
    %873 = vmatprep.subr.bf16.mxu0 0
    %874 = vmatpush1.bf16.msra.mxu0 %v854
    %875 = vmatprep.subr.bf16.mxu0 0
    %876 = vmatpush1.bf16.msra.mxu0 %v855
    %877 = vmatprep.subr.bf16.mxu0 0
    %878 = vmatpush1.bf16.msra.mxu0 %v856
    %879 = vmatprep.subr.bf16.mxu0 0
    %880 = vmatpush1.bf16.msra.mxu0 %v857
    %881 = vmatprep.subr.bf16.mxu0 0
    %882 = vmatpush1.bf16.msra.mxu0 %v858
    %883 = vmatprep.subr.bf16.mxu0 0
    %884 = vmatpush1.bf16.msra.mxu0 0
    %885 = vmatprep.subr.bf16.mxu0 0
    %886 = vmatpush1.bf16.msra.mxu0 0
    %887 = vmatprep.subr.bf16.mxu0 0
    %888 = vmatpush1.bf16.msra.mxu0 0
    %889 = vmatprep.subr.bf16.mxu0 0
    %890 = vmatpush1.bf16.msra.mxu0 0
    %891 = vmatprep.subr.bf16.mxu0 0
    %892 = vmatpush1.bf16.msra.mxu0 0
    %893 = vmatprep.subr.bf16.mxu0 0
    %894 = vmatpush1.bf16.msra.mxu0 0
    %895 = vmatprep.subr.bf16.mxu0 0
    %896 = vmatpush1.bf16.msra.mxu0 0
    %897 = vmatprep.subr.bf16.mxu0 0
    %898 = vmatpush1.bf16.msra.mxu0 0
    %899 = vmatprep.mubr.bf16.mxu0 0
    %900 = vmatmul.mubr.bf16.gmra.mrb[0].mxu0 %v689
    %v901 = vpop.f32.mrb[0].mxu0
    %v902 = vadd.f32 %v817, %v901
    %v903 = vpop.f32.mrb[0].mxu0
    %v904 = vpop.f32.mrb[0].mxu0
    %v905 = vpop.f32.mrb[0].mxu0
    %906 = vdwg.mxu0
    %v907 = vld [vmem:[#allocation8] sm:$0xf]
    %v908 = vld [vmem:[#allocation8 + $0x4] sm:$0xf]
    %v909 = vld [vmem:[#allocation8 + $0x8] sm:$0xf]
    %v910 = vld [vmem:[#allocation8 + $0xc] sm:$0xf]
    %v911 = vld [vmem:[#allocation8 + $0x10] sm:$0xf]
    %v912 = vld [vmem:[#allocation8 + $0x14] sm:$0xf]
    %v913 = vld [vmem:[#allocation8 + $0x18] sm:$0xf]
    %v914 = vld [vmem:[#allocation8 + $0x1c] sm:$0xf]
    %v915 = vld [vmem:[#allocation8 + $0x20] sm:$0xf]
    %v916 = vld [vmem:[#allocation8 + $0x24] sm:$0xf]
    %v917 = vld [vmem:[#allocation8 + $0x28] sm:$0xf]
    %v918 = vld [vmem:[#allocation8 + $0x2c] sm:$0xf]
    %v919 = vld [vmem:[#allocation8 + $0x30] sm:$0xf]
    %v920 = vld [vmem:[#allocation8 + $0x34] sm:$0xf]
    %v921 = vld [vmem:[#allocation8 + $0x38] sm:$0xf]
    %v922 = vld [vmem:[#allocation8 + $0x3c] sm:$0xf]
    %v939 = vunpack.c.l.b16 %v907
    %v940 = vunpack.c.l.b16 %v908
    %v941 = vunpack.c.l.b16 %v909
    %v942 = vunpack.c.l.b16 %v910
    %v943 = vunpack.c.l.b16 %v911
    %v944 = vunpack.c.l.b16 %v912
    %v945 = vunpack.c.l.b16 %v913
    %v946 = vunpack.c.l.b16 %v914
    %v947 = vunpack.c.l.b16 %v915
    %v948 = vunpack.c.l.b16 %v916
    %v949 = vunpack.c.l.b16 %v917
    %v950 = vunpack.c.l.b16 %v918
    %v951 = vunpack.c.l.b16 %v919
    %v952 = vunpack.c.l.b16 %v920
    %v953 = vunpack.c.l.b16 %v921
    %v954 = vunpack.c.l.b16 %v922
    %v955 = vpack.c.b16 %v940, %v939
    %v956 = vpack.c.b16 %v942, %v941
    %v957 = vpack.c.b16 %v944, %v943
    %v958 = vpack.c.b16 %v946, %v945
    %v959 = vpack.c.b16 %v948, %v947
    %v960 = vpack.c.b16 %v950, %v949
    %v961 = vpack.c.b16 %v952, %v951
    %v962 = vpack.c.b16 %v954, %v953
    %971 = vmatprep.subr.bf16.mxu0 0
    %972 = vmatpush1.bf16.msra.mxu0 %v955
    %973 = vmatprep.subr.bf16.mxu0 0
    %974 = vmatpush1.bf16.msra.mxu0 %v956
    %975 = vmatprep.subr.bf16.mxu0 0
    %976 = vmatpush1.bf16.msra.mxu0 %v957
    %977 = vmatprep.subr.bf16.mxu0 0
    %978 = vmatpush1.bf16.msra.mxu0 %v958
    %979 = vmatprep.subr.bf16.mxu0 0
    %980 = vmatpush1.bf16.msra.mxu0 %v959
    %981 = vmatprep.subr.bf16.mxu0 0
    %982 = vmatpush1.bf16.msra.mxu0 %v960
    %983 = vmatprep.subr.bf16.mxu0 0
    %984 = vmatpush1.bf16.msra.mxu0 %v961
    %985 = vmatprep.subr.bf16.mxu0 0
    %986 = vmatpush1.bf16.msra.mxu0 %v962
    %987 = vmatprep.subr.bf16.mxu0 0
    %988 = vmatpush1.bf16.msra.mxu0 0
    %989 = vmatprep.subr.bf16.mxu0 0
    %990 = vmatpush1.bf16.msra.mxu0 0
    %991 = vmatprep.subr.bf16.mxu0 0
    %992 = vmatpush1.bf16.msra.mxu0 0
    %993 = vmatprep.subr.bf16.mxu0 0
    %994 = vmatpush1.bf16.msra.mxu0 0
    %995 = vmatprep.subr.bf16.mxu0 0
    %996 = vmatpush1.bf16.msra.mxu0 0
    %997 = vmatprep.subr.bf16.mxu0 0
    %998 = vmatpush1.bf16.msra.mxu0 0
    %999 = vmatprep.subr.bf16.mxu0 0
    %1000 = vmatpush1.bf16.msra.mxu0 0
    %1001 = vmatprep.subr.bf16.mxu0 0
    %1002 = vmatpush1.bf16.msra.mxu0 0
    %1003 = vmatprep.mubr.bf16.mxu0 0
    %1004 = vmatmul.mubr.bf16.gmra.mrb[0].mxu0 %v576
    %v1005 = vpop.f32.mrb[0].mxu0
    %v1006 = vadd.f32 0.0, %v1005
    %v1007 = vpop.f32.mrb[0].mxu0
    %v1008 = vpop.f32.mrb[0].mxu0
    %v1009 = vpop.f32.mrb[0].mxu0
    %1010 = vdwg.mxu0
    %v1011 = vadd.f32 %v902, %v1006
    %v1012 = vtanh.pop %v1011
    %v1013 = vpack.c.bf16 %v1012, %v1012
    %v1014 = vld [vmem:[%s7] sm:$0xf]
    %v1015 = vld [vmem:[%s7 + $0x4] sm:$0xf]
    %v1016 = vld [vmem:[%s7 + $0x8] sm:$0xf]
    %v1017 = vld [vmem:[%s7 + $0xc] sm:$0xf]
    %v1018 = vld [vmem:[%s7 + $0x10] sm:$0xf]
    %v1019 = vld [vmem:[%s7 + $0x14] sm:$0xf]
    %v1020 = vld [vmem:[%s7 + $0x18] sm:$0xf]
    %v1021 = vld [vmem:[%s7 + $0x1c] sm:$0xf]
    %v1022 = vld [vmem:[%s7 + $0x20] sm:$0xf]
    %v1023 = vld [vmem:[%s7 + $0x24] sm:$0xf]
    %v1024 = vld [vmem:[%s7 + $0x28] sm:$0xf]
    %v1025 = vld [vmem:[%s7 + $0x2c] sm:$0xf]
    %v1026 = vld [vmem:[%s7 + $0x30] sm:$0xf]
    %v1027 = vld [vmem:[%s7 + $0x34] sm:$0xf]
    %v1028 = vld [vmem:[%s7 + $0x38] sm:$0xf]
    %v1029 = vld [vmem:[%s7 + $0x3c] sm:$0xf]
    %v1030 = vld [vmem:[%s8] sm:$0x1]
    %v1032 = vlaneseq
    %v1033 = vshrl.u32 %v1032, 7
    %v1034 = vsub.s32 0, %v1033
    %v1035 = vrot.slane %v1030, %v1034
    %v1053 = vunpack.c.l.b16 %v1014
    %v1054 = vunpack.c.l.b16 %v1015
    %v1055 = vunpack.c.l.b16 %v1016
    %v1056 = vunpack.c.l.b16 %v1017
    %v1057 = vunpack.c.l.b16 %v1018
    %v1058 = vunpack.c.l.b16 %v1019
    %v1059 = vunpack.c.l.b16 %v1020
    %v1060 = vunpack.c.l.b16 %v1021
    %v1061 = vunpack.c.l.b16 %v1022
    %v1062 = vunpack.c.l.b16 %v1023
    %v1063 = vunpack.c.l.b16 %v1024
    %v1064 = vunpack.c.l.b16 %v1025
    %v1065 = vunpack.c.l.b16 %v1026
    %v1066 = vunpack.c.l.b16 %v1027
    %v1067 = vunpack.c.l.b16 %v1028
    %v1068 = vunpack.c.l.b16 %v1029
    %v1069 = vpack.c.b16 %v1054, %v1053
    %v1070 = vpack.c.b16 %v1056, %v1055
    %v1071 = vpack.c.b16 %v1058, %v1057
    %v1072 = vpack.c.b16 %v1060, %v1059
    %v1073 = vpack.c.b16 %v1062, %v1061
    %v1074 = vpack.c.b16 %v1064, %v1063
    %v1075 = vpack.c.b16 %v1066, %v1065
    %v1076 = vpack.c.b16 %v1068, %v1067
    %1085 = vmatprep.subr.bf16.mxu0 0
    %1086 = vmatpush1.bf16.msra.mxu0 %v1069
    %1087 = vmatprep.subr.bf16.mxu0 0
    %1088 = vmatpush1.bf16.msra.mxu0 %v1070
    %1089 = vmatprep.subr.bf16.mxu0 0
    %1090 = vmatpush1.bf16.msra.mxu0 %v1071
    %1091 = vmatprep.subr.bf16.mxu0 0
    %1092 = vmatpush1.bf16.msra.mxu0 %v1072
    %1093 = vmatprep.subr.bf16.mxu0 0
    %1094 = vmatpush1.bf16.msra.mxu0 %v1073
    %1095 = vmatprep.subr.bf16.mxu0 0
    %1096 = vmatpush1.bf16.msra.mxu0 %v1074
    %1097 = vmatprep.subr.bf16.mxu0 0
    %1098 = vmatpush1.bf16.msra.mxu0 %v1075
    %1099 = vmatprep.subr.bf16.mxu0 0
    %1100 = vmatpush1.bf16.msra.mxu0 %v1076
    %1101 = vmatprep.subr.bf16.mxu0 0
    %1102 = vmatpush1.bf16.msra.mxu0 0
    %1103 = vmatprep.subr.bf16.mxu0 0
    %1104 = vmatpush1.bf16.msra.mxu0 0
    %1105 = vmatprep.subr.bf16.mxu0 0
    %1106 = vmatpush1.bf16.msra.mxu0 0
    %1107 = vmatprep.subr.bf16.mxu0 0
    %1108 = vmatpush1.bf16.msra.mxu0 0
    %1109 = vmatprep.subr.bf16.mxu0 0
    %1110 = vmatpush1.bf16.msra.mxu0 0
    %1111 = vmatprep.subr.bf16.mxu0 0
    %1112 = vmatpush1.bf16.msra.mxu0 0
    %1113 = vmatprep.subr.bf16.mxu0 0
    %1114 = vmatpush1.bf16.msra.mxu0 0
    %1115 = vmatprep.subr.bf16.mxu0 0
    %1116 = vmatpush1.bf16.msra.mxu0 0
    %1117 = vmatprep.mubr.bf16.mxu0 0
    %1118 = vmatmul.mubr.bf16.gmra.mrb[0].mxu0 %v1013
    %v1119 = vpop.f32.mrb[0].mxu0
    %v1120 = vadd.f32 %v1035, %v1119
    %v1121 = vpop.f32.mrb[0].mxu0
    %v1122 = vpop.f32.mrb[0].mxu0
    %v1123 = vpop.f32.mrb[0].mxu0
    %1124 = vdwg.mxu0
    %1125 = vst [vmem:[#allocation10 + $0x8] sm:$0xff] %v1120
    %v1126 = vpack.c.bf16 %v795, %v795
    %v1127 = vld [vmem:[#allocation5] sm:$0xf]
    %v1128 = vld [vmem:[#allocation5 + $0x4] sm:$0xf]
    %v1129 = vld [vmem:[#allocation5 + $0x8] sm:$0xf]
    %v1130 = vld [vmem:[#allocation5 + $0xc] sm:$0xf]
    %v1131 = vld [vmem:[#allocation5 + $0x10] sm:$0xf]
    %v1132 = vld [vmem:[#allocation5 + $0x14] sm:$0xf]
    %v1133 = vld [vmem:[#allocation5 + $0x18] sm:$0xf]
    %v1134 = vld [vmem:[#allocation5 + $0x1c] sm:$0xf]
    %v1135 = vld [vmem:[#allocation5 + $0x20] sm:$0xf]
    %v1136 = vld [vmem:[#allocation5 + $0x24] sm:$0xf]
    %v1137 = vld [vmem:[#allocation5 + $0x28] sm:$0xf]
    %v1138 = vld [vmem:[#allocation5 + $0x2c] sm:$0xf]
    %v1139 = vld [vmem:[#allocation5 + $0x30] sm:$0xf]
    %v1140 = vld [vmem:[#allocation5 + $0x34] sm:$0xf]
    %v1141 = vld [vmem:[#allocation5 + $0x38] sm:$0xf]
    %v1142 = vld [vmem:[#allocation5 + $0x3c] sm:$0xf]
    %v1159 = vunpack.c.l.b16 %v1127
    %v1160 = vunpack.c.l.b16 %v1128
    %v1161 = vunpack.c.l.b16 %v1129
    %v1162 = vunpack.c.l.b16 %v1130
    %v1163 = vunpack.c.l.b16 %v1131
    %v1164 = vunpack.c.l.b16 %v1132
    %v1165 = vunpack.c.l.b16 %v1133
    %v1166 = vunpack.c.l.b16 %v1134
    %v1167 = vunpack.c.l.b16 %v1135
    %v1168 = vunpack.c.l.b16 %v1136
    %v1169 = vunpack.c.l.b16 %v1137
    %v1170 = vunpack.c.l.b16 %v1138
    %v1171 = vunpack.c.l.b16 %v1139
    %v1172 = vunpack.c.l.b16 %v1140
    %v1173 = vunpack.c.l.b16 %v1141
    %v1174 = vunpack.c.l.b16 %v1142
    %v1175 = vpack.c.b16 %v1160, %v1159
    %v1176 = vpack.c.b16 %v1162, %v1161
    %v1177 = vpack.c.b16 %v1164, %v1163
    %v1178 = vpack.c.b16 %v1166, %v1165
    %v1179 = vpack.c.b16 %v1168, %v1167
    %v1180 = vpack.c.b16 %v1170, %v1169
    %v1181 = vpack.c.b16 %v1172, %v1171
    %v1182 = vpack.c.b16 %v1174, %v1173
    %1191 = vmatprep.subr.bf16.mxu0 0
    %1192 = vmatpush1.bf16.msra.mxu0 %v1175
    %1193 = vmatprep.subr.bf16.mxu0 0
    %1194 = vmatpush1.bf16.msra.mxu0 %v1176
    %1195 = vmatprep.subr.bf16.mxu0 0
    %1196 = vmatpush1.bf16.msra.mxu0 %v1177
    %1197 = vmatprep.subr.bf16.mxu0 0
    %1198 = vmatpush1.bf16.msra.mxu0 %v1178
    %1199 = vmatprep.subr.bf16.mxu0 0
    %1200 = vmatpush1.bf16.msra.mxu0 %v1179
    %1201 = vmatprep.subr.bf16.mxu0 0
    %1202 = vmatpush1.bf16.msra.mxu0 %v1180
    %1203 = vmatprep.subr.bf16.mxu0 0
    %1204 = vmatpush1.bf16.msra.mxu0 %v1181
    %1205 = vmatprep.subr.bf16.mxu0 0
    %1206 = vmatpush1.bf16.msra.mxu0 %v1182
    %1207 = vmatprep.subr.bf16.mxu0 0
    %1208 = vmatpush1.bf16.msra.mxu0 0
    %1209 = vmatprep.subr.bf16.mxu0 0
    %1210 = vmatpush1.bf16.msra.mxu0 0
    %1211 = vmatprep.subr.bf16.mxu0 0
    %1212 = vmatpush1.bf16.msra.mxu0 0
    %1213 = vmatprep.subr.bf16.mxu0 0
    %1214 = vmatpush1.bf16.msra.mxu0 0
    %1215 = vmatprep.subr.bf16.mxu0 0
    %1216 = vmatpush1.bf16.msra.mxu0 0
    %1217 = vmatprep.subr.bf16.mxu0 0
    %1218 = vmatpush1.bf16.msra.mxu0 0
    %1219 = vmatprep.subr.bf16.mxu0 0
    %1220 = vmatpush1.bf16.msra.mxu0 0
    %1221 = vmatprep.subr.bf16.mxu0 0
    %1222 = vmatpush1.bf16.msra.mxu0 0
    %1223 = vmatprep.mubr.bf16.mxu0 0
    %1224 = vmatmul.mubr.bf16.gmra.mrb[0].mxu0 %v1126
    %v1225 = vpop.f32.mrb[0].mxu0
    %v1226 = vadd.f32 0.0, %v1225
    %v1227 = vpop.f32.mrb[0].mxu0
    %v1228 = vpop.f32.mrb[0].mxu0
    %v1229 = vpop.f32.mrb[0].mxu0
    %1230 = vdwg.mxu0
    %v1231 = vadd.f32 %v191, %v1226
    %v1232 = vtanh.pop %v1231
    %v1233 = vld [vmem:[#allocation7] sm:$0xf]
    %v1234 = vld [vmem:[#allocation7 + $0x4] sm:$0xf]
    %v1235 = vld [vmem:[#allocation7 + $0x8] sm:$0xf]
    %v1236 = vld [vmem:[#allocation7 + $0xc] sm:$0xf]
    %v1237 = vld [vmem:[#allocation7 + $0x10] sm:$0xf]
    %v1238 = vld [vmem:[#allocation7 + $0x14] sm:$0xf]
    %v1239 = vld [vmem:[#allocation7 + $0x18] sm:$0xf]
    %v1240 = vld [vmem:[#allocation7 + $0x1c] sm:$0xf]
    %v1241 = vld [vmem:[#allocation7 + $0x20] sm:$0xf]
    %v1242 = vld [vmem:[#allocation7 + $0x24] sm:$0xf]
    %v1243 = vld [vmem:[#allocation7 + $0x28] sm:$0xf]
    %v1244 = vld [vmem:[#allocation7 + $0x2c] sm:$0xf]
    %v1245 = vld [vmem:[#allocation7 + $0x30] sm:$0xf]
    %v1246 = vld [vmem:[#allocation7 + $0x34] sm:$0xf]
    %v1247 = vld [vmem:[#allocation7 + $0x38] sm:$0xf]
    %v1248 = vld [vmem:[#allocation7 + $0x3c] sm:$0xf]
    %v1249 = vld [vmem:[%s6] sm:$0x1]
    %v1251 = vlaneseq
    %v1252 = vshrl.u32 %v1251, 7
    %v1253 = vsub.s32 0, %v1252
    %v1254 = vrot.slane %v1249, %v1253
    %v1272 = vunpack.c.l.b16 %v1233
    %v1273 = vunpack.c.l.b16 %v1234
    %v1274 = vunpack.c.l.b16 %v1235
    %v1275 = vunpack.c.l.b16 %v1236
    %v1276 = vunpack.c.l.b16 %v1237
    %v1277 = vunpack.c.l.b16 %v1238
    %v1278 = vunpack.c.l.b16 %v1239
    %v1279 = vunpack.c.l.b16 %v1240
    %v1280 = vunpack.c.l.b16 %v1241
    %v1281 = vunpack.c.l.b16 %v1242
    %v1282 = vunpack.c.l.b16 %v1243
    %v1283 = vunpack.c.l.b16 %v1244
    %v1284 = vunpack.c.l.b16 %v1245
    %v1285 = vunpack.c.l.b16 %v1246
    %v1286 = vunpack.c.l.b16 %v1247
    %v1287 = vunpack.c.l.b16 %v1248
    %v1288 = vpack.c.b16 %v1273, %v1272
    %v1289 = vpack.c.b16 %v1275, %v1274
    %v1290 = vpack.c.b16 %v1277, %v1276
    %v1291 = vpack.c.b16 %v1279, %v1278
    %v1292 = vpack.c.b16 %v1281, %v1280
    %v1293 = vpack.c.b16 %v1283, %v1282
    %v1294 = vpack.c.b16 %v1285, %v1284
    %v1295 = vpack.c.b16 %v1287, %v1286
    %1304 = vmatprep.subr.bf16.mxu0 0
    %1305 = vmatpush1.bf16.msra.mxu0 %v1288
    %1306 = vmatprep.subr.bf16.mxu0 0
    %1307 = vmatpush1.bf16.msra.mxu0 %v1289
    %1308 = vmatprep.subr.bf16.mxu0 0
    %1309 = vmatpush1.bf16.msra.mxu0 %v1290
    %1310 = vmatprep.subr.bf16.mxu0 0
    %1311 = vmatpush1.bf16.msra.mxu0 %v1291
    %1312 = vmatprep.subr.bf16.mxu0 0
    %1313 = vmatpush1.bf16.msra.mxu0 %v1292
    %1314 = vmatprep.subr.bf16.mxu0 0
    %1315 = vmatpush1.bf16.msra.mxu0 %v1293
    %1316 = vmatprep.subr.bf16.mxu0 0
    %1317 = vmatpush1.bf16.msra.mxu0 %v1294
    %1318 = vmatprep.subr.bf16.mxu0 0
    %1319 = vmatpush1.bf16.msra.mxu0 %v1295
    %1320 = vmatprep.subr.bf16.mxu0 0
    %1321 = vmatpush1.bf16.msra.mxu0 0
    %1322 = vmatprep.subr.bf16.mxu0 0
    %1323 = vmatpush1.bf16.msra.mxu0 0
    %1324 = vmatprep.subr.bf16.mxu0 0
    %1325 = vmatpush1.bf16.msra.mxu0 0
    %1326 = vmatprep.subr.bf16.mxu0 0
    %1327 = vmatpush1.bf16.msra.mxu0 0
    %1328 = vmatprep.subr.bf16.mxu0 0
    %1329 = vmatpush1.bf16.msra.mxu0 0
    %1330 = vmatprep.subr.bf16.mxu0 0
    %1331 = vmatpush1.bf16.msra.mxu0 0
    %1332 = vmatprep.subr.bf16.mxu0 0
    %1333 = vmatpush1.bf16.msra.mxu0 0
    %1334 = vmatprep.subr.bf16.mxu0 0
    %1335 = vmatpush1.bf16.msra.mxu0 0
    %1336 = vmatprep.mubr.bf16.mxu0 0
    %1337 = vmatmul.mubr.bf16.gmra.mrb[0].mxu0 %v1126
    %v1338 = vpop.f32.mrb[0].mxu0
    %v1339 = vadd.f32 %v1254, %v1338
    %v1340 = vpop.f32.mrb[0].mxu0
    %v1341 = vpop.f32.mrb[0].mxu0
    %v1342 = vpop.f32.mrb[0].mxu0
    %1343 = vdwg.mxu0
    %v1344 = vld [vmem:[#allocation8] sm:$0xf]
    %v1345 = vld [vmem:[#allocation8 + $0x4] sm:$0xf]
    %v1346 = vld [vmem:[#allocation8 + $0x8] sm:$0xf]
    %v1347 = vld [vmem:[#allocation8 + $0xc] sm:$0xf]
    %v1348 = vld [vmem:[#allocation8 + $0x10] sm:$0xf]
    %v1349 = vld [vmem:[#allocation8 + $0x14] sm:$0xf]
    %v1350 = vld [vmem:[#allocation8 + $0x18] sm:$0xf]
    %v1351 = vld [vmem:[#allocation8 + $0x1c] sm:$0xf]
    %v1352 = vld [vmem:[#allocation8 + $0x20] sm:$0xf]
    %v1353 = vld [vmem:[#allocation8 + $0x24] sm:$0xf]
    %v1354 = vld [vmem:[#allocation8 + $0x28] sm:$0xf]
    %v1355 = vld [vmem:[#allocation8 + $0x2c] sm:$0xf]
    %v1356 = vld [vmem:[#allocation8 + $0x30] sm:$0xf]
    %v1357 = vld [vmem:[#allocation8 + $0x34] sm:$0xf]
    %v1358 = vld [vmem:[#allocation8 + $0x38] sm:$0xf]
    %v1359 = vld [vmem:[#allocation8 + $0x3c] sm:$0xf]
    %v1376 = vunpack.c.l.b16 %v1344
    %v1377 = vunpack.c.l.b16 %v1345
    %v1378 = vunpack.c.l.b16 %v1346
    %v1379 = vunpack.c.l.b16 %v1347
    %v1380 = vunpack.c.l.b16 %v1348
    %v1381 = vunpack.c.l.b16 %v1349
    %v1382 = vunpack.c.l.b16 %v1350
    %v1383 = vunpack.c.l.b16 %v1351
    %v1384 = vunpack.c.l.b16 %v1352
    %v1385 = vunpack.c.l.b16 %v1353
    %v1386 = vunpack.c.l.b16 %v1354
    %v1387 = vunpack.c.l.b16 %v1355
    %v1388 = vunpack.c.l.b16 %v1356
    %v1389 = vunpack.c.l.b16 %v1357
    %v1390 = vunpack.c.l.b16 %v1358
    %v1391 = vunpack.c.l.b16 %v1359
    %v1392 = vpack.c.b16 %v1377, %v1376
    %v1393 = vpack.c.b16 %v1379, %v1378
    %v1394 = vpack.c.b16 %v1381, %v1380
    %v1395 = vpack.c.b16 %v1383, %v1382
    %v1396 = vpack.c.b16 %v1385, %v1384
    %v1397 = vpack.c.b16 %v1387, %v1386
    %v1398 = vpack.c.b16 %v1389, %v1388
    %v1399 = vpack.c.b16 %v1391, %v1390
    %1408 = vmatprep.subr.bf16.mxu0 0
    %1409 = vmatpush1.bf16.msra.mxu0 %v1392
    %1410 = vmatprep.subr.bf16.mxu0 0
    %1411 = vmatpush1.bf16.msra.mxu0 %v1393
    %1412 = vmatprep.subr.bf16.mxu0 0
    %1413 = vmatpush1.bf16.msra.mxu0 %v1394
    %1414 = vmatprep.subr.bf16.mxu0 0
    %1415 = vmatpush1.bf16.msra.mxu0 %v1395
    %1416 = vmatprep.subr.bf16.mxu0 0
    %1417 = vmatpush1.bf16.msra.mxu0 %v1396
    %1418 = vmatprep.subr.bf16.mxu0 0
    %1419 = vmatpush1.bf16.msra.mxu0 %v1397
    %1420 = vmatprep.subr.bf16.mxu0 0
    %1421 = vmatpush1.bf16.msra.mxu0 %v1398
    %1422 = vmatprep.subr.bf16.mxu0 0
    %1423 = vmatpush1.bf16.msra.mxu0 %v1399
    %1424 = vmatprep.subr.bf16.mxu0 0
    %1425 = vmatpush1.bf16.msra.mxu0 0
    %1426 = vmatprep.subr.bf16.mxu0 0
    %1427 = vmatpush1.bf16.msra.mxu0 0
    %1428 = vmatprep.subr.bf16.mxu0 0
    %1429 = vmatpush1.bf16.msra.mxu0 0
    %1430 = vmatprep.subr.bf16.mxu0 0
    %1431 = vmatpush1.bf16.msra.mxu0 0
    %1432 = vmatprep.subr.bf16.mxu0 0
    %1433 = vmatpush1.bf16.msra.mxu0 0
    %1434 = vmatprep.subr.bf16.mxu0 0
    %1435 = vmatpush1.bf16.msra.mxu0 0
    %1436 = vmatprep.subr.bf16.mxu0 0
    %1437 = vmatpush1.bf16.msra.mxu0 0
    %1438 = vmatprep.subr.bf16.mxu0 0
    %1439 = vmatpush1.bf16.msra.mxu0 0
    %1440 = vmatprep.mubr.bf16.mxu0 0
    %1441 = vmatmul.mubr.bf16.gmra.mrb[0].mxu0 %v1013
    %v1442 = vpop.f32.mrb[0].mxu0
    %v1443 = vadd.f32 0.0, %v1442
    %v1444 = vpop.f32.mrb[0].mxu0
    %v1445 = vpop.f32.mrb[0].mxu0
    %v1446 = vpop.f32.mrb[0].mxu0
    %1447 = vdwg.mxu0
    %v1448 = vadd.f32 %v1339, %v1443
    %v1449 = vtanh.pop %v1448
    %v1450 = vpack.c.bf16 %v1449, %v1449
    %v1451 = vld [vmem:[%s7] sm:$0xf]
    %v1452 = vld [vmem:[%s7 + $0x4] sm:$0xf]
    %v1453 = vld [vmem:[%s7 + $0x8] sm:$0xf]
    %v1454 = vld [vmem:[%s7 + $0xc] sm:$0xf]
    %v1455 = vld [vmem:[%s7 + $0x10] sm:$0xf]
    %v1456 = vld [vmem:[%s7 + $0x14] sm:$0xf]
    %v1457 = vld [vmem:[%s7 + $0x18] sm:$0xf]
    %v1458 = vld [vmem:[%s7 + $0x1c] sm:$0xf]
    %v1459 = vld [vmem:[%s7 + $0x20] sm:$0xf]
    %v1460 = vld [vmem:[%s7 + $0x24] sm:$0xf]
    %v1461 = vld [vmem:[%s7 + $0x28] sm:$0xf]
    %v1462 = vld [vmem:[%s7 + $0x2c] sm:$0xf]
    %v1463 = vld [vmem:[%s7 + $0x30] sm:$0xf]
    %v1464 = vld [vmem:[%s7 + $0x34] sm:$0xf]
    %v1465 = vld [vmem:[%s7 + $0x38] sm:$0xf]
    %v1466 = vld [vmem:[%s7 + $0x3c] sm:$0xf]
    %v1467 = vld [vmem:[%s8] sm:$0x1]
    %v1469 = vlaneseq
    %v1470 = vshrl.u32 %v1469, 7
    %v1471 = vsub.s32 0, %v1470
    %v1472 = vrot.slane %v1467, %v1471
    %v1490 = vunpack.c.l.b16 %v1451
    %v1491 = vunpack.c.l.b16 %v1452
    %v1492 = vunpack.c.l.b16 %v1453
    %v1493 = vunpack.c.l.b16 %v1454
    %v1494 = vunpack.c.l.b16 %v1455
    %v1495 = vunpack.c.l.b16 %v1456
    %v1496 = vunpack.c.l.b16 %v1457
    %v1497 = vunpack.c.l.b16 %v1458
    %v1498 = vunpack.c.l.b16 %v1459
    %v1499 = vunpack.c.l.b16 %v1460
    %v1500 = vunpack.c.l.b16 %v1461
    %v1501 = vunpack.c.l.b16 %v1462
    %v1502 = vunpack.c.l.b16 %v1463
    %v1503 = vunpack.c.l.b16 %v1464
    %v1504 = vunpack.c.l.b16 %v1465
    %v1505 = vunpack.c.l.b16 %v1466
    %v1506 = vpack.c.b16 %v1491, %v1490
    %v1507 = vpack.c.b16 %v1493, %v1492
    %v1508 = vpack.c.b16 %v1495, %v1494
    %v1509 = vpack.c.b16 %v1497, %v1496
    %v1510 = vpack.c.b16 %v1499, %v1498
    %v1511 = vpack.c.b16 %v1501, %v1500
    %v1512 = vpack.c.b16 %v1503, %v1502
    %v1513 = vpack.c.b16 %v1505, %v1504
    %1522 = vmatprep.subr.bf16.mxu0 0
    %1523 = vmatpush1.bf16.msra.mxu0 %v1506
    %1524 = vmatprep.subr.bf16.mxu0 0
    %1525 = vmatpush1.bf16.msra.mxu0 %v1507
    %1526 = vmatprep.subr.bf16.mxu0 0
    %1527 = vmatpush1.bf16.msra.mxu0 %v1508
    %1528 = vmatprep.subr.bf16.mxu0 0
    %1529 = vmatpush1.bf16.msra.mxu0 %v1509
    %1530 = vmatprep.subr.bf16.mxu0 0
    %1531 = vmatpush1.bf16.msra.mxu0 %v1510
    %1532 = vmatprep.subr.bf16.mxu0 0
    %1533 = vmatpush1.bf16.msra.mxu0 %v1511
    %1534 = vmatprep.subr.bf16.mxu0 0
    %1535 = vmatpush1.bf16.msra.mxu0 %v1512
    %1536 = vmatprep.subr.bf16.mxu0 0
    %1537 = vmatpush1.bf16.msra.mxu0 %v1513
    %1538 = vmatprep.subr.bf16.mxu0 0
    %1539 = vmatpush1.bf16.msra.mxu0 0
    %1540 = vmatprep.subr.bf16.mxu0 0
    %1541 = vmatpush1.bf16.msra.mxu0 0
    %1542 = vmatprep.subr.bf16.mxu0 0
    %1543 = vmatpush1.bf16.msra.mxu0 0
    %1544 = vmatprep.subr.bf16.mxu0 0
    %1545 = vmatpush1.bf16.msra.mxu0 0
    %1546 = vmatprep.subr.bf16.mxu0 0
    %1547 = vmatpush1.bf16.msra.mxu0 0
    %1548 = vmatprep.subr.bf16.mxu0 0
    %1549 = vmatpush1.bf16.msra.mxu0 0
    %1550 = vmatprep.subr.bf16.mxu0 0
    %1551 = vmatpush1.bf16.msra.mxu0 0
    %1552 = vmatprep.subr.bf16.mxu0 0
    %1553 = vmatpush1.bf16.msra.mxu0 0
    %1554 = vmatprep.mubr.bf16.mxu0 0
    %1555 = vmatmul.mubr.bf16.gmra.mrb[0].mxu0 %v1450
    %v1556 = vpop.f32.mrb[0].mxu0
    %v1557 = vadd.f32 %v1472, %v1556
    %v1558 = vpop.f32.mrb[0].mxu0
    %v1559 = vpop.f32.mrb[0].mxu0
    %v1560 = vpop.f32.mrb[0].mxu0
    %1561 = vdwg.mxu0
    %1562 = vst [vmem:[#allocation10 + $0x10] sm:$0xff] %v1557
    %v1563 = vpack.c.bf16 %v1232, %v1232
    %v1564 = vld [vmem:[#allocation5] sm:$0xf]
    %v1565 = vld [vmem:[#allocation5 + $0x4] sm:$0xf]
    %v1566 = vld [vmem:[#allocation5 + $0x8] sm:$0xf]
    %v1567 = vld [vmem:[#allocation5 + $0xc] sm:$0xf]
    %v1568 = vld [vmem:[#allocation5 + $0x10] sm:$0xf]
    %v1569 = vld [vmem:[#allocation5 + $0x14] sm:$0xf]
    %v1570 = vld [vmem:[#allocation5 + $0x18] sm:$0xf]
    %v1571 = vld [vmem:[#allocation5 + $0x1c] sm:$0xf]
    %v1572 = vld [vmem:[#allocation5 + $0x20] sm:$0xf]
    %v1573 = vld [vmem:[#allocation5 + $0x24] sm:$0xf]
    %v1574 = vld [vmem:[#allocation5 + $0x28] sm:$0xf]
    %v1575 = vld [vmem:[#allocation5 + $0x2c] sm:$0xf]
    %v1576 = vld [vmem:[#allocation5 + $0x30] sm:$0xf]
    %v1577 = vld [vmem:[#allocation5 + $0x34] sm:$0xf]
    %v1578 = vld [vmem:[#allocation5 + $0x38] sm:$0xf]
    %v1579 = vld [vmem:[#allocation5 + $0x3c] sm:$0xf]
    %v1596 = vunpack.c.l.b16 %v1564
    %v1597 = vunpack.c.l.b16 %v1565
    %v1598 = vunpack.c.l.b16 %v1566
    %v1599 = vunpack.c.l.b16 %v1567
    %v1600 = vunpack.c.l.b16 %v1568
    %v1601 = vunpack.c.l.b16 %v1569
    %v1602 = vunpack.c.l.b16 %v1570
    %v1603 = vunpack.c.l.b16 %v1571
    %v1604 = vunpack.c.l.b16 %v1572
    %v1605 = vunpack.c.l.b16 %v1573
    %v1606 = vunpack.c.l.b16 %v1574
    %v1607 = vunpack.c.l.b16 %v1575
    %v1608 = vunpack.c.l.b16 %v1576
    %v1609 = vunpack.c.l.b16 %v1577
    %v1610 = vunpack.c.l.b16 %v1578
    %v1611 = vunpack.c.l.b16 %v1579
    %v1612 = vpack.c.b16 %v1597, %v1596
    %v1613 = vpack.c.b16 %v1599, %v1598
    %v1614 = vpack.c.b16 %v1601, %v1600
    %v1615 = vpack.c.b16 %v1603, %v1602
    %v1616 = vpack.c.b16 %v1605, %v1604
    %v1617 = vpack.c.b16 %v1607, %v1606
    %v1618 = vpack.c.b16 %v1609, %v1608
    %v1619 = vpack.c.b16 %v1611, %v1610
    %1628 = vmatprep.subr.bf16.mxu0 0
    %1629 = vmatpush1.bf16.msra.mxu0 %v1612
    %1630 = vmatprep.subr.bf16.mxu0 0
    %1631 = vmatpush1.bf16.msra.mxu0 %v1613
    %1632 = vmatprep.subr.bf16.mxu0 0
    %1633 = vmatpush1.bf16.msra.mxu0 %v1614
    %1634 = vmatprep.subr.bf16.mxu0 0
    %1635 = vmatpush1.bf16.msra.mxu0 %v1615
    %1636 = vmatprep.subr.bf16.mxu0 0
    %1637 = vmatpush1.bf16.msra.mxu0 %v1616
    %1638 = vmatprep.subr.bf16.mxu0 0
    %1639 = vmatpush1.bf16.msra.mxu0 %v1617
    %1640 = vmatprep.subr.bf16.mxu0 0
    %1641 = vmatpush1.bf16.msra.mxu0 %v1618
    %1642 = vmatprep.subr.bf16.mxu0 0
    %1643 = vmatpush1.bf16.msra.mxu0 %v1619
    %1644 = vmatprep.subr.bf16.mxu0 0
    %1645 = vmatpush1.bf16.msra.mxu0 0
    %1646 = vmatprep.subr.bf16.mxu0 0
    %1647 = vmatpush1.bf16.msra.mxu0 0
    %1648 = vmatprep.subr.bf16.mxu0 0
    %1649 = vmatpush1.bf16.msra.mxu0 0
    %1650 = vmatprep.subr.bf16.mxu0 0
    %1651 = vmatpush1.bf16.msra.mxu0 0
    %1652 = vmatprep.subr.bf16.mxu0 0
    %1653 = vmatpush1.bf16.msra.mxu0 0
    %1654 = vmatprep.subr.bf16.mxu0 0
    %1655 = vmatpush1.bf16.msra.mxu0 0
    %1656 = vmatprep.subr.bf16.mxu0 0
    %1657 = vmatpush1.bf16.msra.mxu0 0
    %1658 = vmatprep.subr.bf16.mxu0 0
    %1659 = vmatpush1.bf16.msra.mxu0 0
    %1660 = vmatprep.mubr.bf16.mxu0 0
    %1661 = vmatmul.mubr.bf16.gmra.mrb[0].mxu0 %v1563
    %v1662 = vpop.f32.mrb[0].mxu0
    %v1663 = vadd.f32 0.0, %v1662
    %v1664 = vpop.f32.mrb[0].mxu0
    %v1665 = vpop.f32.mrb[0].mxu0
    %v1666 = vpop.f32.mrb[0].mxu0
    %1667 = vdwg.mxu0
    %v1668 = vadd.f32 %v196, %v1663
    %v1669 = vtanh.pop %v1668
    %v1670 = vld [vmem:[#allocation7] sm:$0xf]
    %v1671 = vld [vmem:[#allocation7 + $0x4] sm:$0xf]
    %v1672 = vld [vmem:[#allocation7 + $0x8] sm:$0xf]
    %v1673 = vld [vmem:[#allocation7 + $0xc] sm:$0xf]
    %v1674 = vld [vmem:[#allocation7 + $0x10] sm:$0xf]
    %v1675 = vld [vmem:[#allocation7 + $0x14] sm:$0xf]
    %v1676 = vld [vmem:[#allocation7 + $0x18] sm:$0xf]
    %v1677 = vld [vmem:[#allocation7 + $0x1c] sm:$0xf]
    %v1678 = vld [vmem:[#allocation7 + $0x20] sm:$0xf]
    %v1679 = vld [vmem:[#allocation7 + $0x24] sm:$0xf]
    %v1680 = vld [vmem:[#allocation7 + $0x28] sm:$0xf]
    %v1681 = vld [vmem:[#allocation7 + $0x2c] sm:$0xf]
    %v1682 = vld [vmem:[#allocation7 + $0x30] sm:$0xf]
    %v1683 = vld [vmem:[#allocation7 + $0x34] sm:$0xf]
    %v1684 = vld [vmem:[#allocation7 + $0x38] sm:$0xf]
    %v1685 = vld [vmem:[#allocation7 + $0x3c] sm:$0xf]
    %v1686 = vld [vmem:[%s6] sm:$0x1]
    %v1688 = vlaneseq
    %v1689 = vshrl.u32 %v1688, 7
    %v1690 = vsub.s32 0, %v1689
    %v1691 = vrot.slane %v1686, %v1690
    %v1709 = vunpack.c.l.b16 %v1670
    %v1710 = vunpack.c.l.b16 %v1671
    %v1711 = vunpack.c.l.b16 %v1672
    %v1712 = vunpack.c.l.b16 %v1673
    %v1713 = vunpack.c.l.b16 %v1674
    %v1714 = vunpack.c.l.b16 %v1675
    %v1715 = vunpack.c.l.b16 %v1676
    %v1716 = vunpack.c.l.b16 %v1677
    %v1717 = vunpack.c.l.b16 %v1678
    %v1718 = vunpack.c.l.b16 %v1679
    %v1719 = vunpack.c.l.b16 %v1680
    %v1720 = vunpack.c.l.b16 %v1681
    %v1721 = vunpack.c.l.b16 %v1682
    %v1722 = vunpack.c.l.b16 %v1683
    %v1723 = vunpack.c.l.b16 %v1684
    %v1724 = vunpack.c.l.b16 %v1685
    %v1725 = vpack.c.b16 %v1710, %v1709
    %v1726 = vpack.c.b16 %v1712, %v1711
    %v1727 = vpack.c.b16 %v1714, %v1713
    %v1728 = vpack.c.b16 %v1716, %v1715
    %v1729 = vpack.c.b16 %v1718, %v1717
    %v1730 = vpack.c.b16 %v1720, %v1719
    %v1731 = vpack.c.b16 %v1722, %v1721
    %v1732 = vpack.c.b16 %v1724, %v1723
    %1741 = vmatprep.subr.bf16.mxu0 0
    %1742 = vmatpush1.bf16.msra.mxu0 %v1725
    %1743 = vmatprep.subr.bf16.mxu0 0
    %1744 = vmatpush1.bf16.msra.mxu0 %v1726
    %1745 = vmatprep.subr.bf16.mxu0 0
    %1746 = vmatpush1.bf16.msra.mxu0 %v1727
    %1747 = vmatprep.subr.bf16.mxu0 0
    %1748 = vmatpush1.bf16.msra.mxu0 %v1728
    %1749 = vmatprep.subr.bf16.mxu0 0
    %1750 = vmatpush1.bf16.msra.mxu0 %v1729
    %1751 = vmatprep.subr.bf16.mxu0 0
    %1752 = vmatpush1.bf16.msra.mxu0 %v1730
    %1753 = vmatprep.subr.bf16.mxu0 0
    %1754 = vmatpush1.bf16.msra.mxu0 %v1731
    %1755 = vmatprep.subr.bf16.mxu0 0
    %1756 = vmatpush1.bf16.msra.mxu0 %v1732
    %1757 = vmatprep.subr.bf16.mxu0 0
    %1758 = vmatpush1.bf16.msra.mxu0 0
    %1759 = vmatprep.subr.bf16.mxu0 0
    %1760 = vmatpush1.bf16.msra.mxu0 0
    %1761 = vmatprep.subr.bf16.mxu0 0
    %1762 = vmatpush1.bf16.msra.mxu0 0
    %1763 = vmatprep.subr.bf16.mxu0 0
    %1764 = vmatpush1.bf16.msra.mxu0 0
    %1765 = vmatprep.subr.bf16.mxu0 0
    %1766 = vmatpush1.bf16.msra.mxu0 0
    %1767 = vmatprep.subr.bf16.mxu0 0
    %1768 = vmatpush1.bf16.msra.mxu0 0
    %1769 = vmatprep.subr.bf16.mxu0 0
    %1770 = vmatpush1.bf16.msra.mxu0 0
    %1771 = vmatprep.subr.bf16.mxu0 0
    %1772 = vmatpush1.bf16.msra.mxu0 0
    %1773 = vmatprep.mubr.bf16.mxu0 0
    %1774 = vmatmul.mubr.bf16.gmra.mrb[0].mxu0 %v1563
    %v1775 = vpop.f32.mrb[0].mxu0
    %v1776 = vadd.f32 %v1691, %v1775
    %v1777 = vpop.f32.mrb[0].mxu0
    %v1778 = vpop.f32.mrb[0].mxu0
    %v1779 = vpop.f32.mrb[0].mxu0
    %1780 = vdwg.mxu0
    %v1781 = vld [vmem:[#allocation8] sm:$0xf]
    %v1782 = vld [vmem:[#allocation8 + $0x4] sm:$0xf]
    %v1783 = vld [vmem:[#allocation8 + $0x8] sm:$0xf]
    %v1784 = vld [vmem:[#allocation8 + $0xc] sm:$0xf]
    %v1785 = vld [vmem:[#allocation8 + $0x10] sm:$0xf]
    %v1786 = vld [vmem:[#allocation8 + $0x14] sm:$0xf]
    %v1787 = vld [vmem:[#allocation8 + $0x18] sm:$0xf]
    %v1788 = vld [vmem:[#allocation8 + $0x1c] sm:$0xf]
    %v1789 = vld [vmem:[#allocation8 + $0x20] sm:$0xf]
    %v1790 = vld [vmem:[#allocation8 + $0x24] sm:$0xf]
    %v1791 = vld [vmem:[#allocation8 + $0x28] sm:$0xf]
    %v1792 = vld [vmem:[#allocation8 + $0x2c] sm:$0xf]
    %v1793 = vld [vmem:[#allocation8 + $0x30] sm:$0xf]
    %v1794 = vld [vmem:[#allocation8 + $0x34] sm:$0xf]
    %v1795 = vld [vmem:[#allocation8 + $0x38] sm:$0xf]
    %v1796 = vld [vmem:[#allocation8 + $0x3c] sm:$0xf]
    %v1813 = vunpack.c.l.b16 %v1781
    %v1814 = vunpack.c.l.b16 %v1782
    %v1815 = vunpack.c.l.b16 %v1783
    %v1816 = vunpack.c.l.b16 %v1784
    %v1817 = vunpack.c.l.b16 %v1785
    %v1818 = vunpack.c.l.b16 %v1786
    %v1819 = vunpack.c.l.b16 %v1787
    %v1820 = vunpack.c.l.b16 %v1788
    %v1821 = vunpack.c.l.b16 %v1789
    %v1822 = vunpack.c.l.b16 %v1790
    %v1823 = vunpack.c.l.b16 %v1791
    %v1824 = vunpack.c.l.b16 %v1792
    %v1825 = vunpack.c.l.b16 %v1793
    %v1826 = vunpack.c.l.b16 %v1794
    %v1827 = vunpack.c.l.b16 %v1795
    %v1828 = vunpack.c.l.b16 %v1796
    %v1829 = vpack.c.b16 %v1814, %v1813
    %v1830 = vpack.c.b16 %v1816, %v1815
    %v1831 = vpack.c.b16 %v1818, %v1817
    %v1832 = vpack.c.b16 %v1820, %v1819
    %v1833 = vpack.c.b16 %v1822, %v1821
    %v1834 = vpack.c.b16 %v1824, %v1823
    %v1835 = vpack.c.b16 %v1826, %v1825
    %v1836 = vpack.c.b16 %v1828, %v1827
    %1845 = vmatprep.subr.bf16.mxu0 0
    %1846 = vmatpush1.bf16.msra.mxu0 %v1829
    %1847 = vmatprep.subr.bf16.mxu0 0
    %1848 = vmatpush1.bf16.msra.mxu0 %v1830
    %1849 = vmatprep.subr.bf16.mxu0 0
    %1850 = vmatpush1.bf16.msra.mxu0 %v1831
    %1851 = vmatprep.subr.bf16.mxu0 0
    %1852 = vmatpush1.bf16.msra.mxu0 %v1832
    %1853 = vmatprep.subr.bf16.mxu0 0
    %1854 = vmatpush1.bf16.msra.mxu0 %v1833
    %1855 = vmatprep.subr.bf16.mxu0 0
    %1856 = vmatpush1.bf16.msra.mxu0 %v1834
    %1857 = vmatprep.subr.bf16.mxu0 0
    %1858 = vmatpush1.bf16.msra.mxu0 %v1835
    %1859 = vmatprep.subr.bf16.mxu0 0
    %1860 = vmatpush1.bf16.msra.mxu0 %v1836
    %1861 = vmatprep.subr.bf16.mxu0 0
    %1862 = vmatpush1.bf16.msra.mxu0 0
    %1863 = vmatprep.subr.bf16.mxu0 0
    %1864 = vmatpush1.bf16.msra.mxu0 0
    %1865 = vmatprep.subr.bf16.mxu0 0
    %1866 = vmatpush1.bf16.msra.mxu0 0
    %1867 = vmatprep.subr.bf16.mxu0 0
    %1868 = vmatpush1.bf16.msra.mxu0 0
    %1869 = vmatprep.subr.bf16.mxu0 0
    %1870 = vmatpush1.bf16.msra.mxu0 0
    %1871 = vmatprep.subr.bf16.mxu0 0
    %1872 = vmatpush1.bf16.msra.mxu0 0
    %1873 = vmatprep.subr.bf16.mxu0 0
    %1874 = vmatpush1.bf16.msra.mxu0 0
    %1875 = vmatprep.subr.bf16.mxu0 0
    %1876 = vmatpush1.bf16.msra.mxu0 0
    %1877 = vmatprep.mubr.bf16.mxu0 0
    %1878 = vmatmul.mubr.bf16.gmra.mrb[0].mxu0 %v1450
    %v1879 = vpop.f32.mrb[0].mxu0
    %v1880 = vadd.f32 0.0, %v1879
    %v1881 = vpop.f32.mrb[0].mxu0
    %v1882 = vpop.f32.mrb[0].mxu0
    %v1883 = vpop.f32.mrb[0].mxu0
    %1884 = vdwg.mxu0
    %v1885 = vadd.f32 %v1776, %v1880
    %v1886 = vtanh.pop %v1885
    %v1887 = vpack.c.bf16 %v1886, %v1886
    %v1888 = vld [vmem:[%s7] sm:$0xf]
    %v1889 = vld [vmem:[%s7 + $0x4] sm:$0xf]
    %v1890 = vld [vmem:[%s7 + $0x8] sm:$0xf]
    %v1891 = vld [vmem:[%s7 + $0xc] sm:$0xf]
    %v1892 = vld [vmem:[%s7 + $0x10] sm:$0xf]
    %v1893 = vld [vmem:[%s7 + $0x14] sm:$0xf]
    %v1894 = vld [vmem:[%s7 + $0x18] sm:$0xf]
    %v1895 = vld [vmem:[%s7 + $0x1c] sm:$0xf]
    %v1896 = vld [vmem:[%s7 + $0x20] sm:$0xf]
    %v1897 = vld [vmem:[%s7 + $0x24] sm:$0xf]
    %v1898 = vld [vmem:[%s7 + $0x28] sm:$0xf]
    %v1899 = vld [vmem:[%s7 + $0x2c] sm:$0xf]
    %v1900 = vld [vmem:[%s7 + $0x30] sm:$0xf]
    %v1901 = vld [vmem:[%s7 + $0x34] sm:$0xf]
    %v1902 = vld [vmem:[%s7 + $0x38] sm:$0xf]
    %v1903 = vld [vmem:[%s7 + $0x3c] sm:$0xf]
    %v1904 = vld [vmem:[%s8] sm:$0x1]
    %v1906 = vlaneseq
    %v1907 = vshrl.u32 %v1906, 7
    %v1908 = vsub.s32 0, %v1907
    %v1909 = vrot.slane %v1904, %v1908
    %v1927 = vunpack.c.l.b16 %v1888
    %v1928 = vunpack.c.l.b16 %v1889
    %v1929 = vunpack.c.l.b16 %v1890
    %v1930 = vunpack.c.l.b16 %v1891
    %v1931 = vunpack.c.l.b16 %v1892
    %v1932 = vunpack.c.l.b16 %v1893
    %v1933 = vunpack.c.l.b16 %v1894
    %v1934 = vunpack.c.l.b16 %v1895
    %v1935 = vunpack.c.l.b16 %v1896
    %v1936 = vunpack.c.l.b16 %v1897
    %v1937 = vunpack.c.l.b16 %v1898
    %v1938 = vunpack.c.l.b16 %v1899
    %v1939 = vunpack.c.l.b16 %v1900
    %v1940 = vunpack.c.l.b16 %v1901
    %v1941 = vunpack.c.l.b16 %v1902
    %v1942 = vunpack.c.l.b16 %v1903
    %v1943 = vpack.c.b16 %v1928, %v1927
    %v1944 = vpack.c.b16 %v1930, %v1929
    %v1945 = vpack.c.b16 %v1932, %v1931
    %v1946 = vpack.c.b16 %v1934, %v1933
    %v1947 = vpack.c.b16 %v1936, %v1935
    %v1948 = vpack.c.b16 %v1938, %v1937
    %v1949 = vpack.c.b16 %v1940, %v1939
    %v1950 = vpack.c.b16 %v1942, %v1941
    %1959 = vmatprep.subr.bf16.mxu0 0
    %1960 = vmatpush1.bf16.msra.mxu0 %v1943
    %1961 = vmatprep.subr.bf16.mxu0 0
    %1962 = vmatpush1.bf16.msra.mxu0 %v1944
    %1963 = vmatprep.subr.bf16.mxu0 0
    %1964 = vmatpush1.bf16.msra.mxu0 %v1945
    %1965 = vmatprep.subr.bf16.mxu0 0
    %1966 = vmatpush1.bf16.msra.mxu0 %v1946
    %1967 = vmatprep.subr.bf16.mxu0 0
    %1968 = vmatpush1.bf16.msra.mxu0 %v1947
    %1969 = vmatprep.subr.bf16.mxu0 0
    %1970 = vmatpush1.bf16.msra.mxu0 %v1948
    %1971 = vmatprep.subr.bf16.mxu0 0
    %1972 = vmatpush1.bf16.msra.mxu0 %v1949
    %1973 = vmatprep.subr.bf16.mxu0 0
    %1974 = vmatpush1.bf16.msra.mxu0 %v1950
    %1975 = vmatprep.subr.bf16.mxu0 0
    %1976 = vmatpush1.bf16.msra.mxu0 0
    %1977 = vmatprep.subr.bf16.mxu0 0
    %1978 = vmatpush1.bf16.msra.mxu0 0
    %1979 = vmatprep.subr.bf16.mxu0 0
    %1980 = vmatpush1.bf16.msra.mxu0 0
    %1981 = vmatprep.subr.bf16.mxu0 0
    %1982 = vmatpush1.bf16.msra.mxu0 0
    %1983 = vmatprep.subr.bf16.mxu0 0
    %1984 = vmatpush1.bf16.msra.mxu0 0
    %1985 = vmatprep.subr.bf16.mxu0 0
    %1986 = vmatpush1.bf16.msra.mxu0 0
    %1987 = vmatprep.subr.bf16.mxu0 0
    %1988 = vmatpush1.bf16.msra.mxu0 0
    %1989 = vmatprep.subr.bf16.mxu0 0
    %1990 = vmatpush1.bf16.msra.mxu0 0
    %1991 = vmatprep.mubr.bf16.mxu0 0
    %1992 = vmatmul.mubr.bf16.gmra.mrb[0].mxu0 %v1887
    %v1993 = vpop.f32.mrb[0].mxu0
    %v1994 = vadd.f32 %v1909, %v1993
    %v1995 = vpop.f32.mrb[0].mxu0
    %v1996 = vpop.f32.mrb[0].mxu0
    %v1997 = vpop.f32.mrb[0].mxu0
    %1998 = vdwg.mxu0
    %1999 = vst [vmem:[#allocation10 + $0x18] sm:$0xff] %v1994
    %v2000 = vpack.c.bf16 %v1669, %v1669
    %v2001 = vld [vmem:[#allocation5] sm:$0xf]
    %v2002 = vld [vmem:[#allocation5 + $0x4] sm:$0xf]
    %v2003 = vld [vmem:[#allocation5 + $0x8] sm:$0xf]
    %v2004 = vld [vmem:[#allocation5 + $0xc] sm:$0xf]
    %v2005 = vld [vmem:[#allocation5 + $0x10] sm:$0xf]
    %v2006 = vld [vmem:[#allocation5 + $0x14] sm:$0xf]
    %v2007 = vld [vmem:[#allocation5 + $0x18] sm:$0xf]
    %v2008 = vld [vmem:[#allocation5 + $0x1c] sm:$0xf]
    %v2009 = vld [vmem:[#allocation5 + $0x20] sm:$0xf]
    %v2010 = vld [vmem:[#allocation5 + $0x24] sm:$0xf]
    %v2011 = vld [vmem:[#allocation5 + $0x28] sm:$0xf]
    %v2012 = vld [vmem:[#allocation5 + $0x2c] sm:$0xf]
    %v2013 = vld [vmem:[#allocation5 + $0x30] sm:$0xf]
    %v2014 = vld [vmem:[#allocation5 + $0x34] sm:$0xf]
    %v2015 = vld [vmem:[#allocation5 + $0x38] sm:$0xf]
    %v2016 = vld [vmem:[#allocation5 + $0x3c] sm:$0xf]
    %v2033 = vunpack.c.l.b16 %v2001
    %v2034 = vunpack.c.l.b16 %v2002
    %v2035 = vunpack.c.l.b16 %v2003
    %v2036 = vunpack.c.l.b16 %v2004
    %v2037 = vunpack.c.l.b16 %v2005
    %v2038 = vunpack.c.l.b16 %v2006
    %v2039 = vunpack.c.l.b16 %v2007
    %v2040 = vunpack.c.l.b16 %v2008
    %v2041 = vunpack.c.l.b16 %v2009
    %v2042 = vunpack.c.l.b16 %v2010
    %v2043 = vunpack.c.l.b16 %v2011
    %v2044 = vunpack.c.l.b16 %v2012
    %v2045 = vunpack.c.l.b16 %v2013
    %v2046 = vunpack.c.l.b16 %v2014
    %v2047 = vunpack.c.l.b16 %v2015
    %v2048 = vunpack.c.l.b16 %v2016
    %v2049 = vpack.c.b16 %v2034, %v2033
    %v2050 = vpack.c.b16 %v2036, %v2035
    %v2051 = vpack.c.b16 %v2038, %v2037
    %v2052 = vpack.c.b16 %v2040, %v2039
    %v2053 = vpack.c.b16 %v2042, %v2041
    %v2054 = vpack.c.b16 %v2044, %v2043
    %v2055 = vpack.c.b16 %v2046, %v2045
    %v2056 = vpack.c.b16 %v2048, %v2047
    %2065 = vmatprep.subr.bf16.mxu0 0
    %2066 = vmatpush1.bf16.msra.mxu0 %v2049
    %2067 = vmatprep.subr.bf16.mxu0 0
    %2068 = vmatpush1.bf16.msra.mxu0 %v2050
    %2069 = vmatprep.subr.bf16.mxu0 0
    %2070 = vmatpush1.bf16.msra.mxu0 %v2051
    %2071 = vmatprep.subr.bf16.mxu0 0
    %2072 = vmatpush1.bf16.msra.mxu0 %v2052
    %2073 = vmatprep.subr.bf16.mxu0 0
    %2074 = vmatpush1.bf16.msra.mxu0 %v2053
    %2075 = vmatprep.subr.bf16.mxu0 0
    %2076 = vmatpush1.bf16.msra.mxu0 %v2054
    %2077 = vmatprep.subr.bf16.mxu0 0
    %2078 = vmatpush1.bf16.msra.mxu0 %v2055
    %2079 = vmatprep.subr.bf16.mxu0 0
    %2080 = vmatpush1.bf16.msra.mxu0 %v2056
    %2081 = vmatprep.subr.bf16.mxu0 0
    %2082 = vmatpush1.bf16.msra.mxu0 0
    %2083 = vmatprep.subr.bf16.mxu0 0
    %2084 = vmatpush1.bf16.msra.mxu0 0
    %2085 = vmatprep.subr.bf16.mxu0 0
    %2086 = vmatpush1.bf16.msra.mxu0 0
    %2087 = vmatprep.subr.bf16.mxu0 0
    %2088 = vmatpush1.bf16.msra.mxu0 0
    %2089 = vmatprep.subr.bf16.mxu0 0
    %2090 = vmatpush1.bf16.msra.mxu0 0
    %2091 = vmatprep.subr.bf16.mxu0 0
    %2092 = vmatpush1.bf16.msra.mxu0 0
    %2093 = vmatprep.subr.bf16.mxu0 0
    %2094 = vmatpush1.bf16.msra.mxu0 0
    %2095 = vmatprep.subr.bf16.mxu0 0
    %2096 = vmatpush1.bf16.msra.mxu0 0
    %2097 = vmatprep.mubr.bf16.mxu0 0
    %2098 = vmatmul.mubr.bf16.gmra.mrb[0].mxu0 %v2000
    %v2099 = vpop.f32.mrb[0].mxu0
    %v2100 = vadd.f32 0.0, %v2099
    %v2101 = vpop.f32.mrb[0].mxu0
    %v2102 = vpop.f32.mrb[0].mxu0
    %v2103 = vpop.f32.mrb[0].mxu0
    %2104 = vdwg.mxu0
    %v2105 = vadd.f32 %v199, %v2100
    %v2106 = vtanh.pop %v2105
    %v2107 = vld [vmem:[#allocation7] sm:$0xf]
    %v2108 = vld [vmem:[#allocation7 + $0x4] sm:$0xf]
    %v2109 = vld [vmem:[#allocation7 + $0x8] sm:$0xf]
    %v2110 = vld [vmem:[#allocation7 + $0xc] sm:$0xf]
    %v2111 = vld [vmem:[#allocation7 + $0x10] sm:$0xf]
    %v2112 = vld [vmem:[#allocation7 + $0x14] sm:$0xf]
    %v2113 = vld [vmem:[#allocation7 + $0x18] sm:$0xf]
    %v2114 = vld [vmem:[#allocation7 + $0x1c] sm:$0xf]
    %v2115 = vld [vmem:[#allocation7 + $0x20] sm:$0xf]
    %v2116 = vld [vmem:[#allocation7 + $0x24] sm:$0xf]
    %v2117 = vld [vmem:[#allocation7 + $0x28] sm:$0xf]
    %v2118 = vld [vmem:[#allocation7 + $0x2c] sm:$0xf]
    %v2119 = vld [vmem:[#allocation7 + $0x30] sm:$0xf]
    %v2120 = vld [vmem:[#allocation7 + $0x34] sm:$0xf]
    %v2121 = vld [vmem:[#allocation7 + $0x38] sm:$0xf]
    %v2122 = vld [vmem:[#allocation7 + $0x3c] sm:$0xf]
    %v2123 = vld [vmem:[%s6] sm:$0x1]
    %v2125 = vlaneseq
    %v2126 = vshrl.u32 %v2125, 7
    %v2127 = vsub.s32 0, %v2126
    %v2128 = vrot.slane %v2123, %v2127
    %v2146 = vunpack.c.l.b16 %v2107
    %v2147 = vunpack.c.l.b16 %v2108
    %v2148 = vunpack.c.l.b16 %v2109
    %v2149 = vunpack.c.l.b16 %v2110
    %v2150 = vunpack.c.l.b16 %v2111
    %v2151 = vunpack.c.l.b16 %v2112
    %v2152 = vunpack.c.l.b16 %v2113
    %v2153 = vunpack.c.l.b16 %v2114
    %v2154 = vunpack.c.l.b16 %v2115
    %v2155 = vunpack.c.l.b16 %v2116
    %v2156 = vunpack.c.l.b16 %v2117
    %v2157 = vunpack.c.l.b16 %v2118
    %v2158 = vunpack.c.l.b16 %v2119
    %v2159 = vunpack.c.l.b16 %v2120
    %v2160 = vunpack.c.l.b16 %v2121
    %v2161 = vunpack.c.l.b16 %v2122
    %v2162 = vpack.c.b16 %v2147, %v2146
    %v2163 = vpack.c.b16 %v2149, %v2148
    %v2164 = vpack.c.b16 %v2151, %v2150
    %v2165 = vpack.c.b16 %v2153, %v2152
    %v2166 = vpack.c.b16 %v2155, %v2154
    %v2167 = vpack.c.b16 %v2157, %v2156
    %v2168 = vpack.c.b16 %v2159, %v2158
    %v2169 = vpack.c.b16 %v2161, %v2160
    %2178 = vmatprep.subr.bf16.mxu0 0
    %2179 = vmatpush1.bf16.msra.mxu0 %v2162
    %2180 = vmatprep.subr.bf16.mxu0 0
    %2181 = vmatpush1.bf16.msra.mxu0 %v2163
    %2182 = vmatprep.subr.bf16.mxu0 0
    %2183 = vmatpush1.bf16.msra.mxu0 %v2164
    %2184 = vmatprep.subr.bf16.mxu0 0
    %2185 = vmatpush1.bf16.msra.mxu0 %v2165
    %2186 = vmatprep.subr.bf16.mxu0 0
    %2187 = vmatpush1.bf16.msra.mxu0 %v2166
    %2188 = vmatprep.subr.bf16.mxu0 0
    %2189 = vmatpush1.bf16.msra.mxu0 %v2167
    %2190 = vmatprep.subr.bf16.mxu0 0
    %2191 = vmatpush1.bf16.msra.mxu0 %v2168
    %2192 = vmatprep.subr.bf16.mxu0 0
    %2193 = vmatpush1.bf16.msra.mxu0 %v2169
    %2194 = vmatprep.subr.bf16.mxu0 0
    %2195 = vmatpush1.bf16.msra.mxu0 0
    %2196 = vmatprep.subr.bf16.mxu0 0
    %2197 = vmatpush1.bf16.msra.mxu0 0
    %2198 = vmatprep.subr.bf16.mxu0 0
    %2199 = vmatpush1.bf16.msra.mxu0 0
    %2200 = vmatprep.subr.bf16.mxu0 0
    %2201 = vmatpush1.bf16.msra.mxu0 0
    %2202 = vmatprep.subr.bf16.mxu0 0
    %2203 = vmatpush1.bf16.msra.mxu0 0
    %2204 = vmatprep.subr.bf16.mxu0 0
    %2205 = vmatpush1.bf16.msra.mxu0 0
    %2206 = vmatprep.subr.bf16.mxu0 0
    %2207 = vmatpush1.bf16.msra.mxu0 0
    %2208 = vmatprep.subr.bf16.mxu0 0
    %2209 = vmatpush1.bf16.msra.mxu0 0
    %2210 = vmatprep.mubr.bf16.mxu0 0
    %2211 = vmatmul.mubr.bf16.gmra.mrb[0].mxu0 %v2000
    %v2212 = vpop.f32.mrb[0].mxu0
    %v2213 = vadd.f32 %v2128, %v2212
    %v2214 = vpop.f32.mrb[0].mxu0
    %v2215 = vpop.f32.mrb[0].mxu0
    %v2216 = vpop.f32.mrb[0].mxu0
    %2217 = vdwg.mxu0
    %v2218 = vld [vmem:[#allocation8] sm:$0xf]
    %v2219 = vld [vmem:[#allocation8 + $0x4] sm:$0xf]
    %v2220 = vld [vmem:[#allocation8 + $0x8] sm:$0xf]
    %v2221 = vld [vmem:[#allocation8 + $0xc] sm:$0xf]
    %v2222 = vld [vmem:[#allocation8 + $0x10] sm:$0xf]
    %v2223 = vld [vmem:[#allocation8 + $0x14] sm:$0xf]
    %v2224 = vld [vmem:[#allocation8 + $0x18] sm:$0xf]
    %v2225 = vld [vmem:[#allocation8 + $0x1c] sm:$0xf]
    %v2226 = vld [vmem:[#allocation8 + $0x20] sm:$0xf]
    %v2227 = vld [vmem:[#allocation8 + $0x24] sm:$0xf]
    %v2228 = vld [vmem:[#allocation8 + $0x28] sm:$0xf]
    %v2229 = vld [vmem:[#allocation8 + $0x2c] sm:$0xf]
    %v2230 = vld [vmem:[#allocation8 + $0x30] sm:$0xf]
    %v2231 = vld [vmem:[#allocation8 + $0x34] sm:$0xf]
    %v2232 = vld [vmem:[#allocation8 + $0x38] sm:$0xf]
    %v2233 = vld [vmem:[#allocation8 + $0x3c] sm:$0xf]
    %v2250 = vunpack.c.l.b16 %v2218
    %v2251 = vunpack.c.l.b16 %v2219
    %v2252 = vunpack.c.l.b16 %v2220
    %v2253 = vunpack.c.l.b16 %v2221
    %v2254 = vunpack.c.l.b16 %v2222
    %v2255 = vunpack.c.l.b16 %v2223
    %v2256 = vunpack.c.l.b16 %v2224
    %v2257 = vunpack.c.l.b16 %v2225
    %v2258 = vunpack.c.l.b16 %v2226
    %v2259 = vunpack.c.l.b16 %v2227
    %v2260 = vunpack.c.l.b16 %v2228
    %v2261 = vunpack.c.l.b16 %v2229
    %v2262 = vunpack.c.l.b16 %v2230
    %v2263 = vunpack.c.l.b16 %v2231
    %v2264 = vunpack.c.l.b16 %v2232
    %v2265 = vunpack.c.l.b16 %v2233
    %v2266 = vpack.c.b16 %v2251, %v2250
    %v2267 = vpack.c.b16 %v2253, %v2252
    %v2268 = vpack.c.b16 %v2255, %v2254
    %v2269 = vpack.c.b16 %v2257, %v2256
    %v2270 = vpack.c.b16 %v2259, %v2258
    %v2271 = vpack.c.b16 %v2261, %v2260
    %v2272 = vpack.c.b16 %v2263, %v2262
    %v2273 = vpack.c.b16 %v2265, %v2264
    %2282 = vmatprep.subr.bf16.mxu0 0
    %2283 = vmatpush1.bf16.msra.mxu0 %v2266
    %2284 = vmatprep.subr.bf16.mxu0 0
    %2285 = vmatpush1.bf16.msra.mxu0 %v2267
    %2286 = vmatprep.subr.bf16.mxu0 0
    %2287 = vmatpush1.bf16.msra.mxu0 %v2268
    %2288 = vmatprep.subr.bf16.mxu0 0
    %2289 = vmatpush1.bf16.msra.mxu0 %v2269
    %2290 = vmatprep.subr.bf16.mxu0 0
    %2291 = vmatpush1.bf16.msra.mxu0 %v2270
    %2292 = vmatprep.subr.bf16.mxu0 0
    %2293 = vmatpush1.bf16.msra.mxu0 %v2271
    %2294 = vmatprep.subr.bf16.mxu0 0
    %2295 = vmatpush1.bf16.msra.mxu0 %v2272
    %2296 = vmatprep.subr.bf16.mxu0 0
    %2297 = vmatpush1.bf16.msra.mxu0 %v2273
    %2298 = vmatprep.subr.bf16.mxu0 0
    %2299 = vmatpush1.bf16.msra.mxu0 0
    %2300 = vmatprep.subr.bf16.mxu0 0
    %2301 = vmatpush1.bf16.msra.mxu0 0
    %2302 = vmatprep.subr.bf16.mxu0 0
    %2303 = vmatpush1.bf16.msra.mxu0 0
    %2304 = vmatprep.subr.bf16.mxu0 0
    %2305 = vmatpush1.bf16.msra.mxu0 0
    %2306 = vmatprep.subr.bf16.mxu0 0
    %2307 = vmatpush1.bf16.msra.mxu0 0
    %2308 = vmatprep.subr.bf16.mxu0 0
    %2309 = vmatpush1.bf16.msra.mxu0 0
    %2310 = vmatprep.subr.bf16.mxu0 0
    %2311 = vmatpush1.bf16.msra.mxu0 0
    %2312 = vmatprep.subr.bf16.mxu0 0
    %2313 = vmatpush1.bf16.msra.mxu0 0
    %2314 = vmatprep.mubr.bf16.mxu0 0
    %2315 = vmatmul.mubr.bf16.gmra.mrb[0].mxu0 %v1887
    %v2316 = vpop.f32.mrb[0].mxu0
    %v2317 = vadd.f32 0.0, %v2316
    %v2318 = vpop.f32.mrb[0].mxu0
    %v2319 = vpop.f32.mrb[0].mxu0
    %v2320 = vpop.f32.mrb[0].mxu0
    %2321 = vdwg.mxu0
    %v2322 = vadd.f32 %v2213, %v2317
    %v2323 = vtanh.pop %v2322
    %v2324 = vpack.c.bf16 %v2323, %v2323
    %v2325 = vld [vmem:[%s7] sm:$0xf]
    %v2326 = vld [vmem:[%s7 + $0x4] sm:$0xf]
    %v2327 = vld [vmem:[%s7 + $0x8] sm:$0xf]
    %v2328 = vld [vmem:[%s7 + $0xc] sm:$0xf]
    %v2329 = vld [vmem:[%s7 + $0x10] sm:$0xf]
    %v2330 = vld [vmem:[%s7 + $0x14] sm:$0xf]
    %v2331 = vld [vmem:[%s7 + $0x18] sm:$0xf]
    %v2332 = vld [vmem:[%s7 + $0x1c] sm:$0xf]
    %v2333 = vld [vmem:[%s7 + $0x20] sm:$0xf]
    %v2334 = vld [vmem:[%s7 + $0x24] sm:$0xf]
    %v2335 = vld [vmem:[%s7 + $0x28] sm:$0xf]
    %v2336 = vld [vmem:[%s7 + $0x2c] sm:$0xf]
    %v2337 = vld [vmem:[%s7 + $0x30] sm:$0xf]
    %v2338 = vld [vmem:[%s7 + $0x34] sm:$0xf]
    %v2339 = vld [vmem:[%s7 + $0x38] sm:$0xf]
    %v2340 = vld [vmem:[%s7 + $0x3c] sm:$0xf]
    %v2341 = vld [vmem:[%s8] sm:$0x1]
    %v2343 = vlaneseq
    %v2344 = vshrl.u32 %v2343, 7
    %v2345 = vsub.s32 0, %v2344
    %v2346 = vrot.slane %v2341, %v2345
    %v2364 = vunpack.c.l.b16 %v2325
    %v2365 = vunpack.c.l.b16 %v2326
    %v2366 = vunpack.c.l.b16 %v2327
    %v2367 = vunpack.c.l.b16 %v2328
    %v2368 = vunpack.c.l.b16 %v2329
    %v2369 = vunpack.c.l.b16 %v2330
    %v2370 = vunpack.c.l.b16 %v2331
    %v2371 = vunpack.c.l.b16 %v2332
    %v2372 = vunpack.c.l.b16 %v2333
    %v2373 = vunpack.c.l.b16 %v2334
    %v2374 = vunpack.c.l.b16 %v2335
    %v2375 = vunpack.c.l.b16 %v2336
    %v2376 = vunpack.c.l.b16 %v2337
    %v2377 = vunpack.c.l.b16 %v2338
    %v2378 = vunpack.c.l.b16 %v2339
    %v2379 = vunpack.c.l.b16 %v2340
    %v2380 = vpack.c.b16 %v2365, %v2364
    %v2381 = vpack.c.b16 %v2367, %v2366
    %v2382 = vpack.c.b16 %v2369, %v2368
    %v2383 = vpack.c.b16 %v2371, %v2370
    %v2384 = vpack.c.b16 %v2373, %v2372
    %v2385 = vpack.c.b16 %v2375, %v2374
    %v2386 = vpack.c.b16 %v2377, %v2376
    %v2387 = vpack.c.b16 %v2379, %v2378
    %2396 = vmatprep.subr.bf16.mxu0 0
    %2397 = vmatpush1.bf16.msra.mxu0 %v2380
    %2398 = vmatprep.subr.bf16.mxu0 0
    %2399 = vmatpush1.bf16.msra.mxu0 %v2381
    %2400 = vmatprep.subr.bf16.mxu0 0
    %2401 = vmatpush1.bf16.msra.mxu0 %v2382
    %2402 = vmatprep.subr.bf16.mxu0 0
    %2403 = vmatpush1.bf16.msra.mxu0 %v2383
    %2404 = vmatprep.subr.bf16.mxu0 0
    %2405 = vmatpush1.bf16.msra.mxu0 %v2384
    %2406 = vmatprep.subr.bf16.mxu0 0
    %2407 = vmatpush1.bf16.msra.mxu0 %v2385
    %2408 = vmatprep.subr.bf16.mxu0 0
    %2409 = vmatpush1.bf16.msra.mxu0 %v2386
    %2410 = vmatprep.subr.bf16.mxu0 0
    %2411 = vmatpush1.bf16.msra.mxu0 %v2387
    %2412 = vmatprep.subr.bf16.mxu0 0
    %2413 = vmatpush1.bf16.msra.mxu0 0
    %2414 = vmatprep.subr.bf16.mxu0 0
    %2415 = vmatpush1.bf16.msra.mxu0 0
    %2416 = vmatprep.subr.bf16.mxu0 0
    %2417 = vmatpush1.bf16.msra.mxu0 0
    %2418 = vmatprep.subr.bf16.mxu0 0
    %2419 = vmatpush1.bf16.msra.mxu0 0
    %2420 = vmatprep.subr.bf16.mxu0 0
    %2421 = vmatpush1.bf16.msra.mxu0 0
    %2422 = vmatprep.subr.bf16.mxu0 0
    %2423 = vmatpush1.bf16.msra.mxu0 0
    %2424 = vmatprep.subr.bf16.mxu0 0
    %2425 = vmatpush1.bf16.msra.mxu0 0
    %2426 = vmatprep.subr.bf16.mxu0 0
    %2427 = vmatpush1.bf16.msra.mxu0 0
    %2428 = vmatprep.mubr.bf16.mxu0 0
    %2429 = vmatmul.mubr.bf16.gmra.mrb[0].mxu0 %v2324
    %v2430 = vpop.f32.mrb[0].mxu0
    %v2431 = vadd.f32 %v2346, %v2430
    %v2432 = vpop.f32.mrb[0].mxu0
    %v2433 = vpop.f32.mrb[0].mxu0
    %v2434 = vpop.f32.mrb[0].mxu0
    %2435 = vdwg.mxu0
    %2436 = vst [vmem:[#allocation10 + $0x20] sm:$0xff] %v2431
    %v2437 = vpack.c.bf16 %v2106, %v2106
    %v2438 = vld [vmem:[#allocation5] sm:$0xf]
    %v2439 = vld [vmem:[#allocation5 + $0x4] sm:$0xf]
    %v2440 = vld [vmem:[#allocation5 + $0x8] sm:$0xf]
    %v2441 = vld [vmem:[#allocation5 + $0xc] sm:$0xf]
    %v2442 = vld [vmem:[#allocation5 + $0x10] sm:$0xf]
    %v2443 = vld [vmem:[#allocation5 + $0x14] sm:$0xf]
    %v2444 = vld [vmem:[#allocation5 + $0x18] sm:$0xf]
    %v2445 = vld [vmem:[#allocation5 + $0x1c] sm:$0xf]
    %v2446 = vld [vmem:[#allocation5 + $0x20] sm:$0xf]
    %v2447 = vld [vmem:[#allocation5 + $0x24] sm:$0xf]
    %v2448 = vld [vmem:[#allocation5 + $0x28] sm:$0xf]
    %v2449 = vld [vmem:[#allocation5 + $0x2c] sm:$0xf]
    %v2450 = vld [vmem:[#allocation5 + $0x30] sm:$0xf]
    %v2451 = vld [vmem:[#allocation5 + $0x34] sm:$0xf]
    %v2452 = vld [vmem:[#allocation5 + $0x38] sm:$0xf]
    %v2453 = vld [vmem:[#allocation5 + $0x3c] sm:$0xf]
    %v2470 = vunpack.c.l.b16 %v2438
    %v2471 = vunpack.c.l.b16 %v2439
    %v2472 = vunpack.c.l.b16 %v2440
    %v2473 = vunpack.c.l.b16 %v2441
    %v2474 = vunpack.c.l.b16 %v2442
    %v2475 = vunpack.c.l.b16 %v2443
    %v2476 = vunpack.c.l.b16 %v2444
    %v2477 = vunpack.c.l.b16 %v2445
    %v2478 = vunpack.c.l.b16 %v2446
    %v2479 = vunpack.c.l.b16 %v2447
    %v2480 = vunpack.c.l.b16 %v2448
    %v2481 = vunpack.c.l.b16 %v2449
    %v2482 = vunpack.c.l.b16 %v2450
    %v2483 = vunpack.c.l.b16 %v2451
    %v2484 = vunpack.c.l.b16 %v2452
    %v2485 = vunpack.c.l.b16 %v2453
    %v2486 = vpack.c.b16 %v2471, %v2470
    %v2487 = vpack.c.b16 %v2473, %v2472
    %v2488 = vpack.c.b16 %v2475, %v2474
    %v2489 = vpack.c.b16 %v2477, %v2476
    %v2490 = vpack.c.b16 %v2479, %v2478
    %v2491 = vpack.c.b16 %v2481, %v2480
    %v2492 = vpack.c.b16 %v2483, %v2482
    %v2493 = vpack.c.b16 %v2485, %v2484
    %2502 = vmatprep.subr.bf16.mxu0 0
    %2503 = vmatpush1.bf16.msra.mxu0 %v2486
    %2504 = vmatprep.subr.bf16.mxu0 0
    %2505 = vmatpush1.bf16.msra.mxu0 %v2487
    %2506 = vmatprep.subr.bf16.mxu0 0
    %2507 = vmatpush1.bf16.msra.mxu0 %v2488
    %2508 = vmatprep.subr.bf16.mxu0 0
    %2509 = vmatpush1.bf16.msra.mxu0 %v2489
    %2510 = vmatprep.subr.bf16.mxu0 0
    %2511 = vmatpush1.bf16.msra.mxu0 %v2490
    %2512 = vmatprep.subr.bf16.mxu0 0
    %2513 = vmatpush1.bf16.msra.mxu0 %v2491
    %2514 = vmatprep.subr.bf16.mxu0 0
    %2515 = vmatpush1.bf16.msra.mxu0 %v2492
    %2516 = vmatprep.subr.bf16.mxu0 0
    %2517 = vmatpush1.bf16.msra.mxu0 %v2493
    %2518 = vmatprep.subr.bf16.mxu0 0
    %2519 = vmatpush1.bf16.msra.mxu0 0
    %2520 = vmatprep.subr.bf16.mxu0 0
    %2521 = vmatpush1.bf16.msra.mxu0 0
    %2522 = vmatprep.subr.bf16.mxu0 0
    %2523 = vmatpush1.bf16.msra.mxu0 0
    %2524 = vmatprep.subr.bf16.mxu0 0
    %2525 = vmatpush1.bf16.msra.mxu0 0
    %2526 = vmatprep.subr.bf16.mxu0 0
    %2527 = vmatpush1.bf16.msra.mxu0 0
    %2528 = vmatprep.subr.bf16.mxu0 0
    %2529 = vmatpush1.bf16.msra.mxu0 0
    %2530 = vmatprep.subr.bf16.mxu0 0
    %2531 = vmatpush1.bf16.msra.mxu0 0
    %2532 = vmatprep.subr.bf16.mxu0 0
    %2533 = vmatpush1.bf16.msra.mxu0 0
    %2534 = vmatprep.mubr.bf16.mxu0 0
    %2535 = vmatmul.mubr.bf16.gmra.mrb[0].mxu0 %v2437
    %v2536 = vpop.f32.mrb[0].mxu0
    %v2537 = vadd.f32 0.0, %v2536
    %v2538 = vpop.f32.mrb[0].mxu0
    %v2539 = vpop.f32.mrb[0].mxu0
    %v2540 = vpop.f32.mrb[0].mxu0
    %2541 = vdwg.mxu0
    %v2542 = vadd.f32 %v204, %v2537
    %v2543 = vtanh.pop %v2542
    %v2544 = vld [vmem:[#allocation7] sm:$0xf]
    %v2545 = vld [vmem:[#allocation7 + $0x4] sm:$0xf]
    %v2546 = vld [vmem:[#allocation7 + $0x8] sm:$0xf]
    %v2547 = vld [vmem:[#allocation7 + $0xc] sm:$0xf]
    %v2548 = vld [vmem:[#allocation7 + $0x10] sm:$0xf]
    %v2549 = vld [vmem:[#allocation7 + $0x14] sm:$0xf]
    %v2550 = vld [vmem:[#allocation7 + $0x18] sm:$0xf]
    %v2551 = vld [vmem:[#allocation7 + $0x1c] sm:$0xf]
    %v2552 = vld [vmem:[#allocation7 + $0x20] sm:$0xf]
    %v2553 = vld [vmem:[#allocation7 + $0x24] sm:$0xf]
    %v2554 = vld [vmem:[#allocation7 + $0x28] sm:$0xf]
    %v2555 = vld [vmem:[#allocation7 + $0x2c] sm:$0xf]
    %v2556 = vld [vmem:[#allocation7 + $0x30] sm:$0xf]
    %v2557 = vld [vmem:[#allocation7 + $0x34] sm:$0xf]
    %v2558 = vld [vmem:[#allocation7 + $0x38] sm:$0xf]
    %v2559 = vld [vmem:[#allocation7 + $0x3c] sm:$0xf]
    %v2560 = vld [vmem:[%s6] sm:$0x1]
    %v2562 = vlaneseq
    %v2563 = vshrl.u32 %v2562, 7
    %v2564 = vsub.s32 0, %v2563
    %v2565 = vrot.slane %v2560, %v2564
    %v2583 = vunpack.c.l.b16 %v2544
    %v2584 = vunpack.c.l.b16 %v2545
    %v2585 = vunpack.c.l.b16 %v2546
    %v2586 = vunpack.c.l.b16 %v2547
    %v2587 = vunpack.c.l.b16 %v2548
    %v2588 = vunpack.c.l.b16 %v2549
    %v2589 = vunpack.c.l.b16 %v2550
    %v2590 = vunpack.c.l.b16 %v2551
    %v2591 = vunpack.c.l.b16 %v2552
    %v2592 = vunpack.c.l.b16 %v2553
    %v2593 = vunpack.c.l.b16 %v2554
    %v2594 = vunpack.c.l.b16 %v2555
    %v2595 = vunpack.c.l.b16 %v2556
    %v2596 = vunpack.c.l.b16 %v2557
    %v2597 = vunpack.c.l.b16 %v2558
    %v2598 = vunpack.c.l.b16 %v2559
    %v2599 = vpack.c.b16 %v2584, %v2583
    %v2600 = vpack.c.b16 %v2586, %v2585
    %v2601 = vpack.c.b16 %v2588, %v2587
    %v2602 = vpack.c.b16 %v2590, %v2589
    %v2603 = vpack.c.b16 %v2592, %v2591
    %v2604 = vpack.c.b16 %v2594, %v2593
    %v2605 = vpack.c.b16 %v2596, %v2595
    %v2606 = vpack.c.b16 %v2598, %v2597
    %2615 = vmatprep.subr.bf16.mxu0 0
    %2616 = vmatpush1.bf16.msra.mxu0 %v2599
    %2617 = vmatprep.subr.bf16.mxu0 0
    %2618 = vmatpush1.bf16.msra.mxu0 %v2600
    %2619 = vmatprep.subr.bf16.mxu0 0
    %2620 = vmatpush1.bf16.msra.mxu0 %v2601
    %2621 = vmatprep.subr.bf16.mxu0 0
    %2622 = vmatpush1.bf16.msra.mxu0 %v2602
    %2623 = vmatprep.subr.bf16.mxu0 0
    %2624 = vmatpush1.bf16.msra.mxu0 %v2603
    %2625 = vmatprep.subr.bf16.mxu0 0
    %2626 = vmatpush1.bf16.msra.mxu0 %v2604
    %2627 = vmatprep.subr.bf16.mxu0 0
    %2628 = vmatpush1.bf16.msra.mxu0 %v2605
    %2629 = vmatprep.subr.bf16.mxu0 0
    %2630 = vmatpush1.bf16.msra.mxu0 %v2606
    %2631 = vmatprep.subr.bf16.mxu0 0
    %2632 = vmatpush1.bf16.msra.mxu0 0
    %2633 = vmatprep.subr.bf16.mxu0 0
    %2634 = vmatpush1.bf16.msra.mxu0 0
    %2635 = vmatprep.subr.bf16.mxu0 0
    %2636 = vmatpush1.bf16.msra.mxu0 0
    %2637 = vmatprep.subr.bf16.mxu0 0
    %2638 = vmatpush1.bf16.msra.mxu0 0
    %2639 = vmatprep.subr.bf16.mxu0 0
    %2640 = vmatpush1.bf16.msra.mxu0 0
    %2641 = vmatprep.subr.bf16.mxu0 0
    %2642 = vmatpush1.bf16.msra.mxu0 0
    %2643 = vmatprep.subr.bf16.mxu0 0
    %2644 = vmatpush1.bf16.msra.mxu0 0
    %2645 = vmatprep.subr.bf16.mxu0 0
    %2646 = vmatpush1.bf16.msra.mxu0 0
    %2647 = vmatprep.mubr.bf16.mxu0 0
    %2648 = vmatmul.mubr.bf16.gmra.mrb[0].mxu0 %v2437
    %v2649 = vpop.f32.mrb[0].mxu0
    %v2650 = vadd.f32 %v2565, %v2649
    %v2651 = vpop.f32.mrb[0].mxu0
    %v2652 = vpop.f32.mrb[0].mxu0
    %v2653 = vpop.f32.mrb[0].mxu0
    %2654 = vdwg.mxu0
    %v2655 = vld [vmem:[#allocation8] sm:$0xf]
    %v2656 = vld [vmem:[#allocation8 + $0x4] sm:$0xf]
    %v2657 = vld [vmem:[#allocation8 + $0x8] sm:$0xf]
    %v2658 = vld [vmem:[#allocation8 + $0xc] sm:$0xf]
    %v2659 = vld [vmem:[#allocation8 + $0x10] sm:$0xf]
    %v2660 = vld [vmem:[#allocation8 + $0x14] sm:$0xf]
    %v2661 = vld [vmem:[#allocation8 + $0x18] sm:$0xf]
    %v2662 = vld [vmem:[#allocation8 + $0x1c] sm:$0xf]
    %v2663 = vld [vmem:[#allocation8 + $0x20] sm:$0xf]
    %v2664 = vld [vmem:[#allocation8 + $0x24] sm:$0xf]
    %v2665 = vld [vmem:[#allocation8 + $0x28] sm:$0xf]
    %v2666 = vld [vmem:[#allocation8 + $0x2c] sm:$0xf]
    %v2667 = vld [vmem:[#allocation8 + $0x30] sm:$0xf]
    %v2668 = vld [vmem:[#allocation8 + $0x34] sm:$0xf]
    %v2669 = vld [vmem:[#allocation8 + $0x38] sm:$0xf]
    %v2670 = vld [vmem:[#allocation8 + $0x3c] sm:$0xf]
    %v2687 = vunpack.c.l.b16 %v2655
    %v2688 = vunpack.c.l.b16 %v2656
    %v2689 = vunpack.c.l.b16 %v2657
    %v2690 = vunpack.c.l.b16 %v2658
    %v2691 = vunpack.c.l.b16 %v2659
    %v2692 = vunpack.c.l.b16 %v2660
    %v2693 = vunpack.c.l.b16 %v2661
    %v2694 = vunpack.c.l.b16 %v2662
    %v2695 = vunpack.c.l.b16 %v2663
    %v2696 = vunpack.c.l.b16 %v2664
    %v2697 = vunpack.c.l.b16 %v2665
    %v2698 = vunpack.c.l.b16 %v2666
    %v2699 = vunpack.c.l.b16 %v2667
    %v2700 = vunpack.c.l.b16 %v2668
    %v2701 = vunpack.c.l.b16 %v2669
    %v2702 = vunpack.c.l.b16 %v2670
    %v2703 = vpack.c.b16 %v2688, %v2687
    %v2704 = vpack.c.b16 %v2690, %v2689
    %v2705 = vpack.c.b16 %v2692, %v2691
    %v2706 = vpack.c.b16 %v2694, %v2693
    %v2707 = vpack.c.b16 %v2696, %v2695
    %v2708 = vpack.c.b16 %v2698, %v2697
    %v2709 = vpack.c.b16 %v2700, %v2699
    %v2710 = vpack.c.b16 %v2702, %v2701
    %2719 = vmatprep.subr.bf16.mxu0 0
    %2720 = vmatpush1.bf16.msra.mxu0 %v2703
    %2721 = vmatprep.subr.bf16.mxu0 0
    %2722 = vmatpush1.bf16.msra.mxu0 %v2704
    %2723 = vmatprep.subr.bf16.mxu0 0
    %2724 = vmatpush1.bf16.msra.mxu0 %v2705
    %2725 = vmatprep.subr.bf16.mxu0 0
    %2726 = vmatpush1.bf16.msra.mxu0 %v2706
    %2727 = vmatprep.subr.bf16.mxu0 0
    %2728 = vmatpush1.bf16.msra.mxu0 %v2707
    %2729 = vmatprep.subr.bf16.mxu0 0
    %2730 = vmatpush1.bf16.msra.mxu0 %v2708
    %2731 = vmatprep.subr.bf16.mxu0 0
    %2732 = vmatpush1.bf16.msra.mxu0 %v2709
    %2733 = vmatprep.subr.bf16.mxu0 0
    %2734 = vmatpush1.bf16.msra.mxu0 %v2710
    %2735 = vmatprep.subr.bf16.mxu0 0
    %2736 = vmatpush1.bf16.msra.mxu0 0
    %2737 = vmatprep.subr.bf16.mxu0 0
    %2738 = vmatpush1.bf16.msra.mxu0 0
    %2739 = vmatprep.subr.bf16.mxu0 0
    %2740 = vmatpush1.bf16.msra.mxu0 0
    %2741 = vmatprep.subr.bf16.mxu0 0
    %2742 = vmatpush1.bf16.msra.mxu0 0
    %2743 = vmatprep.subr.bf16.mxu0 0
    %2744 = vmatpush1.bf16.msra.mxu0 0
    %2745 = vmatprep.subr.bf16.mxu0 0
    %2746 = vmatpush1.bf16.msra.mxu0 0
    %2747 = vmatprep.subr.bf16.mxu0 0
    %2748 = vmatpush1.bf16.msra.mxu0 0
    %2749 = vmatprep.subr.bf16.mxu0 0
    %2750 = vmatpush1.bf16.msra.mxu0 0
    %2751 = vmatprep.mubr.bf16.mxu0 0
    %2752 = vmatmul.mubr.bf16.gmra.mrb[0].mxu0 %v2324
    %v2753 = vpop.f32.mrb[0].mxu0
    %v2754 = vadd.f32 0.0, %v2753
    %v2755 = vpop.f32.mrb[0].mxu0
    %v2756 = vpop.f32.mrb[0].mxu0
    %v2757 = vpop.f32.mrb[0].mxu0
    %2758 = vdwg.mxu0
    %v2759 = vadd.f32 %v2650, %v2754
    %v2760 = vtanh.pop %v2759
    %v2761 = vpack.c.bf16 %v2760, %v2760
    %v2762 = vld [vmem:[%s7] sm:$0xf]
    %v2763 = vld [vmem:[%s7 + $0x4] sm:$0xf]
    %v2764 = vld [vmem:[%s7 + $0x8] sm:$0xf]
    %v2765 = vld [vmem:[%s7 + $0xc] sm:$0xf]
    %v2766 = vld [vmem:[%s7 + $0x10] sm:$0xf]
    %v2767 = vld [vmem:[%s7 + $0x14] sm:$0xf]
    %v2768 = vld [vmem:[%s7 + $0x18] sm:$0xf]
    %v2769 = vld [vmem:[%s7 + $0x1c] sm:$0xf]
    %v2770 = vld [vmem:[%s7 + $0x20] sm:$0xf]
    %v2771 = vld [vmem:[%s7 + $0x24] sm:$0xf]
    %v2772 = vld [vmem:[%s7 + $0x28] sm:$0xf]
    %v2773 = vld [vmem:[%s7 + $0x2c] sm:$0xf]
    %v2774 = vld [vmem:[%s7 + $0x30] sm:$0xf]
    %v2775 = vld [vmem:[%s7 + $0x34] sm:$0xf]
    %v2776 = vld [vmem:[%s7 + $0x38] sm:$0xf]
    %v2777 = vld [vmem:[%s7 + $0x3c] sm:$0xf]
    %v2778 = vld [vmem:[%s8] sm:$0x1]
    %v2780 = vlaneseq
    %v2781 = vshrl.u32 %v2780, 7
    %v2782 = vsub.s32 0, %v2781
    %v2783 = vrot.slane %v2778, %v2782
    %v2801 = vunpack.c.l.b16 %v2762
    %v2802 = vunpack.c.l.b16 %v2763
    %v2803 = vunpack.c.l.b16 %v2764
    %v2804 = vunpack.c.l.b16 %v2765
    %v2805 = vunpack.c.l.b16 %v2766
    %v2806 = vunpack.c.l.b16 %v2767
    %v2807 = vunpack.c.l.b16 %v2768
    %v2808 = vunpack.c.l.b16 %v2769
    %v2809 = vunpack.c.l.b16 %v2770
    %v2810 = vunpack.c.l.b16 %v2771
    %v2811 = vunpack.c.l.b16 %v2772
    %v2812 = vunpack.c.l.b16 %v2773
    %v2813 = vunpack.c.l.b16 %v2774
    %v2814 = vunpack.c.l.b16 %v2775
    %v2815 = vunpack.c.l.b16 %v2776
    %v2816 = vunpack.c.l.b16 %v2777
    %v2817 = vpack.c.b16 %v2802, %v2801
    %v2818 = vpack.c.b16 %v2804, %v2803
    %v2819 = vpack.c.b16 %v2806, %v2805
    %v2820 = vpack.c.b16 %v2808, %v2807
    %v2821 = vpack.c.b16 %v2810, %v2809
    %v2822 = vpack.c.b16 %v2812, %v2811
    %v2823 = vpack.c.b16 %v2814, %v2813
    %v2824 = vpack.c.b16 %v2816, %v2815
    %2833 = vmatprep.subr.bf16.mxu0 0
    %2834 = vmatpush1.bf16.msra.mxu0 %v2817
    %2835 = vmatprep.subr.bf16.mxu0 0
    %2836 = vmatpush1.bf16.msra.mxu0 %v2818
    %2837 = vmatprep.subr.bf16.mxu0 0
    %2838 = vmatpush1.bf16.msra.mxu0 %v2819
    %2839 = vmatprep.subr.bf16.mxu0 0
    %2840 = vmatpush1.bf16.msra.mxu0 %v2820
    %2841 = vmatprep.subr.bf16.mxu0 0
    %2842 = vmatpush1.bf16.msra.mxu0 %v2821
    %2843 = vmatprep.subr.bf16.mxu0 0
    %2844 = vmatpush1.bf16.msra.mxu0 %v2822
    %2845 = vmatprep.subr.bf16.mxu0 0
    %2846 = vmatpush1.bf16.msra.mxu0 %v2823
    %2847 = vmatprep.subr.bf16.mxu0 0
    %2848 = vmatpush1.bf16.msra.mxu0 %v2824
    %2849 = vmatprep.subr.bf16.mxu0 0
    %2850 = vmatpush1.bf16.msra.mxu0 0
    %2851 = vmatprep.subr.bf16.mxu0 0
    %2852 = vmatpush1.bf16.msra.mxu0 0
    %2853 = vmatprep.subr.bf16.mxu0 0
    %2854 = vmatpush1.bf16.msra.mxu0 0
    %2855 = vmatprep.subr.bf16.mxu0 0
    %2856 = vmatpush1.bf16.msra.mxu0 0
    %2857 = vmatprep.subr.bf16.mxu0 0
    %2858 = vmatpush1.bf16.msra.mxu0 0
    %2859 = vmatprep.subr.bf16.mxu0 0
    %2860 = vmatpush1.bf16.msra.mxu0 0
    %2861 = vmatprep.subr.bf16.mxu0 0
    %2862 = vmatpush1.bf16.msra.mxu0 0
    %2863 = vmatprep.subr.bf16.mxu0 0
    %2864 = vmatpush1.bf16.msra.mxu0 0
    %2865 = vmatprep.mubr.bf16.mxu0 0
    %2866 = vmatmul.mubr.bf16.gmra.mrb[0].mxu0 %v2761
    %v2867 = vpop.f32.mrb[0].mxu0
    %v2868 = vadd.f32 %v2783, %v2867
    %v2869 = vpop.f32.mrb[0].mxu0
    %v2870 = vpop.f32.mrb[0].mxu0
    %v2871 = vpop.f32.mrb[0].mxu0
    %2872 = vdwg.mxu0
    %2873 = vst [vmem:[#allocation10 + $0x28] sm:$0xff] %v2868
    %v2874 = vpack.c.bf16 %v2543, %v2543
    %v2875 = vld [vmem:[#allocation5] sm:$0xf]
    %v2876 = vld [vmem:[#allocation5 + $0x4] sm:$0xf]
    %v2877 = vld [vmem:[#allocation5 + $0x8] sm:$0xf]
    %v2878 = vld [vmem:[#allocation5 + $0xc] sm:$0xf]
    %v2879 = vld [vmem:[#allocation5 + $0x10] sm:$0xf]
    %v2880 = vld [vmem:[#allocation5 + $0x14] sm:$0xf]
    %v2881 = vld [vmem:[#allocation5 + $0x18] sm:$0xf]
    %v2882 = vld [vmem:[#allocation5 + $0x1c] sm:$0xf]
    %v2883 = vld [vmem:[#allocation5 + $0x20] sm:$0xf]
    %v2884 = vld [vmem:[#allocation5 + $0x24] sm:$0xf]
    %v2885 = vld [vmem:[#allocation5 + $0x28] sm:$0xf]
    %v2886 = vld [vmem:[#allocation5 + $0x2c] sm:$0xf]
    %v2887 = vld [vmem:[#allocation5 + $0x30] sm:$0xf]
    %v2888 = vld [vmem:[#allocation5 + $0x34] sm:$0xf]
    %v2889 = vld [vmem:[#allocation5 + $0x38] sm:$0xf]
    %v2890 = vld [vmem:[#allocation5 + $0x3c] sm:$0xf]
    %v2907 = vunpack.c.l.b16 %v2875
    %v2908 = vunpack.c.l.b16 %v2876
    %v2909 = vunpack.c.l.b16 %v2877
    %v2910 = vunpack.c.l.b16 %v2878
    %v2911 = vunpack.c.l.b16 %v2879
    %v2912 = vunpack.c.l.b16 %v2880
    %v2913 = vunpack.c.l.b16 %v2881
    %v2914 = vunpack.c.l.b16 %v2882
    %v2915 = vunpack.c.l.b16 %v2883
    %v2916 = vunpack.c.l.b16 %v2884
    %v2917 = vunpack.c.l.b16 %v2885
    %v2918 = vunpack.c.l.b16 %v2886
    %v2919 = vunpack.c.l.b16 %v2887
    %v2920 = vunpack.c.l.b16 %v2888
    %v2921 = vunpack.c.l.b16 %v2889
    %v2922 = vunpack.c.l.b16 %v2890
    %v2923 = vpack.c.b16 %v2908, %v2907
    %v2924 = vpack.c.b16 %v2910, %v2909
    %v2925 = vpack.c.b16 %v2912, %v2911
    %v2926 = vpack.c.b16 %v2914, %v2913
    %v2927 = vpack.c.b16 %v2916, %v2915
    %v2928 = vpack.c.b16 %v2918, %v2917
    %v2929 = vpack.c.b16 %v2920, %v2919
    %v2930 = vpack.c.b16 %v2922, %v2921
    %2939 = vmatprep.subr.bf16.mxu0 0
    %2940 = vmatpush1.bf16.msra.mxu0 %v2923
    %2941 = vmatprep.subr.bf16.mxu0 0
    %2942 = vmatpush1.bf16.msra.mxu0 %v2924
    %2943 = vmatprep.subr.bf16.mxu0 0
    %2944 = vmatpush1.bf16.msra.mxu0 %v2925
    %2945 = vmatprep.subr.bf16.mxu0 0
    %2946 = vmatpush1.bf16.msra.mxu0 %v2926
    %2947 = vmatprep.subr.bf16.mxu0 0
    %2948 = vmatpush1.bf16.msra.mxu0 %v2927
    %2949 = vmatprep.subr.bf16.mxu0 0
    %2950 = vmatpush1.bf16.msra.mxu0 %v2928
    %2951 = vmatprep.subr.bf16.mxu0 0
    %2952 = vmatpush1.bf16.msra.mxu0 %v2929
    %2953 = vmatprep.subr.bf16.mxu0 0
    %2954 = vmatpush1.bf16.msra.mxu0 %v2930
    %2955 = vmatprep.subr.bf16.mxu0 0
    %2956 = vmatpush1.bf16.msra.mxu0 0
    %2957 = vmatprep.subr.bf16.mxu0 0
    %2958 = vmatpush1.bf16.msra.mxu0 0
    %2959 = vmatprep.subr.bf16.mxu0 0
    %2960 = vmatpush1.bf16.msra.mxu0 0
    %2961 = vmatprep.subr.bf16.mxu0 0
    %2962 = vmatpush1.bf16.msra.mxu0 0
    %2963 = vmatprep.subr.bf16.mxu0 0
    %2964 = vmatpush1.bf16.msra.mxu0 0
    %2965 = vmatprep.subr.bf16.mxu0 0
    %2966 = vmatpush1.bf16.msra.mxu0 0
    %2967 = vmatprep.subr.bf16.mxu0 0
    %2968 = vmatpush1.bf16.msra.mxu0 0
    %2969 = vmatprep.subr.bf16.mxu0 0
    %2970 = vmatpush1.bf16.msra.mxu0 0
    %2971 = vmatprep.mubr.bf16.mxu0 0
    %2972 = vmatmul.mubr.bf16.gmra.mrb[0].mxu0 %v2874
    %v2973 = vpop.f32.mrb[0].mxu0
    %v2974 = vadd.f32 0.0, %v2973
    %v2975 = vpop.f32.mrb[0].mxu0
    %v2976 = vpop.f32.mrb[0].mxu0
    %v2977 = vpop.f32.mrb[0].mxu0
    %2978 = vdwg.mxu0
    %v2979 = vadd.f32 %v207, %v2974
    %v2980 = vtanh.pop %v2979
    %v2981 = vld [vmem:[#allocation7] sm:$0xf]
    %v2982 = vld [vmem:[#allocation7 + $0x4] sm:$0xf]
    %v2983 = vld [vmem:[#allocation7 + $0x8] sm:$0xf]
    %v2984 = vld [vmem:[#allocation7 + $0xc] sm:$0xf]
    %v2985 = vld [vmem:[#allocation7 + $0x10] sm:$0xf]
    %v2986 = vld [vmem:[#allocation7 + $0x14] sm:$0xf]
    %v2987 = vld [vmem:[#allocation7 + $0x18] sm:$0xf]
    %v2988 = vld [vmem:[#allocation7 + $0x1c] sm:$0xf]
    %v2989 = vld [vmem:[#allocation7 + $0x20] sm:$0xf]
    %v2990 = vld [vmem:[#allocation7 + $0x24] sm:$0xf]
    %v2991 = vld [vmem:[#allocation7 + $0x28] sm:$0xf]
    %v2992 = vld [vmem:[#allocation7 + $0x2c] sm:$0xf]
    %v2993 = vld [vmem:[#allocation7 + $0x30] sm:$0xf]
    %v2994 = vld [vmem:[#allocation7 + $0x34] sm:$0xf]
    %v2995 = vld [vmem:[#allocation7 + $0x38] sm:$0xf]
    %v2996 = vld [vmem:[#allocation7 + $0x3c] sm:$0xf]
    %v2997 = vld [vmem:[%s6] sm:$0x1]
    %v2999 = vlaneseq
    %v3000 = vshrl.u32 %v2999, 7
    %v3001 = vsub.s32 0, %v3000
    %v3002 = vrot.slane %v2997, %v3001
    %v3020 = vunpack.c.l.b16 %v2981
    %v3021 = vunpack.c.l.b16 %v2982
    %v3022 = vunpack.c.l.b16 %v2983
    %v3023 = vunpack.c.l.b16 %v2984
    %v3024 = vunpack.c.l.b16 %v2985
    %v3025 = vunpack.c.l.b16 %v2986
    %v3026 = vunpack.c.l.b16 %v2987
    %v3027 = vunpack.c.l.b16 %v2988
    %v3028 = vunpack.c.l.b16 %v2989
    %v3029 = vunpack.c.l.b16 %v2990
    %v3030 = vunpack.c.l.b16 %v2991
    %v3031 = vunpack.c.l.b16 %v2992
    %v3032 = vunpack.c.l.b16 %v2993
    %v3033 = vunpack.c.l.b16 %v2994
    %v3034 = vunpack.c.l.b16 %v2995
    %v3035 = vunpack.c.l.b16 %v2996
    %v3036 = vpack.c.b16 %v3021, %v3020
    %v3037 = vpack.c.b16 %v3023, %v3022
    %v3038 = vpack.c.b16 %v3025, %v3024
    %v3039 = vpack.c.b16 %v3027, %v3026
    %v3040 = vpack.c.b16 %v3029, %v3028
    %v3041 = vpack.c.b16 %v3031, %v3030
    %v3042 = vpack.c.b16 %v3033, %v3032
    %v3043 = vpack.c.b16 %v3035, %v3034
    %3052 = vmatprep.subr.bf16.mxu0 0
    %3053 = vmatpush1.bf16.msra.mxu0 %v3036
    %3054 = vmatprep.subr.bf16.mxu0 0
    %3055 = vmatpush1.bf16.msra.mxu0 %v3037
    %3056 = vmatprep.subr.bf16.mxu0 0
    %3057 = vmatpush1.bf16.msra.mxu0 %v3038
    %3058 = vmatprep.subr.bf16.mxu0 0
    %3059 = vmatpush1.bf16.msra.mxu0 %v3039
    %3060 = vmatprep.subr.bf16.mxu0 0
    %3061 = vmatpush1.bf16.msra.mxu0 %v3040
    %3062 = vmatprep.subr.bf16.mxu0 0
    %3063 = vmatpush1.bf16.msra.mxu0 %v3041
    %3064 = vmatprep.subr.bf16.mxu0 0
    %3065 = vmatpush1.bf16.msra.mxu0 %v3042
    %3066 = vmatprep.subr.bf16.mxu0 0
    %3067 = vmatpush1.bf16.msra.mxu0 %v3043
    %3068 = vmatprep.subr.bf16.mxu0 0
    %3069 = vmatpush1.bf16.msra.mxu0 0
    %3070 = vmatprep.subr.bf16.mxu0 0
    %3071 = vmatpush1.bf16.msra.mxu0 0
    %3072 = vmatprep.subr.bf16.mxu0 0
    %3073 = vmatpush1.bf16.msra.mxu0 0
    %3074 = vmatprep.subr.bf16.mxu0 0
    %3075 = vmatpush1.bf16.msra.mxu0 0
    %3076 = vmatprep.subr.bf16.mxu0 0
    %3077 = vmatpush1.bf16.msra.mxu0 0
    %3078 = vmatprep.subr.bf16.mxu0 0
    %3079 = vmatpush1.bf16.msra.mxu0 0
    %3080 = vmatprep.subr.bf16.mxu0 0
    %3081 = vmatpush1.bf16.msra.mxu0 0
    %3082 = vmatprep.subr.bf16.mxu0 0
    %3083 = vmatpush1.bf16.msra.mxu0 0
    %3084 = vmatprep.mubr.bf16.mxu0 0
    %3085 = vmatmul.mubr.bf16.gmra.mrb[0].mxu0 %v2874
    %v3086 = vpop.f32.mrb[0].mxu0
    %v3087 = vadd.f32 %v3002, %v3086
    %v3088 = vpop.f32.mrb[0].mxu0
    %v3089 = vpop.f32.mrb[0].mxu0
    %v3090 = vpop.f32.mrb[0].mxu0
    %3091 = vdwg.mxu0
    %v3092 = vld [vmem:[#allocation8] sm:$0xf]
    %v3093 = vld [vmem:[#allocation8 + $0x4] sm:$0xf]
    %v3094 = vld [vmem:[#allocation8 + $0x8] sm:$0xf]
    %v3095 = vld [vmem:[#allocation8 + $0xc] sm:$0xf]
    %v3096 = vld [vmem:[#allocation8 + $0x10] sm:$0xf]
    %v3097 = vld [vmem:[#allocation8 + $0x14] sm:$0xf]
    %v3098 = vld [vmem:[#allocation8 + $0x18] sm:$0xf]
    %v3099 = vld [vmem:[#allocation8 + $0x1c] sm:$0xf]
    %v3100 = vld [vmem:[#allocation8 + $0x20] sm:$0xf]
    %v3101 = vld [vmem:[#allocation8 + $0x24] sm:$0xf]
    %v3102 = vld [vmem:[#allocation8 + $0x28] sm:$0xf]
    %v3103 = vld [vmem:[#allocation8 + $0x2c] sm:$0xf]
    %v3104 = vld [vmem:[#allocation8 + $0x30] sm:$0xf]
    %v3105 = vld [vmem:[#allocation8 + $0x34] sm:$0xf]
    %v3106 = vld [vmem:[#allocation8 + $0x38] sm:$0xf]
    %v3107 = vld [vmem:[#allocation8 + $0x3c] sm:$0xf]
    %v3124 = vunpack.c.l.b16 %v3092
    %v3125 = vunpack.c.l.b16 %v3093
    %v3126 = vunpack.c.l.b16 %v3094
    %v3127 = vunpack.c.l.b16 %v3095
    %v3128 = vunpack.c.l.b16 %v3096
    %v3129 = vunpack.c.l.b16 %v3097
    %v3130 = vunpack.c.l.b16 %v3098
    %v3131 = vunpack.c.l.b16 %v3099
    %v3132 = vunpack.c.l.b16 %v3100
    %v3133 = vunpack.c.l.b16 %v3101
    %v3134 = vunpack.c.l.b16 %v3102
    %v3135 = vunpack.c.l.b16 %v3103
    %v3136 = vunpack.c.l.b16 %v3104
    %v3137 = vunpack.c.l.b16 %v3105
    %v3138 = vunpack.c.l.b16 %v3106
    %v3139 = vunpack.c.l.b16 %v3107
    %v3140 = vpack.c.b16 %v3125, %v3124
    %v3141 = vpack.c.b16 %v3127, %v3126
    %v3142 = vpack.c.b16 %v3129, %v3128
    %v3143 = vpack.c.b16 %v3131, %v3130
    %v3144 = vpack.c.b16 %v3133, %v3132
    %v3145 = vpack.c.b16 %v3135, %v3134
    %v3146 = vpack.c.b16 %v3137, %v3136
    %v3147 = vpack.c.b16 %v3139, %v3138
    %3156 = vmatprep.subr.bf16.mxu0 0
    %3157 = vmatpush1.bf16.msra.mxu0 %v3140
    %3158 = vmatprep.subr.bf16.mxu0 0
    %3159 = vmatpush1.bf16.msra.mxu0 %v3141
    %3160 = vmatprep.subr.bf16.mxu0 0
    %3161 = vmatpush1.bf16.msra.mxu0 %v3142
    %3162 = vmatprep.subr.bf16.mxu0 0
    %3163 = vmatpush1.bf16.msra.mxu0 %v3143
    %3164 = vmatprep.subr.bf16.mxu0 0
    %3165 = vmatpush1.bf16.msra.mxu0 %v3144
    %3166 = vmatprep.subr.bf16.mxu0 0
    %3167 = vmatpush1.bf16.msra.mxu0 %v3145
    %3168 = vmatprep.subr.bf16.mxu0 0
    %3169 = vmatpush1.bf16.msra.mxu0 %v3146
    %3170 = vmatprep.subr.bf16.mxu0 0
    %3171 = vmatpush1.bf16.msra.mxu0 %v3147
    %3172 = vmatprep.subr.bf16.mxu0 0
    %3173 = vmatpush1.bf16.msra.mxu0 0
    %3174 = vmatprep.subr.bf16.mxu0 0
    %3175 = vmatpush1.bf16.msra.mxu0 0
    %3176 = vmatprep.subr.bf16.mxu0 0
    %3177 = vmatpush1.bf16.msra.mxu0 0
    %3178 = vmatprep.subr.bf16.mxu0 0
    %3179 = vmatpush1.bf16.msra.mxu0 0
    %3180 = vmatprep.subr.bf16.mxu0 0
    %3181 = vmatpush1.bf16.msra.mxu0 0
    %3182 = vmatprep.subr.bf16.mxu0 0
    %3183 = vmatpush1.bf16.msra.mxu0 0
    %3184 = vmatprep.subr.bf16.mxu0 0
    %3185 = vmatpush1.bf16.msra.mxu0 0
    %3186 = vmatprep.subr.bf16.mxu0 0
    %3187 = vmatpush1.bf16.msra.mxu0 0
    %3188 = vmatprep.mubr.bf16.mxu0 0
    %3189 = vmatmul.mubr.bf16.gmra.mrb[0].mxu0 %v2761
    %v3190 = vpop.f32.mrb[0].mxu0
    %v3191 = vadd.f32 0.0, %v3190
    %v3192 = vpop.f32.mrb[0].mxu0
    %v3193 = vpop.f32.mrb[0].mxu0
    %v3194 = vpop.f32.mrb[0].mxu0
    %3195 = vdwg.mxu0
    %v3196 = vadd.f32 %v3087, %v3191
    %v3197 = vtanh.pop %v3196
    %v3198 = vpack.c.bf16 %v3197, %v3197
    %v3199 = vld [vmem:[%s7] sm:$0xf]
    %v3200 = vld [vmem:[%s7 + $0x4] sm:$0xf]
    %v3201 = vld [vmem:[%s7 + $0x8] sm:$0xf]
    %v3202 = vld [vmem:[%s7 + $0xc] sm:$0xf]
    %v3203 = vld [vmem:[%s7 + $0x10] sm:$0xf]
    %v3204 = vld [vmem:[%s7 + $0x14] sm:$0xf]
    %v3205 = vld [vmem:[%s7 + $0x18] sm:$0xf]
    %v3206 = vld [vmem:[%s7 + $0x1c] sm:$0xf]
    %v3207 = vld [vmem:[%s7 + $0x20] sm:$0xf]
    %v3208 = vld [vmem:[%s7 + $0x24] sm:$0xf]
    %v3209 = vld [vmem:[%s7 + $0x28] sm:$0xf]
    %v3210 = vld [vmem:[%s7 + $0x2c] sm:$0xf]
    %v3211 = vld [vmem:[%s7 + $0x30] sm:$0xf]
    %v3212 = vld [vmem:[%s7 + $0x34] sm:$0xf]
    %v3213 = vld [vmem:[%s7 + $0x38] sm:$0xf]
    %v3214 = vld [vmem:[%s7 + $0x3c] sm:$0xf]
    %v3215 = vld [vmem:[%s8] sm:$0x1]
    %v3217 = vlaneseq
    %v3218 = vshrl.u32 %v3217, 7
    %v3219 = vsub.s32 0, %v3218
    %v3220 = vrot.slane %v3215, %v3219
    %v3238 = vunpack.c.l.b16 %v3199
    %v3239 = vunpack.c.l.b16 %v3200
    %v3240 = vunpack.c.l.b16 %v3201
    %v3241 = vunpack.c.l.b16 %v3202
    %v3242 = vunpack.c.l.b16 %v3203
    %v3243 = vunpack.c.l.b16 %v3204
    %v3244 = vunpack.c.l.b16 %v3205
    %v3245 = vunpack.c.l.b16 %v3206
    %v3246 = vunpack.c.l.b16 %v3207
    %v3247 = vunpack.c.l.b16 %v3208
    %v3248 = vunpack.c.l.b16 %v3209
    %v3249 = vunpack.c.l.b16 %v3210
    %v3250 = vunpack.c.l.b16 %v3211
    %v3251 = vunpack.c.l.b16 %v3212
    %v3252 = vunpack.c.l.b16 %v3213
    %v3253 = vunpack.c.l.b16 %v3214
    %v3254 = vpack.c.b16 %v3239, %v3238
    %v3255 = vpack.c.b16 %v3241, %v3240
    %v3256 = vpack.c.b16 %v3243, %v3242
    %v3257 = vpack.c.b16 %v3245, %v3244
    %v3258 = vpack.c.b16 %v3247, %v3246
    %v3259 = vpack.c.b16 %v3249, %v3248
    %v3260 = vpack.c.b16 %v3251, %v3250
    %v3261 = vpack.c.b16 %v3253, %v3252
    %3270 = vmatprep.subr.bf16.mxu0 0
    %3271 = vmatpush1.bf16.msra.mxu0 %v3254
    %3272 = vmatprep.subr.bf16.mxu0 0
    %3273 = vmatpush1.bf16.msra.mxu0 %v3255
    %3274 = vmatprep.subr.bf16.mxu0 0
    %3275 = vmatpush1.bf16.msra.mxu0 %v3256
    %3276 = vmatprep.subr.bf16.mxu0 0
    %3277 = vmatpush1.bf16.msra.mxu0 %v3257
    %3278 = vmatprep.subr.bf16.mxu0 0
    %3279 = vmatpush1.bf16.msra.mxu0 %v3258
    %3280 = vmatprep.subr.bf16.mxu0 0
    %3281 = vmatpush1.bf16.msra.mxu0 %v3259
    %3282 = vmatprep.subr.bf16.mxu0 0
    %3283 = vmatpush1.bf16.msra.mxu0 %v3260
    %3284 = vmatprep.subr.bf16.mxu0 0
    %3285 = vmatpush1.bf16.msra.mxu0 %v3261
    %3286 = vmatprep.subr.bf16.mxu0 0
    %3287 = vmatpush1.bf16.msra.mxu0 0
    %3288 = vmatprep.subr.bf16.mxu0 0
    %3289 = vmatpush1.bf16.msra.mxu0 0
    %3290 = vmatprep.subr.bf16.mxu0 0
    %3291 = vmatpush1.bf16.msra.mxu0 0
    %3292 = vmatprep.subr.bf16.mxu0 0
    %3293 = vmatpush1.bf16.msra.mxu0 0
    %3294 = vmatprep.subr.bf16.mxu0 0
    %3295 = vmatpush1.bf16.msra.mxu0 0
    %3296 = vmatprep.subr.bf16.mxu0 0
    %3297 = vmatpush1.bf16.msra.mxu0 0
    %3298 = vmatprep.subr.bf16.mxu0 0
    %3299 = vmatpush1.bf16.msra.mxu0 0
    %3300 = vmatprep.subr.bf16.mxu0 0
    %3301 = vmatpush1.bf16.msra.mxu0 0
    %3302 = vmatprep.mubr.bf16.mxu0 0
    %3303 = vmatmul.mubr.bf16.gmra.mrb[0].mxu0 %v3198
    %v3304 = vpop.f32.mrb[0].mxu0
    %v3305 = vadd.f32 %v3220, %v3304
    %v3306 = vpop.f32.mrb[0].mxu0
    %v3307 = vpop.f32.mrb[0].mxu0
    %v3308 = vpop.f32.mrb[0].mxu0
    %3309 = vdwg.mxu0
    %3310 = vst [vmem:[#allocation10 + $0x30] sm:$0xff] %v3305
    %v3311 = vpack.c.bf16 %v2980, %v2980
    %v3312 = vld [vmem:[#allocation7] sm:$0xf]
    %v3313 = vld [vmem:[#allocation7 + $0x4] sm:$0xf]
    %v3314 = vld [vmem:[#allocation7 + $0x8] sm:$0xf]
    %v3315 = vld [vmem:[#allocation7 + $0xc] sm:$0xf]
    %v3316 = vld [vmem:[#allocation7 + $0x10] sm:$0xf]
    %v3317 = vld [vmem:[#allocation7 + $0x14] sm:$0xf]
    %v3318 = vld [vmem:[#allocation7 + $0x18] sm:$0xf]
    %v3319 = vld [vmem:[#allocation7 + $0x1c] sm:$0xf]
    %v3320 = vld [vmem:[#allocation7 + $0x20] sm:$0xf]
    %v3321 = vld [vmem:[#allocation7 + $0x24] sm:$0xf]
    %v3322 = vld [vmem:[#allocation7 + $0x28] sm:$0xf]
    %v3323 = vld [vmem:[#allocation7 + $0x2c] sm:$0xf]
    %v3324 = vld [vmem:[#allocation7 + $0x30] sm:$0xf]
    %v3325 = vld [vmem:[#allocation7 + $0x34] sm:$0xf]
    %v3326 = vld [vmem:[#allocation7 + $0x38] sm:$0xf]
    %v3327 = vld [vmem:[#allocation7 + $0x3c] sm:$0xf]
    %v3328 = vld [vmem:[%s6] sm:$0x1]
    %v3330 = vlaneseq
    %v3331 = vshrl.u32 %v3330, 7
    %v3332 = vsub.s32 0, %v3331
    %v3333 = vrot.slane %v3328, %v3332
    %v3351 = vunpack.c.l.b16 %v3312
    %v3352 = vunpack.c.l.b16 %v3313
    %v3353 = vunpack.c.l.b16 %v3314
    %v3354 = vunpack.c.l.b16 %v3315
    %v3355 = vunpack.c.l.b16 %v3316
    %v3356 = vunpack.c.l.b16 %v3317
    %v3357 = vunpack.c.l.b16 %v3318
    %v3358 = vunpack.c.l.b16 %v3319
    %v3359 = vunpack.c.l.b16 %v3320
    %v3360 = vunpack.c.l.b16 %v3321
    %v3361 = vunpack.c.l.b16 %v3322
    %v3362 = vunpack.c.l.b16 %v3323
    %v3363 = vunpack.c.l.b16 %v3324
    %v3364 = vunpack.c.l.b16 %v3325
    %v3365 = vunpack.c.l.b16 %v3326
    %v3366 = vunpack.c.l.b16 %v3327
    %v3367 = vpack.c.b16 %v3352, %v3351
    %v3368 = vpack.c.b16 %v3354, %v3353
    %v3369 = vpack.c.b16 %v3356, %v3355
    %v3370 = vpack.c.b16 %v3358, %v3357
    %v3371 = vpack.c.b16 %v3360, %v3359
    %v3372 = vpack.c.b16 %v3362, %v3361
    %v3373 = vpack.c.b16 %v3364, %v3363
    %v3374 = vpack.c.b16 %v3366, %v3365
    %3383 = vmatprep.subr.bf16.mxu0 0
    %3384 = vmatpush1.bf16.msra.mxu0 %v3367
    %3385 = vmatprep.subr.bf16.mxu0 0
    %3386 = vmatpush1.bf16.msra.mxu0 %v3368
    %3387 = vmatprep.subr.bf16.mxu0 0
    %3388 = vmatpush1.bf16.msra.mxu0 %v3369
    %3389 = vmatprep.subr.bf16.mxu0 0
    %3390 = vmatpush1.bf16.msra.mxu0 %v3370
    %3391 = vmatprep.subr.bf16.mxu0 0
    %3392 = vmatpush1.bf16.msra.mxu0 %v3371
    %3393 = vmatprep.subr.bf16.mxu0 0
    %3394 = vmatpush1.bf16.msra.mxu0 %v3372
    %3395 = vmatprep.subr.bf16.mxu0 0
    %3396 = vmatpush1.bf16.msra.mxu0 %v3373
    %3397 = vmatprep.subr.bf16.mxu0 0
    %3398 = vmatpush1.bf16.msra.mxu0 %v3374
    %3399 = vmatprep.subr.bf16.mxu0 0
    %3400 = vmatpush1.bf16.msra.mxu0 0
    %3401 = vmatprep.subr.bf16.mxu0 0
    %3402 = vmatpush1.bf16.msra.mxu0 0
    %3403 = vmatprep.subr.bf16.mxu0 0
    %3404 = vmatpush1.bf16.msra.mxu0 0
    %3405 = vmatprep.subr.bf16.mxu0 0
    %3406 = vmatpush1.bf16.msra.mxu0 0
    %3407 = vmatprep.subr.bf16.mxu0 0
    %3408 = vmatpush1.bf16.msra.mxu0 0
    %3409 = vmatprep.subr.bf16.mxu0 0
    %3410 = vmatpush1.bf16.msra.mxu0 0
    %3411 = vmatprep.subr.bf16.mxu0 0
    %3412 = vmatpush1.bf16.msra.mxu0 0
    %3413 = vmatprep.subr.bf16.mxu0 0
    %3414 = vmatpush1.bf16.msra.mxu0 0
    %3415 = vmatprep.mubr.bf16.mxu0 0
    %3416 = vmatmul.mubr.bf16.gmra.mrb[0].mxu0 %v3311
    %v3417 = vpop.f32.mrb[0].mxu0
    %v3418 = vadd.f32 %v3333, %v3417
    %v3419 = vpop.f32.mrb[0].mxu0
    %v3420 = vpop.f32.mrb[0].mxu0
    %v3421 = vpop.f32.mrb[0].mxu0
    %3422 = vdwg.mxu0
    %v3423 = vld [vmem:[#allocation8] sm:$0xf]
    %v3424 = vld [vmem:[#allocation8 + $0x4] sm:$0xf]
    %v3425 = vld [vmem:[#allocation8 + $0x8] sm:$0xf]
    %v3426 = vld [vmem:[#allocation8 + $0xc] sm:$0xf]
    %v3427 = vld [vmem:[#allocation8 + $0x10] sm:$0xf]
    %v3428 = vld [vmem:[#allocation8 + $0x14] sm:$0xf]
    %v3429 = vld [vmem:[#allocation8 + $0x18] sm:$0xf]
    %v3430 = vld [vmem:[#allocation8 + $0x1c] sm:$0xf]
    %v3431 = vld [vmem:[#allocation8 + $0x20] sm:$0xf]
    %v3432 = vld [vmem:[#allocation8 + $0x24] sm:$0xf]
    %v3433 = vld [vmem:[#allocation8 + $0x28] sm:$0xf]
    %v3434 = vld [vmem:[#allocation8 + $0x2c] sm:$0xf]
    %v3435 = vld [vmem:[#allocation8 + $0x30] sm:$0xf]
    %v3436 = vld [vmem:[#allocation8 + $0x34] sm:$0xf]
    %v3437 = vld [vmem:[#allocation8 + $0x38] sm:$0xf]
    %v3438 = vld [vmem:[#allocation8 + $0x3c] sm:$0xf]
    %v3455 = vunpack.c.l.b16 %v3423
    %v3456 = vunpack.c.l.b16 %v3424
    %v3457 = vunpack.c.l.b16 %v3425
    %v3458 = vunpack.c.l.b16 %v3426
    %v3459 = vunpack.c.l.b16 %v3427
    %v3460 = vunpack.c.l.b16 %v3428
    %v3461 = vunpack.c.l.b16 %v3429
    %v3462 = vunpack.c.l.b16 %v3430
    %v3463 = vunpack.c.l.b16 %v3431
    %v3464 = vunpack.c.l.b16 %v3432
    %v3465 = vunpack.c.l.b16 %v3433
    %v3466 = vunpack.c.l.b16 %v3434
    %v3467 = vunpack.c.l.b16 %v3435
    %v3468 = vunpack.c.l.b16 %v3436
    %v3469 = vunpack.c.l.b16 %v3437
    %v3470 = vunpack.c.l.b16 %v3438
    %v3471 = vpack.c.b16 %v3456, %v3455
    %v3472 = vpack.c.b16 %v3458, %v3457
    %v3473 = vpack.c.b16 %v3460, %v3459
    %v3474 = vpack.c.b16 %v3462, %v3461
    %v3475 = vpack.c.b16 %v3464, %v3463
    %v3476 = vpack.c.b16 %v3466, %v3465
    %v3477 = vpack.c.b16 %v3468, %v3467
    %v3478 = vpack.c.b16 %v3470, %v3469
    %3487 = vmatprep.subr.bf16.mxu0 0
    %3488 = vmatpush1.bf16.msra.mxu0 %v3471
    %3489 = vmatprep.subr.bf16.mxu0 0
    %3490 = vmatpush1.bf16.msra.mxu0 %v3472
    %3491 = vmatprep.subr.bf16.mxu0 0
    %3492 = vmatpush1.bf16.msra.mxu0 %v3473
    %3493 = vmatprep.subr.bf16.mxu0 0
    %3494 = vmatpush1.bf16.msra.mxu0 %v3474
    %3495 = vmatprep.subr.bf16.mxu0 0
    %3496 = vmatpush1.bf16.msra.mxu0 %v3475
    %3497 = vmatprep.subr.bf16.mxu0 0
    %3498 = vmatpush1.bf16.msra.mxu0 %v3476
    %3499 = vmatprep.subr.bf16.mxu0 0
    %3500 = vmatpush1.bf16.msra.mxu0 %v3477
    %3501 = vmatprep.subr.bf16.mxu0 0
    %3502 = vmatpush1.bf16.msra.mxu0 %v3478
    %3503 = vmatprep.subr.bf16.mxu0 0
    %3504 = vmatpush1.bf16.msra.mxu0 0
    %3505 = vmatprep.subr.bf16.mxu0 0
    %3506 = vmatpush1.bf16.msra.mxu0 0
    %3507 = vmatprep.subr.bf16.mxu0 0
    %3508 = vmatpush1.bf16.msra.mxu0 0
    %3509 = vmatprep.subr.bf16.mxu0 0
    %3510 = vmatpush1.bf16.msra.mxu0 0
    %3511 = vmatprep.subr.bf16.mxu0 0
    %3512 = vmatpush1.bf16.msra.mxu0 0
    %3513 = vmatprep.subr.bf16.mxu0 0
    %3514 = vmatpush1.bf16.msra.mxu0 0
    %3515 = vmatprep.subr.bf16.mxu0 0
    %3516 = vmatpush1.bf16.msra.mxu0 0
    %3517 = vmatprep.subr.bf16.mxu0 0
    %3518 = vmatpush1.bf16.msra.mxu0 0
    %3519 = vmatprep.mubr.bf16.mxu0 0
    %3520 = vmatmul.mubr.bf16.gmra.mrb[0].mxu0 %v3198
    %v3521 = vpop.f32.mrb[0].mxu0
    %v3522 = vadd.f32 0.0, %v3521
    %v3523 = vpop.f32.mrb[0].mxu0
    %v3524 = vpop.f32.mrb[0].mxu0
    %v3525 = vpop.f32.mrb[0].mxu0
    %3526 = vdwg.mxu0
    %v3527 = vadd.f32 %v3418, %v3522
    %v3528 = vtanh.pop %v3527
    %v3529 = vpack.c.bf16 %v3528, %v3528
    %v3530 = vld [vmem:[%s7] sm:$0xf]
    %v3531 = vld [vmem:[%s7 + $0x4] sm:$0xf]
    %v3532 = vld [vmem:[%s7 + $0x8] sm:$0xf]
    %v3533 = vld [vmem:[%s7 + $0xc] sm:$0xf]
    %v3534 = vld [vmem:[%s7 + $0x10] sm:$0xf]
    %v3535 = vld [vmem:[%s7 + $0x14] sm:$0xf]
    %v3536 = vld [vmem:[%s7 + $0x18] sm:$0xf]
    %v3537 = vld [vmem:[%s7 + $0x1c] sm:$0xf]
    %v3538 = vld [vmem:[%s7 + $0x20] sm:$0xf]
    %v3539 = vld [vmem:[%s7 + $0x24] sm:$0xf]
    %v3540 = vld [vmem:[%s7 + $0x28] sm:$0xf]
    %v3541 = vld [vmem:[%s7 + $0x2c] sm:$0xf]
    %v3542 = vld [vmem:[%s7 + $0x30] sm:$0xf]
    %v3543 = vld [vmem:[%s7 + $0x34] sm:$0xf]
    %v3544 = vld [vmem:[%s7 + $0x38] sm:$0xf]
    %v3545 = vld [vmem:[%s7 + $0x3c] sm:$0xf]
    %v3546 = vld [vmem:[%s8] sm:$0x1]
    %v3548 = vlaneseq
    %v3549 = vshrl.u32 %v3548, 7
    %v3550 = vsub.s32 0, %v3549
    %v3551 = vrot.slane %v3546, %v3550
    %v3569 = vunpack.c.l.b16 %v3530
    %v3570 = vunpack.c.l.b16 %v3531
    %v3571 = vunpack.c.l.b16 %v3532
    %v3572 = vunpack.c.l.b16 %v3533
    %v3573 = vunpack.c.l.b16 %v3534
    %v3574 = vunpack.c.l.b16 %v3535
    %v3575 = vunpack.c.l.b16 %v3536
    %v3576 = vunpack.c.l.b16 %v3537
    %v3577 = vunpack.c.l.b16 %v3538
    %v3578 = vunpack.c.l.b16 %v3539
    %v3579 = vunpack.c.l.b16 %v3540
    %v3580 = vunpack.c.l.b16 %v3541
    %v3581 = vunpack.c.l.b16 %v3542
    %v3582 = vunpack.c.l.b16 %v3543
    %v3583 = vunpack.c.l.b16 %v3544
    %v3584 = vunpack.c.l.b16 %v3545
    %v3585 = vpack.c.b16 %v3570, %v3569
    %v3586 = vpack.c.b16 %v3572, %v3571
    %v3587 = vpack.c.b16 %v3574, %v3573
    %v3588 = vpack.c.b16 %v3576, %v3575
    %v3589 = vpack.c.b16 %v3578, %v3577
    %v3590 = vpack.c.b16 %v3580, %v3579
    %v3591 = vpack.c.b16 %v3582, %v3581
    %v3592 = vpack.c.b16 %v3584, %v3583
    %3601 = vmatprep.subr.bf16.mxu0 0
    %3602 = vmatpush1.bf16.msra.mxu0 %v3585
    %3603 = vmatprep.subr.bf16.mxu0 0
    %3604 = vmatpush1.bf16.msra.mxu0 %v3586
    %3605 = vmatprep.subr.bf16.mxu0 0
    %3606 = vmatpush1.bf16.msra.mxu0 %v3587
    %3607 = vmatprep.subr.bf16.mxu0 0
    %3608 = vmatpush1.bf16.msra.mxu0 %v3588
    %3609 = vmatprep.subr.bf16.mxu0 0
    %3610 = vmatpush1.bf16.msra.mxu0 %v3589
    %3611 = vmatprep.subr.bf16.mxu0 0
    %3612 = vmatpush1.bf16.msra.mxu0 %v3590
    %3613 = vmatprep.subr.bf16.mxu0 0
    %3614 = vmatpush1.bf16.msra.mxu0 %v3591
    %3615 = vmatprep.subr.bf16.mxu0 0
    %3616 = vmatpush1.bf16.msra.mxu0 %v3592
    %3617 = vmatprep.subr.bf16.mxu0 0
    %3618 = vmatpush1.bf16.msra.mxu0 0
    %3619 = vmatprep.subr.bf16.mxu0 0
    %3620 = vmatpush1.bf16.msra.mxu0 0
    %3621 = vmatprep.subr.bf16.mxu0 0
    %3622 = vmatpush1.bf16.msra.mxu0 0
    %3623 = vmatprep.subr.bf16.mxu0 0
    %3624 = vmatpush1.bf16.msra.mxu0 0
    %3625 = vmatprep.subr.bf16.mxu0 0
    %3626 = vmatpush1.bf16.msra.mxu0 0
    %3627 = vmatprep.subr.bf16.mxu0 0
    %3628 = vmatpush1.bf16.msra.mxu0 0
    %3629 = vmatprep.subr.bf16.mxu0 0
    %3630 = vmatpush1.bf16.msra.mxu0 0
    %3631 = vmatprep.subr.bf16.mxu0 0
    %3632 = vmatpush1.bf16.msra.mxu0 0
    %3633 = vmatprep.mubr.bf16.mxu0 0
    %3634 = vmatmul.mubr.bf16.gmra.mrb[0].mxu0 %v3529
    %v3635 = vpop.f32.mrb[0].mxu0
    %v3636 = vadd.f32 %v3551, %v3635
    %v3637 = vpop.f32.mrb[0].mxu0
    %v3638 = vpop.f32.mrb[0].mxu0
    %v3639 = vpop.f32.mrb[0].mxu0
    %3640 = vdwg.mxu0
    %3641 = vst [vmem:[#allocation10 + $0x38] sm:$0xff] %v3636
    // Predicated region
    $region54: #{tpu_custom_call.1} parent=1 // pred_check
      _
    $region55: #{tpu_custom_call.1} parent=1 // pred_check_branch
      %3643 = sbr.rel (0) target = $region57
    $region56: #{tpu_custom_call.1} parent=1 // pred_region
      %s3645 = ssub.s32 1024, 1024
      %3646 = vsyncadd [#allocation4], %s3645
      %s3647 = sshll.u32 [#allocation10], 4
      %s3648 = int_to_ptr.vmem [resolvable:$true] %s3647
      %3653 = dma.vmem_to_hbm [thread:$0]  %s3648, 1024, %s9, [#allocation4], 128, 128, 8
    $region57: #{tpu_custom_call.1} parent=1 // pred_fallthru
      _
    // Predicated region
    $region58: #{tpu_custom_call.1} parent=1 // pred_check
      _
    $region59: #{tpu_custom_call.1} parent=1 // pred_check_branch
      %3655 = sbr.rel (0) target = $region61
    $region60: #{tpu_custom_call.1} parent=1 // pred_region
      %3656 = dma.done [#allocation4], 1024
    $region61: #{tpu_custom_call.1} parent=1 // pred_fallthru
      _
    %3657 = vsyncpa [#allocation3], 1
    %3658 = vsyncpa [#allocation6], 1
    %3659 = vsyncpa [#allocation9], 1
    %3660 = vsyncpa [#allocation4], 1

</llo_original>
